<compile_context>
chip_gen: v5e
topology: v5e:2x2
jax: 0.10.0
libtpu: 0.0.40
codegen_flags: <defaults>
</compile_context>

<pallas_src>
import functools

import jax
import jax.numpy as jnp
from jax import lax
from jax.experimental import pallas as pl
from jax.experimental.pallas import tpu as pltpu

_C1 = 0.01 ** 2
_C2 = 0.03 ** 2


def _ssim_kernel(x_ref, y_ref, o_ref, *, strip_rows):
    """One grid step: a (B, H, W) batch of image planes.

    ReflectionPad2d(1), the five 3x3 average pools and the SSIM elementwise math
    are fused; work proceeds plane-by-plane in row strips of `strip_rows` rows so
    pooled intermediates stay small regardless of the plane size.
    """
    B, H, W = x_ref.shape
    S = strip_rows
    nsp = H // S                       # strips per plane (S divides H)
    n_strips = B * nsp
    inv9 = 1.0 / 9.0

    # Masks hoisted out of every pool / strip (JAX does not CSE broadcasts).
    col = lax.broadcasted_iota(jnp.int32, (1, W), 1)
    col_first = col == 0
    col_last = col == (W - 1)
    srow = lax.broadcasted_iota(jnp.int32, (S, 1), 0)
    row_first = srow == 0
    row_last = srow == (S - 1)

    def hsum(q):
        # 1x3 horizontal reflect-sum. roll() runs in the XLU slot; the wrapped
        # boundary lane of the *opposite* roll is exactly the reflected column.
        left = pltpu.roll(q, 1, axis=1)         # q[:, j-1]  (col 0 wraps)
        right = pltpu.roll(q, W - 1, axis=1)    # q[:, j+1]  (col W-1 wraps)
        l = jnp.where(col_first, right, left)   # col -1 -> col 1
        r = jnp.where(col_last, left, right)    # col W  -> col W-2
        return q + l + r

    def vsum(hq, hq_top, hq_bot):
        # 3x1 vertical sum inside a strip; the halo rows already carry the
        # (reflected) neighbours of the strip's first/last rows.
        up = pltpu.roll(hq, 1, axis=0)          # hq[r-1]  (row 0 wraps)
        dn = pltpu.roll(hq, S - 1, axis=0)      # hq[r+1]  (row S-1 wraps)
        up = jnp.where(row_first, hq_top, up)
        dn = jnp.where(row_last, hq_bot, dn)
        return hq + up + dn

    def pool(q, q_halo):
        hq = hsum(q)
        hh = hsum(q_halo)                       # (2, W): [top, bottom] halo rows
        return vsum(hq, hh[0:1, :], hh[1:2, :]) * inv9

    def strip_body(p, s):
        static = isinstance(s, int)
        row0 = s * S
        if static:
            top = row0 + 1 if s == 0 else row0 - 1
            bot = row0 + S - 2 if s == nsp - 1 else row0 + S
        else:
            if S % 8 == 0:
                row0 = pl.multiple_of(row0, 8)
            top = jnp.where(s == 0, s * S + 1, s * S - 1)
            bot = jnp.where(s == nsp - 1, s * S + S - 2, s * S + S)

        xs = x_ref[p, pl.ds(row0, S), :].astype(jnp.float32)
        ys = y_ref[p, pl.ds(row0, S), :].astype(jnp.float32)
        xt = x_ref[p, pl.ds(top, 1), :].astype(jnp.float32)
        xb = x_ref[p, pl.ds(bot, 1), :].astype(jnp.float32)
        yt = y_ref[p, pl.ds(top, 1), :].astype(jnp.float32)
        yb = y_ref[p, pl.ds(bot, 1), :].astype(jnp.float32)
        xh = jnp.concatenate([xt, xb], axis=0)   # (2, W) halo rows
        yh = jnp.concatenate([yt, yb], axis=0)

        mu_x = pool(xs, xh)
        mu_y = pool(ys, yh)
        sigma_x = pool(xs * xs, xh * xh) - mu_x * mu_x
        sigma_y = pool(ys * ys, yh * yh) - mu_y * mu_y
        sigma_xy = pool(xs * ys, xh * yh) - mu_x * mu_y

        ssim_n = (2.0 * mu_x * mu_y + _C1) * (2.0 * sigma_xy + _C2)
        ssim_d = (mu_x * mu_x + mu_y * mu_y + _C1) * (sigma_x + sigma_y + _C2)
        out = (1.0 - ssim_n * pl.reciprocal(ssim_d, approx=True)) * 0.5
        o_ref[p, pl.ds(row0, S), :] = jnp.clip(out, 0.0, 1.0).astype(o_ref.dtype)

    if n_strips <= 8:
        for t in range(n_strips):               # fully unrolled, static indices
            strip_body(t // nsp, t % nsp)
    else:
        def loop_body(t, carry):
            strip_body(t // nsp, t % nsp)
            return carry
        lax.fori_loop(0, n_strips, loop_body, 0)


def _tpu_vmem_capacity_bytes():
    try:
        info = pltpu.get_tpu_info()
        cap = getattr(info, "vmem_capacity_bytes", None)
        if cap:
            return int(cap)
    except Exception:
        pass
    return 64 * 1024 * 1024  # conservative default (v7x per-TensorCore)


def _pick_strip_rows(h, w, max_strip_bytes):
    """Largest divisor of h (preferring multiples of 8) whose (rows, w) f32
    strip stays under max_strip_bytes."""
    cap_rows = max(2, max_strip_bytes // max(1, 4 * w))
    best_s, best_key = None, None
    for s in range(2, h + 1):
        if h % s or s > cap_rows:
            continue
        key = (s % 8 == 0, s)
        if best_key is None or key > best_key:
            best_s, best_key = s, key
    if best_s is not None:
        return best_s
    for s in range(2, h + 1):                   # nothing fits: smallest divisor
        if h % s == 0:
            return s
    return h


def _pick_planes_per_block(nc, plane_bytes, max_block_bytes, prefer_even_grid):
    """Planes per grid step: largest divisor of nc under the per-input block
    budget; on two-TensorCore parts prefer an even (>=2) grid step count."""
    best_b, best_key = 1, None
    for b in range(1, nc + 1):
        if nc % b:
            continue
        if b > 1 and b * plane_bytes > max_block_bytes:
            continue
        steps = nc // b
        split_ok = (not prefer_even_grid) or (steps >= 2 and steps % 2 == 0)
        key = (split_ok, b)
        if best_key is None or key > best_key:
            best_b, best_key = b, key
    return best_b


def ssim_pallas(x, y, *, max_block_bytes=None, max_strip_bytes=None):
    """SSIM loss map, identical semantics to the PyTorch SSIM module.

    x, y: (N, C, H, W). Returns (N, C, H, W) in x.dtype, values in [0, 1].
    Pass bf16 inputs to halve HBM traffic; in-kernel math is always f32.
    """
    assert x.shape == y.shape and x.ndim == 4
    N, C, H, W = x.shape
    assert H >= 2 and W >= 2, "ReflectionPad2d(1) needs H, W >= 2"
    NC = N * C

    vmem_cap = _tpu_vmem_capacity_bytes()
    two_tc = vmem_cap <= (96 << 20)             # v7x-style parts: 64 MiB, 2 TCs
    if max_block_bytes is None:
        max_block_bytes = (1 << 20) if two_tc else (4 << 20)
    if max_strip_bytes is None:
        max_strip_bytes = 512 << 10

    itemsize = jnp.dtype(x.dtype).itemsize
    out_dtype = x.dtype
    plane_bytes = H * W * itemsize
    S = _pick_strip_rows(H, W, max_strip_bytes)
    B = _pick_planes_per_block(NC, plane_bytes, max_block_bytes, two_tc)
    # TODO(synk): planes whose double-buffered I/O alone exceeds VMEM (e.g. >4K
    # frames on v7x) still load whole; a halo-overlapping grid axis over row
    # strips would bound the I/O block as well.
    # TODO(synk): for W << 128 the output stores are masked (vst.msk); repacking
    # several rows into the lane axis would make them lane-dense.

    grid = (NC // B,)
    x3 = x.reshape(NC, H, W)
    y3 = y.reshape(NC, H, W)

    block_bytes = B * H * W * itemsize
    out_block_bytes = B * H * W * jnp.dtype(out_dtype).itemsize
    strip_bytes = S * W * 4
    vmem_needed = 4 * block_bytes + 2 * out_block_bytes + 24 * strip_bytes + (2 << 20)
    vmem_ceiling = max(16 << 20, min(vmem_cap - (24 << 20), 100 << 20))
    vmem_limit = int(max(16 << 20, min(vmem_needed, vmem_ceiling)))

    npix = NC * H * W
    cost = pl.CostEstimate(
        flops=60 * npix,
        transcendentals=npix,                    # approx reciprocal
        bytes_accessed=2 * npix * itemsize + npix * jnp.dtype(out_dtype).itemsize,
    )

    out = pl.pallas_call(
        functools.partial(_ssim_kernel, strip_rows=S),
        out_shape=jax.ShapeDtypeStruct((NC, H, W), out_dtype),
        grid_spec=pltpu.PrefetchScalarGridSpec(
            num_scalar_prefetch=0,
            grid=grid,
            in_specs=[
                pl.BlockSpec((B, H, W), lambda i: (i, 0, 0)),
                pl.BlockSpec((B, H, W), lambda i: (i, 0, 0)),
            ],
            out_specs=pl.BlockSpec((B, H, W), lambda i: (i, 0, 0)),
        ),
        compiler_params=pltpu.CompilerParams(
            dimension_semantics=("parallel",),
            vmem_limit_bytes=vmem_limit,
        ),
        cost_estimate=cost,
    )(x3, y3)

    return out.reshape(N, C, H, W)


def _ssim_reference(x, y):
    """Pure-JAX reference (mirrors the PyTorch module) for correctness checks."""
    pad = ((0, 0), (0, 0), (1, 1), (1, 1))
    xp = jnp.pad(x, pad, mode="reflect")
    yp = jnp.pad(y, pad, mode="reflect")

    def pool(a):
        return jax.lax.reduce_window(
            a, 0.0, jax.lax.add, (1, 1, 3, 3), (1, 1, 1, 1), "VALID") / 9.0

    mu_x = pool(xp)
    mu_y = pool(yp)
    sigma_x = pool(xp * xp) - mu_x ** 2
    sigma_y = pool(yp * yp) - mu_y ** 2
    sigma_xy = pool(xp * yp) - mu_x * mu_y
    n = (2.0 * mu_x * mu_y + _C1) * (2.0 * sigma_xy + _C2)
    d = (mu_x ** 2 + mu_y ** 2 + _C1) * (sigma_x + sigma_y + _C2)
    return jnp.clip((1.0 - n / d) * 0.5, 0.0, 1.0)


if __name__ == "__main__":
    key = jax.random.PRNGKey(0)

    cases = [
        ((2, 4, 16, 16), {}),
        ((1, 3, 8, 32), {}),
        # Force sub-plane row strips (static-unrolled and fori_loop paths).
        ((1, 2, 32, 128), {"max_strip_bytes": 8 * 128 * 4}),
        ((1, 1, 128, 128), {"max_strip_bytes": 8 * 128 * 4}),
    ]

    for shape, kw in cases:
        key, kx, ky = jax.random.split(key, 3)
        x = jax.random.uniform(kx, shape, dtype=jnp.float32)
        y = jax.random.uniform(ky, shape, dtype=jnp.float32)

        out = jax.block_until_ready(ssim_pallas(x, y, **kw))
        ref = jax.block_until_ready(_ssim_reference(x, y))

        assert out.shape == shape and out.dtype == x.dtype
        assert bool(jnp.all(jnp.isfinite(out)))
        assert bool(jnp.all((out >= 0.0) & (out <= 1.0)))
        err = float(jnp.max(jnp.abs(out - ref)))
        assert err < 1e-2, f"max |pallas - ref| = {err} for shape {shape}"

    print("KERNEL_OK")
</pallas_src>

<mosaic_0001>
module attributes {stable_mosaic.version = 11 : i64} {
  func.func @_ssim_kernel(%arg0: i32, %arg1: memref<4x16x16xf32, #tpu.memory_space<vmem>>, %arg2: memref<4x16x16xf32, #tpu.memory_space<vmem>>, %arg3: memref<4x16x16xf32, #tpu.memory_space<vmem>>) attributes {dimension_semantics = [#tpu.dimension_semantics<parallel>], iteration_bounds = array<i64: 2>, scalar_prefetch = 0 : i64, scratch_operands = 0 : i64, tpu.core_type = #tpu.core_type<tc>, window_params = [{transform_indices = @transform_0, window_bounds = array<i64: 4, 16, 16>}, {transform_indices = @transform_1, window_bounds = array<i64: 4, 16, 16>}, {transform_indices = @transform_2, window_bounds = array<i64: 4, 16, 16>}]} {
    %0 = tpu.iota {dimensions = array<i32: 1>} : vector<1x16xi32>
    %c0_i32 = arith.constant 0 : i32
    %1 = vector.broadcast %c0_i32 : i32 to vector<1x16xi32>
    %2 = arith.cmpi eq, %0, %1 : vector<1x16xi32>
    %c15_i32 = arith.constant 15 : i32
    %3 = vector.broadcast %c15_i32 : i32 to vector<1x16xi32>
    %4 = arith.cmpi eq, %0, %3 : vector<1x16xi32>
    %5 = tpu.iota {dimensions = array<i32: 0>} : vector<16x1xi32>
    %c0_i32_0 = arith.constant 0 : i32
    %6 = vector.broadcast %c0_i32_0 : i32 to vector<16x1xi32>
    %7 = arith.cmpi eq, %5, %6 : vector<16x1xi32>
    %c15_i32_1 = arith.constant 15 : i32
    %8 = vector.broadcast %c15_i32_1 : i32 to vector<16x1xi32>
    %9 = arith.cmpi eq, %5, %8 : vector<16x1xi32>
    %c0 = arith.constant 0 : index
    %c0_2 = arith.constant 0 : index
    %c0_3 = arith.constant 0 : index
    %10 = vector.load %arg1[%c0, %c0_2, %c0_3] : memref<4x16x16xf32, #tpu.memory_space<vmem>>, vector<1x16x16xf32>
    %11 = vector.shape_cast %10 : vector<1x16x16xf32> to vector<16x16xf32>
    %c0_4 = arith.constant 0 : index
    %c0_5 = arith.constant 0 : index
    %c0_6 = arith.constant 0 : index
    %12 = vector.load %arg2[%c0_4, %c0_5, %c0_6] : memref<4x16x16xf32, #tpu.memory_space<vmem>>, vector<1x16x16xf32>
    %13 = vector.shape_cast %12 : vector<1x16x16xf32> to vector<16x16xf32>
    %c0_7 = arith.constant 0 : index
    %c1 = arith.constant 1 : index
    %c0_8 = arith.constant 0 : index
    %14 = vector.load %arg1[%c0_7, %c1, %c0_8] : memref<4x16x16xf32, #tpu.memory_space<vmem>>, vector<1x1x16xf32>
    %15 = vector.shape_cast %14 : vector<1x1x16xf32> to vector<1x16xf32>
    %c0_9 = arith.constant 0 : index
    %c14 = arith.constant 14 : index
    %c0_10 = arith.constant 0 : index
    %16 = vector.load %arg1[%c0_9, %c14, %c0_10] : memref<4x16x16xf32, #tpu.memory_space<vmem>>, vector<1x1x16xf32>
    %17 = vector.shape_cast %16 : vector<1x1x16xf32> to vector<1x16xf32>
    %c0_11 = arith.constant 0 : index
    %c1_12 = arith.constant 1 : index
    %c0_13 = arith.constant 0 : index
    %18 = vector.load %arg2[%c0_11, %c1_12, %c0_13] : memref<4x16x16xf32, #tpu.memory_space<vmem>>, vector<1x1x16xf32>
    %19 = vector.shape_cast %18 : vector<1x1x16xf32> to vector<1x16xf32>
    %c0_14 = arith.constant 0 : index
    %c14_15 = arith.constant 14 : index
    %c0_16 = arith.constant 0 : index
    %20 = vector.load %arg2[%c0_14, %c14_15, %c0_16] : memref<4x16x16xf32, #tpu.memory_space<vmem>>, vector<1x1x16xf32>
    %21 = vector.shape_cast %20 : vector<1x1x16xf32> to vector<1x16xf32>
    %22 = tpu.concatenate %15, %17 in 0 : vector<1x16xf32>, vector<1x16xf32> -> vector<2x16xf32>
    %23 = tpu.concatenate %19, %21 in 0 : vector<1x16xf32>, vector<1x16xf32> -> vector<2x16xf32>
    %c1_i32 = arith.constant 1 : i32
    %24 = tpu.dynamic_rotate %11 by %c1_i32 dim 1 : vector<16x16xf32>, i32 -> vector<16x16xf32>
    %c15_i32_17 = arith.constant 15 : i32
    %25 = tpu.dynamic_rotate %11 by %c15_i32_17 dim 1 : vector<16x16xf32>, i32 -> vector<16x16xf32>
    %26 = vector.shape_cast %2 : vector<1x16xi1> to vector<1x16xi1>
    %27 = vector.broadcast %26 : vector<1x16xi1> to vector<16x16xi1>
    %28 = arith.select %27, %25, %24 : vector<16x16xi1>, vector<16x16xf32>
    %29 = vector.shape_cast %4 : vector<1x16xi1> to vector<1x16xi1>
    %30 = vector.broadcast %29 : vector<1x16xi1> to vector<16x16xi1>
    %31 = arith.select %30, %24, %25 : vector<16x16xi1>, vector<16x16xf32>
    %32 = arith.addf %11, %28 : vector<16x16xf32>
    %33 = arith.addf %32, %31 : vector<16x16xf32>
    %c1_i32_18 = arith.constant 1 : i32
    %34 = tpu.dynamic_rotate %22 by %c1_i32_18 dim 1 : vector<2x16xf32>, i32 -> vector<2x16xf32>
    %c15_i32_19 = arith.constant 15 : i32
    %35 = tpu.dynamic_rotate %22 by %c15_i32_19 dim 1 : vector<2x16xf32>, i32 -> vector<2x16xf32>
    %36 = vector.shape_cast %2 : vector<1x16xi1> to vector<1x16xi1>
    %37 = vector.broadcast %36 : vector<1x16xi1> to vector<2x16xi1>
    %38 = arith.select %37, %35, %34 : vector<2x16xi1>, vector<2x16xf32>
    %39 = vector.shape_cast %4 : vector<1x16xi1> to vector<1x16xi1>
    %40 = vector.broadcast %39 : vector<1x16xi1> to vector<2x16xi1>
    %41 = arith.select %40, %34, %35 : vector<2x16xi1>, vector<2x16xf32>
    %42 = arith.addf %22, %38 : vector<2x16xf32>
    %43 = arith.addf %42, %41 : vector<2x16xf32>
    %44 = vector.extract_strided_slice %43 {offsets = [0, 0], sizes = [1, 16], strides = [1, 1]} : vector<2x16xf32> to vector<1x16xf32>
    %45 = vector.extract_strided_slice %43 {offsets = [1, 0], sizes = [1, 16], strides = [1, 1]} : vector<2x16xf32> to vector<1x16xf32>
    %c1_i32_20 = arith.constant 1 : i32
    %46 = tpu.dynamic_rotate %33 by %c1_i32_20 dim 0 : vector<16x16xf32>, i32 -> vector<16x16xf32>
    %c15_i32_21 = arith.constant 15 : i32
    %47 = tpu.dynamic_rotate %33 by %c15_i32_21 dim 0 : vector<16x16xf32>, i32 -> vector<16x16xf32>
    %48 = vector.shape_cast %7 : vector<16x1xi1> to vector<16x1xi1>
    %49 = vector.broadcast %48 : vector<16x1xi1> to vector<16x16xi1>
    %50 = vector.shape_cast %44 : vector<1x16xf32> to vector<1x16xf32>
    %51 = vector.broadcast %50 : vector<1x16xf32> to vector<16x16xf32>
    %52 = arith.select %49, %51, %46 : vector<16x16xi1>, vector<16x16xf32>
    %53 = vector.shape_cast %9 : vector<16x1xi1> to vector<16x1xi1>
    %54 = vector.broadcast %53 : vector<16x1xi1> to vector<16x16xi1>
    %55 = vector.shape_cast %45 : vector<1x16xf32> to vector<1x16xf32>
    %56 = vector.broadcast %55 : vector<1x16xf32> to vector<16x16xf32>
    %57 = arith.select %54, %56, %47 : vector<16x16xi1>, vector<16x16xf32>
    %58 = arith.addf %33, %52 : vector<16x16xf32>
    %59 = arith.addf %58, %57 : vector<16x16xf32>
    %cst = arith.constant 0.111111112 : f32
    %60 = vector.broadcast %cst : f32 to vector<16x16xf32>
    %61 = arith.mulf %59, %60 : vector<16x16xf32>
    %c1_i32_22 = arith.constant 1 : i32
    %62 = tpu.dynamic_rotate %13 by %c1_i32_22 dim 1 : vector<16x16xf32>, i32 -> vector<16x16xf32>
    %c15_i32_23 = arith.constant 15 : i32
    %63 = tpu.dynamic_rotate %13 by %c15_i32_23 dim 1 : vector<16x16xf32>, i32 -> vector<16x16xf32>
    %64 = vector.shape_cast %2 : vector<1x16xi1> to vector<1x16xi1>
    %65 = vector.broadcast %64 : vector<1x16xi1> to vector<16x16xi1>
    %66 = arith.select %65, %63, %62 : vector<16x16xi1>, vector<16x16xf32>
    %67 = vector.shape_cast %4 : vector<1x16xi1> to vector<1x16xi1>
    %68 = vector.broadcast %67 : vector<1x16xi1> to vector<16x16xi1>
    %69 = arith.select %68, %62, %63 : vector<16x16xi1>, vector<16x16xf32>
    %70 = arith.addf %13, %66 : vector<16x16xf32>
    %71 = arith.addf %70, %69 : vector<16x16xf32>
    %c1_i32_24 = arith.constant 1 : i32
    %72 = tpu.dynamic_rotate %23 by %c1_i32_24 dim 1 : vector<2x16xf32>, i32 -> vector<2x16xf32>
    %c15_i32_25 = arith.constant 15 : i32
    %73 = tpu.dynamic_rotate %23 by %c15_i32_25 dim 1 : vector<2x16xf32>, i32 -> vector<2x16xf32>
    %74 = vector.shape_cast %2 : vector<1x16xi1> to vector<1x16xi1>
    %75 = vector.broadcast %74 : vector<1x16xi1> to vector<2x16xi1>
    %76 = arith.select %75, %73, %72 : vector<2x16xi1>, vector<2x16xf32>
    %77 = vector.shape_cast %4 : vector<1x16xi1> to vector<1x16xi1>
    %78 = vector.broadcast %77 : vector<1x16xi1> to vector<2x16xi1>
    %79 = arith.select %78, %72, %73 : vector<2x16xi1>, vector<2x16xf32>
    %80 = arith.addf %23, %76 : vector<2x16xf32>
    %81 = arith.addf %80, %79 : vector<2x16xf32>
    %82 = vector.extract_strided_slice %81 {offsets = [0, 0], sizes = [1, 16], strides = [1, 1]} : vector<2x16xf32> to vector<1x16xf32>
    %83 = vector.extract_strided_slice %81 {offsets = [1, 0], sizes = [1, 16], strides = [1, 1]} : vector<2x16xf32> to vector<1x16xf32>
    %c1_i32_26 = arith.constant 1 : i32
    %84 = tpu.dynamic_rotate %71 by %c1_i32_26 dim 0 : vector<16x16xf32>, i32 -> vector<16x16xf32>
    %c15_i32_27 = arith.constant 15 : i32
    %85 = tpu.dynamic_rotate %71 by %c15_i32_27 dim 0 : vector<16x16xf32>, i32 -> vector<16x16xf32>
    %86 = vector.shape_cast %7 : vector<16x1xi1> to vector<16x1xi1>
    %87 = vector.broadcast %86 : vector<16x1xi1> to vector<16x16xi1>
    %88 = vector.shape_cast %82 : vector<1x16xf32> to vector<1x16xf32>
    %89 = vector.broadcast %88 : vector<1x16xf32> to vector<16x16xf32>
    %90 = arith.select %87, %89, %84 : vector<16x16xi1>, vector<16x16xf32>
    %91 = vector.shape_cast %9 : vector<16x1xi1> to vector<16x1xi1>
    %92 = vector.broadcast %91 : vector<16x1xi1> to vector<16x16xi1>
    %93 = vector.shape_cast %83 : vector<1x16xf32> to vector<1x16xf32>
    %94 = vector.broadcast %93 : vector<1x16xf32> to vector<16x16xf32>
    %95 = arith.select %92, %94, %85 : vector<16x16xi1>, vector<16x16xf32>
    %96 = arith.addf %71, %90 : vector<16x16xf32>
    %97 = arith.addf %96, %95 : vector<16x16xf32>
    %cst_28 = arith.constant 0.111111112 : f32
    %98 = vector.broadcast %cst_28 : f32 to vector<16x16xf32>
    %99 = arith.mulf %97, %98 : vector<16x16xf32>
    %100 = arith.mulf %11, %11 : vector<16x16xf32>
    %101 = arith.mulf %22, %22 : vector<2x16xf32>
    %c1_i32_29 = arith.constant 1 : i32
    %102 = tpu.dynamic_rotate %100 by %c1_i32_29 dim 1 : vector<16x16xf32>, i32 -> vector<16x16xf32>
    %c15_i32_30 = arith.constant 15 : i32
    %103 = tpu.dynamic_rotate %100 by %c15_i32_30 dim 1 : vector<16x16xf32>, i32 -> vector<16x16xf32>
    %104 = vector.shape_cast %2 : vector<1x16xi1> to vector<1x16xi1>
    %105 = vector.broadcast %104 : vector<1x16xi1> to vector<16x16xi1>
    %106 = arith.select %105, %103, %102 : vector<16x16xi1>, vector<16x16xf32>
    %107 = vector.shape_cast %4 : vector<1x16xi1> to vector<1x16xi1>
    %108 = vector.broadcast %107 : vector<1x16xi1> to vector<16x16xi1>
    %109 = arith.select %108, %102, %103 : vector<16x16xi1>, vector<16x16xf32>
    %110 = arith.addf %100, %106 : vector<16x16xf32>
    %111 = arith.addf %110, %109 : vector<16x16xf32>
    %c1_i32_31 = arith.constant 1 : i32
    %112 = tpu.dynamic_rotate %101 by %c1_i32_31 dim 1 : vector<2x16xf32>, i32 -> vector<2x16xf32>
    %c15_i32_32 = arith.constant 15 : i32
    %113 = tpu.dynamic_rotate %101 by %c15_i32_32 dim 1 : vector<2x16xf32>, i32 -> vector<2x16xf32>
    %114 = vector.shape_cast %2 : vector<1x16xi1> to vector<1x16xi1>
    %115 = vector.broadcast %114 : vector<1x16xi1> to vector<2x16xi1>
    %116 = arith.select %115, %113, %112 : vector<2x16xi1>, vector<2x16xf32>
    %117 = vector.shape_cast %4 : vector<1x16xi1> to vector<1x16xi1>
    %118 = vector.broadcast %117 : vector<1x16xi1> to vector<2x16xi1>
    %119 = arith.select %118, %112, %113 : vector<2x16xi1>, vector<2x16xf32>
    %120 = arith.addf %101, %116 : vector<2x16xf32>
    %121 = arith.addf %120, %119 : vector<2x16xf32>
    %122 = vector.extract_strided_slice %121 {offsets = [0, 0], sizes = [1, 16], strides = [1, 1]} : vector<2x16xf32> to vector<1x16xf32>
    %123 = vector.extract_strided_slice %121 {offsets = [1, 0], sizes = [1, 16], strides = [1, 1]} : vector<2x16xf32> to vector<1x16xf32>
    %c1_i32_33 = arith.constant 1 : i32
    %124 = tpu.dynamic_rotate %111 by %c1_i32_33 dim 0 : vector<16x16xf32>, i32 -> vector<16x16xf32>
    %c15_i32_34 = arith.constant 15 : i32
    %125 = tpu.dynamic_rotate %111 by %c15_i32_34 dim 0 : vector<16x16xf32>, i32 -> vector<16x16xf32>
    %126 = vector.shape_cast %7 : vector<16x1xi1> to vector<16x1xi1>
    %127 = vector.broadcast %126 : vector<16x1xi1> to vector<16x16xi1>
    %128 = vector.shape_cast %122 : vector<1x16xf32> to vector<1x16xf32>
    %129 = vector.broadcast %128 : vector<1x16xf32> to vector<16x16xf32>
    %130 = arith.select %127, %129, %124 : vector<16x16xi1>, vector<16x16xf32>
    %131 = vector.shape_cast %9 : vector<16x1xi1> to vector<16x1xi1>
    %132 = vector.broadcast %131 : vector<16x1xi1> to vector<16x16xi1>
    %133 = vector.shape_cast %123 : vector<1x16xf32> to vector<1x16xf32>
    %134 = vector.broadcast %133 : vector<1x16xf32> to vector<16x16xf32>
    %135 = arith.select %132, %134, %125 : vector<16x16xi1>, vector<16x16xf32>
    %136 = arith.addf %111, %130 : vector<16x16xf32>
    %137 = arith.addf %136, %135 : vector<16x16xf32>
    %cst_35 = arith.constant 0.111111112 : f32
    %138 = vector.broadcast %cst_35 : f32 to vector<16x16xf32>
    %139 = arith.mulf %137, %138 : vector<16x16xf32>
    %140 = arith.mulf %61, %61 : vector<16x16xf32>
    %141 = arith.subf %139, %140 : vector<16x16xf32>
    %142 = arith.mulf %13, %13 : vector<16x16xf32>
    %143 = arith.mulf %23, %23 : vector<2x16xf32>
    %c1_i32_36 = arith.constant 1 : i32
    %144 = tpu.dynamic_rotate %142 by %c1_i32_36 dim 1 : vector<16x16xf32>, i32 -> vector<16x16xf32>
    %c15_i32_37 = arith.constant 15 : i32
    %145 = tpu.dynamic_rotate %142 by %c15_i32_37 dim 1 : vector<16x16xf32>, i32 -> vector<16x16xf32>
    %146 = vector.shape_cast %2 : vector<1x16xi1> to vector<1x16xi1>
    %147 = vector.broadcast %146 : vector<1x16xi1> to vector<16x16xi1>
    %148 = arith.select %147, %145, %144 : vector<16x16xi1>, vector<16x16xf32>
    %149 = vector.shape_cast %4 : vector<1x16xi1> to vector<1x16xi1>
    %150 = vector.broadcast %149 : vector<1x16xi1> to vector<16x16xi1>
    %151 = arith.select %150, %144, %145 : vector<16x16xi1>, vector<16x16xf32>
    %152 = arith.addf %142, %148 : vector<16x16xf32>
    %153 = arith.addf %152, %151 : vector<16x16xf32>
    %c1_i32_38 = arith.constant 1 : i32
    %154 = tpu.dynamic_rotate %143 by %c1_i32_38 dim 1 : vector<2x16xf32>, i32 -> vector<2x16xf32>
    %c15_i32_39 = arith.constant 15 : i32
    %155 = tpu.dynamic_rotate %143 by %c15_i32_39 dim 1 : vector<2x16xf32>, i32 -> vector<2x16xf32>
    %156 = vector.shape_cast %2 : vector<1x16xi1> to vector<1x16xi1>
    %157 = vector.broadcast %156 : vector<1x16xi1> to vector<2x16xi1>
    %158 = arith.select %157, %155, %154 : vector<2x16xi1>, vector<2x16xf32>
    %159 = vector.shape_cast %4 : vector<1x16xi1> to vector<1x16xi1>
    %160 = vector.broadcast %159 : vector<1x16xi1> to vector<2x16xi1>
    %161 = arith.select %160, %154, %155 : vector<2x16xi1>, vector<2x16xf32>
    %162 = arith.addf %143, %158 : vector<2x16xf32>
    %163 = arith.addf %162, %161 : vector<2x16xf32>
    %164 = vector.extract_strided_slice %163 {offsets = [0, 0], sizes = [1, 16], strides = [1, 1]} : vector<2x16xf32> to vector<1x16xf32>
    %165 = vector.extract_strided_slice %163 {offsets = [1, 0], sizes = [1, 16], strides = [1, 1]} : vector<2x16xf32> to vector<1x16xf32>
    %c1_i32_40 = arith.constant 1 : i32
    %166 = tpu.dynamic_rotate %153 by %c1_i32_40 dim 0 : vector<16x16xf32>, i32 -> vector<16x16xf32>
    %c15_i32_41 = arith.constant 15 : i32
    %167 = tpu.dynamic_rotate %153 by %c15_i32_41 dim 0 : vector<16x16xf32>, i32 -> vector<16x16xf32>
    %168 = vector.shape_cast %7 : vector<16x1xi1> to vector<16x1xi1>
    %169 = vector.broadcast %168 : vector<16x1xi1> to vector<16x16xi1>
    %170 = vector.shape_cast %164 : vector<1x16xf32> to vector<1x16xf32>
    %171 = vector.broadcast %170 : vector<1x16xf32> to vector<16x16xf32>
    %172 = arith.select %169, %171, %166 : vector<16x16xi1>, vector<16x16xf32>
    %173 = vector.shape_cast %9 : vector<16x1xi1> to vector<16x1xi1>
    %174 = vector.broadcast %173 : vector<16x1xi1> to vector<16x16xi1>
    %175 = vector.shape_cast %165 : vector<1x16xf32> to vector<1x16xf32>
    %176 = vector.broadcast %175 : vector<1x16xf32> to vector<16x16xf32>
    %177 = arith.select %174, %176, %167 : vector<16x16xi1>, vector<16x16xf32>
    %178 = arith.addf %153, %172 : vector<16x16xf32>
    %179 = arith.addf %178, %177 : vector<16x16xf32>
    %cst_42 = arith.constant 0.111111112 : f32
    %180 = vector.broadcast %cst_42 : f32 to vector<16x16xf32>
    %181 = arith.mulf %179, %180 : vector<16x16xf32>
    %182 = arith.mulf %99, %99 : vector<16x16xf32>
    %183 = arith.subf %181, %182 : vector<16x16xf32>
    %184 = arith.mulf %11, %13 : vector<16x16xf32>
    %185 = arith.mulf %22, %23 : vector<2x16xf32>
    %c1_i32_43 = arith.constant 1 : i32
    %186 = tpu.dynamic_rotate %184 by %c1_i32_43 dim 1 : vector<16x16xf32>, i32 -> vector<16x16xf32>
    %c15_i32_44 = arith.constant 15 : i32
    %187 = tpu.dynamic_rotate %184 by %c15_i32_44 dim 1 : vector<16x16xf32>, i32 -> vector<16x16xf32>
    %188 = vector.shape_cast %2 : vector<1x16xi1> to vector<1x16xi1>
    %189 = vector.broadcast %188 : vector<1x16xi1> to vector<16x16xi1>
    %190 = arith.select %189, %187, %186 : vector<16x16xi1>, vector<16x16xf32>
    %191 = vector.shape_cast %4 : vector<1x16xi1> to vector<1x16xi1>
    %192 = vector.broadcast %191 : vector<1x16xi1> to vector<16x16xi1>
    %193 = arith.select %192, %186, %187 : vector<16x16xi1>, vector<16x16xf32>
    %194 = arith.addf %184, %190 : vector<16x16xf32>
    %195 = arith.addf %194, %193 : vector<16x16xf32>
    %c1_i32_45 = arith.constant 1 : i32
    %196 = tpu.dynamic_rotate %185 by %c1_i32_45 dim 1 : vector<2x16xf32>, i32 -> vector<2x16xf32>
    %c15_i32_46 = arith.constant 15 : i32
    %197 = tpu.dynamic_rotate %185 by %c15_i32_46 dim 1 : vector<2x16xf32>, i32 -> vector<2x16xf32>
    %198 = vector.shape_cast %2 : vector<1x16xi1> to vector<1x16xi1>
    %199 = vector.broadcast %198 : vector<1x16xi1> to vector<2x16xi1>
    %200 = arith.select %199, %197, %196 : vector<2x16xi1>, vector<2x16xf32>
    %201 = vector.shape_cast %4 : vector<1x16xi1> to vector<1x16xi1>
    %202 = vector.broadcast %201 : vector<1x16xi1> to vector<2x16xi1>
    %203 = arith.select %202, %196, %197 : vector<2x16xi1>, vector<2x16xf32>
    %204 = arith.addf %185, %200 : vector<2x16xf32>
    %205 = arith.addf %204, %203 : vector<2x16xf32>
    %206 = vector.extract_strided_slice %205 {offsets = [0, 0], sizes = [1, 16], strides = [1, 1]} : vector<2x16xf32> to vector<1x16xf32>
    %207 = vector.extract_strided_slice %205 {offsets = [1, 0], sizes = [1, 16], strides = [1, 1]} : vector<2x16xf32> to vector<1x16xf32>
    %c1_i32_47 = arith.constant 1 : i32
    %208 = tpu.dynamic_rotate %195 by %c1_i32_47 dim 0 : vector<16x16xf32>, i32 -> vector<16x16xf32>
    %c15_i32_48 = arith.constant 15 : i32
    %209 = tpu.dynamic_rotate %195 by %c15_i32_48 dim 0 : vector<16x16xf32>, i32 -> vector<16x16xf32>
    %210 = vector.shape_cast %7 : vector<16x1xi1> to vector<16x1xi1>
    %211 = vector.broadcast %210 : vector<16x1xi1> to vector<16x16xi1>
    %212 = vector.shape_cast %206 : vector<1x16xf32> to vector<1x16xf32>
    %213 = vector.broadcast %212 : vector<1x16xf32> to vector<16x16xf32>
    %214 = arith.select %211, %213, %208 : vector<16x16xi1>, vector<16x16xf32>
    %215 = vector.shape_cast %9 : vector<16x1xi1> to vector<16x1xi1>
    %216 = vector.broadcast %215 : vector<16x1xi1> to vector<16x16xi1>
    %217 = vector.shape_cast %207 : vector<1x16xf32> to vector<1x16xf32>
    %218 = vector.broadcast %217 : vector<1x16xf32> to vector<16x16xf32>
    %219 = arith.select %216, %218, %209 : vector<16x16xi1>, vector<16x16xf32>
    %220 = arith.addf %195, %214 : vector<16x16xf32>
    %221 = arith.addf %220, %219 : vector<16x16xf32>
    %cst_49 = arith.constant 0.111111112 : f32
    %222 = vector.broadcast %cst_49 : f32 to vector<16x16xf32>
    %223 = arith.mulf %221, %222 : vector<16x16xf32>
    %224 = arith.mulf %61, %99 : vector<16x16xf32>
    %225 = arith.subf %223, %224 : vector<16x16xf32>
    %cst_50 = arith.constant 2.000000e+00 : f32
    %226 = vector.broadcast %cst_50 : f32 to vector<16x16xf32>
    %227 = arith.mulf %226, %61 : vector<16x16xf32>
    %228 = arith.mulf %227, %99 : vector<16x16xf32>
    %cst_51 = arith.constant 9.99999974E-5 : f32
    %229 = vector.broadcast %cst_51 : f32 to vector<16x16xf32>
    %230 = arith.addf %228, %229 : vector<16x16xf32>
    %cst_52 = arith.constant 2.000000e+00 : f32
    %231 = vector.broadcast %cst_52 : f32 to vector<16x16xf32>
    %232 = arith.mulf %231, %225 : vector<16x16xf32>
    %cst_53 = arith.constant 8.99999984E-4 : f32
    %233 = vector.broadcast %cst_53 : f32 to vector<16x16xf32>
    %234 = arith.addf %232, %233 : vector<16x16xf32>
    %235 = arith.mulf %230, %234 : vector<16x16xf32>
    %236 = arith.mulf %61, %61 : vector<16x16xf32>
    %237 = arith.mulf %99, %99 : vector<16x16xf32>
    %238 = arith.addf %236, %237 : vector<16x16xf32>
    %cst_54 = arith.constant 9.99999974E-5 : f32
    %239 = vector.broadcast %cst_54 : f32 to vector<16x16xf32>
    %240 = arith.addf %238, %239 : vector<16x16xf32>
    %241 = arith.addf %141, %183 : vector<16x16xf32>
    %cst_55 = arith.constant 8.99999984E-4 : f32
    %242 = vector.broadcast %cst_55 : f32 to vector<16x16xf32>
    %243 = arith.addf %241, %242 : vector<16x16xf32>
    %244 = arith.mulf %240, %243 : vector<16x16xf32>
    %245 = tpu.reciprocal %244 {approx = true} : vector<16x16xf32> -> vector<16x16xf32>
    %246 = arith.mulf %235, %245 : vector<16x16xf32>
    %cst_56 = arith.constant 1.000000e+00 : f32
    %247 = vector.broadcast %cst_56 : f32 to vector<16x16xf32>
    %248 = arith.subf %247, %246 : vector<16x16xf32>
    %cst_57 = arith.constant 5.000000e-01 : f32
    %249 = vector.broadcast %cst_57 : f32 to vector<16x16xf32>
    %250 = arith.mulf %248, %249 : vector<16x16xf32>
    %cst_58 = arith.constant 0.000000e+00 : f32
    %cst_59 = arith.constant 1.000000e+00 : f32
    %251 = vector.broadcast %cst_58 : f32 to vector<16x16xf32>
    %252 = arith.maximumf %251, %250 : vector<16x16xf32>
    %253 = vector.broadcast %cst_59 : f32 to vector<16x16xf32>
    %254 = arith.minimumf %253, %252 : vector<16x16xf32>
    %c0_60 = arith.constant 0 : index
    %c0_61 = arith.constant 0 : index
    %c0_62 = arith.constant 0 : index
    %255 = vector.load %arg3[%c0_60, %c0_61, %c0_62] : memref<4x16x16xf32, #tpu.memory_space<vmem>>, vector<1x16x16xf32>
    %256 = vector.shape_cast %255 : vector<1x16x16xf32> to vector<16x16xf32>
    %257 = vector.shape_cast %254 : vector<16x16xf32> to vector<1x16x16xf32>
    tpu.vector_store %arg3[%c0_60, %c0_61, %c0_62], %257 {strides = array<i32>} : memref<4x16x16xf32, #tpu.memory_space<vmem>>, vector<1x16x16xf32>,
    %c1_63 = arith.constant 1 : index
    %c0_64 = arith.constant 0 : index
    %c0_65 = arith.constant 0 : index
    %258 = vector.load %arg1[%c1_63, %c0_64, %c0_65] : memref<4x16x16xf32, #tpu.memory_space<vmem>>, vector<1x16x16xf32>
    %259 = vector.shape_cast %258 : vector<1x16x16xf32> to vector<16x16xf32>
    %c1_66 = arith.constant 1 : index
    %c0_67 = arith.constant 0 : index
    %c0_68 = arith.constant 0 : index
    %260 = vector.load %arg2[%c1_66, %c0_67, %c0_68] : memref<4x16x16xf32, #tpu.memory_space<vmem>>, vector<1x16x16xf32>
    %261 = vector.shape_cast %260 : vector<1x16x16xf32> to vector<16x16xf32>
    %c1_69 = arith.constant 1 : index
    %c1_70 = arith.constant 1 : index
    %c0_71 = arith.constant 0 : index
    %262 = vector.load %arg1[%c1_69, %c1_70, %c0_71] : memref<4x16x16xf32, #tpu.memory_space<vmem>>, vector<1x1x16xf32>
    %263 = vector.shape_cast %262 : vector<1x1x16xf32> to vector<1x16xf32>
    %c1_72 = arith.constant 1 : index
    %c14_73 = arith.constant 14 : index
    %c0_74 = arith.constant 0 : index
    %264 = vector.load %arg1[%c1_72, %c14_73, %c0_74] : memref<4x16x16xf32, #tpu.memory_space<vmem>>, vector<1x1x16xf32>
    %265 = vector.shape_cast %264 : vector<1x1x16xf32> to vector<1x16xf32>
    %c1_75 = arith.constant 1 : index
    %c1_76 = arith.constant 1 : index
    %c0_77 = arith.constant 0 : index
    %266 = vector.load %arg2[%c1_75, %c1_76, %c0_77] : memref<4x16x16xf32, #tpu.memory_space<vmem>>, vector<1x1x16xf32>
    %267 = vector.shape_cast %266 : vector<1x1x16xf32> to vector<1x16xf32>
    %c1_78 = arith.constant 1 : index
    %c14_79 = arith.constant 14 : index
    %c0_80 = arith.constant 0 : index
    %268 = vector.load %arg2[%c1_78, %c14_79, %c0_80] : memref<4x16x16xf32, #tpu.memory_space<vmem>>, vector<1x1x16xf32>
    %269 = vector.shape_cast %268 : vector<1x1x16xf32> to vector<1x16xf32>
    %270 = tpu.concatenate %263, %265 in 0 : vector<1x16xf32>, vector<1x16xf32> -> vector<2x16xf32>
    %271 = tpu.concatenate %267, %269 in 0 : vector<1x16xf32>, vector<1x16xf32> -> vector<2x16xf32>
    %c1_i32_81 = arith.constant 1 : i32
    %272 = tpu.dynamic_rotate %259 by %c1_i32_81 dim 1 : vector<16x16xf32>, i32 -> vector<16x16xf32>
    %c15_i32_82 = arith.constant 15 : i32
    %273 = tpu.dynamic_rotate %259 by %c15_i32_82 dim 1 : vector<16x16xf32>, i32 -> vector<16x16xf32>
    %274 = vector.shape_cast %2 : vector<1x16xi1> to vector<1x16xi1>
    %275 = vector.broadcast %274 : vector<1x16xi1> to vector<16x16xi1>
    %276 = arith.select %275, %273, %272 : vector<16x16xi1>, vector<16x16xf32>
    %277 = vector.shape_cast %4 : vector<1x16xi1> to vector<1x16xi1>
    %278 = vector.broadcast %277 : vector<1x16xi1> to vector<16x16xi1>
    %279 = arith.select %278, %272, %273 : vector<16x16xi1>, vector<16x16xf32>
    %280 = arith.addf %259, %276 : vector<16x16xf32>
    %281 = arith.addf %280, %279 : vector<16x16xf32>
    %c1_i32_83 = arith.constant 1 : i32
    %282 = tpu.dynamic_rotate %270 by %c1_i32_83 dim 1 : vector<2x16xf32>, i32 -> vector<2x16xf32>
    %c15_i32_84 = arith.constant 15 : i32
    %283 = tpu.dynamic_rotate %270 by %c15_i32_84 dim 1 : vector<2x16xf32>, i32 -> vector<2x16xf32>
    %284 = vector.shape_cast %2 : vector<1x16xi1> to vector<1x16xi1>
    %285 = vector.broadcast %284 : vector<1x16xi1> to vector<2x16xi1>
    %286 = arith.select %285, %283, %282 : vector<2x16xi1>, vector<2x16xf32>
    %287 = vector.shape_cast %4 : vector<1x16xi1> to vector<1x16xi1>
    %288 = vector.broadcast %287 : vector<1x16xi1> to vector<2x16xi1>
    %289 = arith.select %288, %282, %283 : vector<2x16xi1>, vector<2x16xf32>
    %290 = arith.addf %270, %286 : vector<2x16xf32>
    %291 = arith.addf %290, %289 : vector<2x16xf32>
    %292 = vector.extract_strided_slice %291 {offsets = [0, 0], sizes = [1, 16], strides = [1, 1]} : vector<2x16xf32> to vector<1x16xf32>
    %293 = vector.extract_strided_slice %291 {offsets = [1, 0], sizes = [1, 16], strides = [1, 1]} : vector<2x16xf32> to vector<1x16xf32>
    %c1_i32_85 = arith.constant 1 : i32
    %294 = tpu.dynamic_rotate %281 by %c1_i32_85 dim 0 : vector<16x16xf32>, i32 -> vector<16x16xf32>
    %c15_i32_86 = arith.constant 15 : i32
    %295 = tpu.dynamic_rotate %281 by %c15_i32_86 dim 0 : vector<16x16xf32>, i32 -> vector<16x16xf32>
    %296 = vector.shape_cast %7 : vector<16x1xi1> to vector<16x1xi1>
    %297 = vector.broadcast %296 : vector<16x1xi1> to vector<16x16xi1>
    %298 = vector.shape_cast %292 : vector<1x16xf32> to vector<1x16xf32>
    %299 = vector.broadcast %298 : vector<1x16xf32> to vector<16x16xf32>
    %300 = arith.select %297, %299, %294 : vector<16x16xi1>, vector<16x16xf32>
    %301 = vector.shape_cast %9 : vector<16x1xi1> to vector<16x1xi1>
    %302 = vector.broadcast %301 : vector<16x1xi1> to vector<16x16xi1>
    %303 = vector.shape_cast %293 : vector<1x16xf32> to vector<1x16xf32>
    %304 = vector.broadcast %303 : vector<1x16xf32> to vector<16x16xf32>
    %305 = arith.select %302, %304, %295 : vector<16x16xi1>, vector<16x16xf32>
    %306 = arith.addf %281, %300 : vector<16x16xf32>
    %307 = arith.addf %306, %305 : vector<16x16xf32>
    %cst_87 = arith.constant 0.111111112 : f32
    %308 = vector.broadcast %cst_87 : f32 to vector<16x16xf32>
    %309 = arith.mulf %307, %308 : vector<16x16xf32>
    %c1_i32_88 = arith.constant 1 : i32
    %310 = tpu.dynamic_rotate %261 by %c1_i32_88 dim 1 : vector<16x16xf32>, i32 -> vector<16x16xf32>
    %c15_i32_89 = arith.constant 15 : i32
    %311 = tpu.dynamic_rotate %261 by %c15_i32_89 dim 1 : vector<16x16xf32>, i32 -> vector<16x16xf32>
    %312 = vector.shape_cast %2 : vector<1x16xi1> to vector<1x16xi1>
    %313 = vector.broadcast %312 : vector<1x16xi1> to vector<16x16xi1>
    %314 = arith.select %313, %311, %310 : vector<16x16xi1>, vector<16x16xf32>
    %315 = vector.shape_cast %4 : vector<1x16xi1> to vector<1x16xi1>
    %316 = vector.broadcast %315 : vector<1x16xi1> to vector<16x16xi1>
    %317 = arith.select %316, %310, %311 : vector<16x16xi1>, vector<16x16xf32>
    %318 = arith.addf %261, %314 : vector<16x16xf32>
    %319 = arith.addf %318, %317 : vector<16x16xf32>
    %c1_i32_90 = arith.constant 1 : i32
    %320 = tpu.dynamic_rotate %271 by %c1_i32_90 dim 1 : vector<2x16xf32>, i32 -> vector<2x16xf32>
    %c15_i32_91 = arith.constant 15 : i32
    %321 = tpu.dynamic_rotate %271 by %c15_i32_91 dim 1 : vector<2x16xf32>, i32 -> vector<2x16xf32>
    %322 = vector.shape_cast %2 : vector<1x16xi1> to vector<1x16xi1>
    %323 = vector.broadcast %322 : vector<1x16xi1> to vector<2x16xi1>
    %324 = arith.select %323, %321, %320 : vector<2x16xi1>, vector<2x16xf32>
    %325 = vector.shape_cast %4 : vector<1x16xi1> to vector<1x16xi1>
    %326 = vector.broadcast %325 : vector<1x16xi1> to vector<2x16xi1>
    %327 = arith.select %326, %320, %321 : vector<2x16xi1>, vector<2x16xf32>
    %328 = arith.addf %271, %324 : vector<2x16xf32>
    %329 = arith.addf %328, %327 : vector<2x16xf32>
    %330 = vector.extract_strided_slice %329 {offsets = [0, 0], sizes = [1, 16], strides = [1, 1]} : vector<2x16xf32> to vector<1x16xf32>
    %331 = vector.extract_strided_slice %329 {offsets = [1, 0], sizes = [1, 16], strides = [1, 1]} : vector<2x16xf32> to vector<1x16xf32>
    %c1_i32_92 = arith.constant 1 : i32
    %332 = tpu.dynamic_rotate %319 by %c1_i32_92 dim 0 : vector<16x16xf32>, i32 -> vector<16x16xf32>
    %c15_i32_93 = arith.constant 15 : i32
    %333 = tpu.dynamic_rotate %319 by %c15_i32_93 dim 0 : vector<16x16xf32>, i32 -> vector<16x16xf32>
    %334 = vector.shape_cast %7 : vector<16x1xi1> to vector<16x1xi1>
    %335 = vector.broadcast %334 : vector<16x1xi1> to vector<16x16xi1>
    %336 = vector.shape_cast %330 : vector<1x16xf32> to vector<1x16xf32>
    %337 = vector.broadcast %336 : vector<1x16xf32> to vector<16x16xf32>
    %338 = arith.select %335, %337, %332 : vector<16x16xi1>, vector<16x16xf32>
    %339 = vector.shape_cast %9 : vector<16x1xi1> to vector<16x1xi1>
    %340 = vector.broadcast %339 : vector<16x1xi1> to vector<16x16xi1>
    %341 = vector.shape_cast %331 : vector<1x16xf32> to vector<1x16xf32>
    %342 = vector.broadcast %341 : vector<1x16xf32> to vector<16x16xf32>
    %343 = arith.select %340, %342, %333 : vector<16x16xi1>, vector<16x16xf32>
    %344 = arith.addf %319, %338 : vector<16x16xf32>
    %345 = arith.addf %344, %343 : vector<16x16xf32>
    %cst_94 = arith.constant 0.111111112 : f32
    %346 = vector.broadcast %cst_94 : f32 to vector<16x16xf32>
    %347 = arith.mulf %345, %346 : vector<16x16xf32>
    %348 = arith.mulf %259, %259 : vector<16x16xf32>
    %349 = arith.mulf %270, %270 : vector<2x16xf32>
    %c1_i32_95 = arith.constant 1 : i32
    %350 = tpu.dynamic_rotate %348 by %c1_i32_95 dim 1 : vector<16x16xf32>, i32 -> vector<16x16xf32>
    %c15_i32_96 = arith.constant 15 : i32
    %351 = tpu.dynamic_rotate %348 by %c15_i32_96 dim 1 : vector<16x16xf32>, i32 -> vector<16x16xf32>
    %352 = vector.shape_cast %2 : vector<1x16xi1> to vector<1x16xi1>
    %353 = vector.broadcast %352 : vector<1x16xi1> to vector<16x16xi1>
    %354 = arith.select %353, %351, %350 : vector<16x16xi1>, vector<16x16xf32>
    %355 = vector.shape_cast %4 : vector<1x16xi1> to vector<1x16xi1>
    %356 = vector.broadcast %355 : vector<1x16xi1> to vector<16x16xi1>
    %357 = arith.select %356, %350, %351 : vector<16x16xi1>, vector<16x16xf32>
    %358 = arith.addf %348, %354 : vector<16x16xf32>
    %359 = arith.addf %358, %357 : vector<16x16xf32>
    %c1_i32_97 = arith.constant 1 : i32
    %360 = tpu.dynamic_rotate %349 by %c1_i32_97 dim 1 : vector<2x16xf32>, i32 -> vector<2x16xf32>
    %c15_i32_98 = arith.constant 15 : i32
    %361 = tpu.dynamic_rotate %349 by %c15_i32_98 dim 1 : vector<2x16xf32>, i32 -> vector<2x16xf32>
    %362 = vector.shape_cast %2 : vector<1x16xi1> to vector<1x16xi1>
    %363 = vector.broadcast %362 : vector<1x16xi1> to vector<2x16xi1>
    %364 = arith.select %363, %361, %360 : vector<2x16xi1>, vector<2x16xf32>
    %365 = vector.shape_cast %4 : vector<1x16xi1> to vector<1x16xi1>
    %366 = vector.broadcast %365 : vector<1x16xi1> to vector<2x16xi1>
    %367 = arith.select %366, %360, %361 : vector<2x16xi1>, vector<2x16xf32>
    %368 = arith.addf %349, %364 : vector<2x16xf32>
    %369 = arith.addf %368, %367 : vector<2x16xf32>
    %370 = vector.extract_strided_slice %369 {offsets = [0, 0], sizes = [1, 16], strides = [1, 1]} : vector<2x16xf32> to vector<1x16xf32>
    %371 = vector.extract_strided_slice %369 {offsets = [1, 0], sizes = [1, 16], strides = [1, 1]} : vector<2x16xf32> to vector<1x16xf32>
    %c1_i32_99 = arith.constant 1 : i32
    %372 = tpu.dynamic_rotate %359 by %c1_i32_99 dim 0 : vector<16x16xf32>, i32 -> vector<16x16xf32>
    %c15_i32_100 = arith.constant 15 : i32
    %373 = tpu.dynamic_rotate %359 by %c15_i32_100 dim 0 : vector<16x16xf32>, i32 -> vector<16x16xf32>
    %374 = vector.shape_cast %7 : vector<16x1xi1> to vector<16x1xi1>
    %375 = vector.broadcast %374 : vector<16x1xi1> to vector<16x16xi1>
    %376 = vector.shape_cast %370 : vector<1x16xf32> to vector<1x16xf32>
    %377 = vector.broadcast %376 : vector<1x16xf32> to vector<16x16xf32>
    %378 = arith.select %375, %377, %372 : vector<16x16xi1>, vector<16x16xf32>
    %379 = vector.shape_cast %9 : vector<16x1xi1> to vector<16x1xi1>
    %380 = vector.broadcast %379 : vector<16x1xi1> to vector<16x16xi1>
    %381 = vector.shape_cast %371 : vector<1x16xf32> to vector<1x16xf32>
    %382 = vector.broadcast %381 : vector<1x16xf32> to vector<16x16xf32>
    %383 = arith.select %380, %382, %373 : vector<16x16xi1>, vector<16x16xf32>
    %384 = arith.addf %359, %378 : vector<16x16xf32>
    %385 = arith.addf %384, %383 : vector<16x16xf32>
    %cst_101 = arith.constant 0.111111112 : f32
    %386 = vector.broadcast %cst_101 : f32 to vector<16x16xf32>
    %387 = arith.mulf %385, %386 : vector<16x16xf32>
    %388 = arith.mulf %309, %309 : vector<16x16xf32>
    %389 = arith.subf %387, %388 : vector<16x16xf32>
    %390 = arith.mulf %261, %261 : vector<16x16xf32>
    %391 = arith.mulf %271, %271 : vector<2x16xf32>
    %c1_i32_102 = arith.constant 1 : i32
    %392 = tpu.dynamic_rotate %390 by %c1_i32_102 dim 1 : vector<16x16xf32>, i32 -> vector<16x16xf32>
    %c15_i32_103 = arith.constant 15 : i32
    %393 = tpu.dynamic_rotate %390 by %c15_i32_103 dim 1 : vector<16x16xf32>, i32 -> vector<16x16xf32>
    %394 = vector.shape_cast %2 : vector<1x16xi1> to vector<1x16xi1>
    %395 = vector.broadcast %394 : vector<1x16xi1> to vector<16x16xi1>
    %396 = arith.select %395, %393, %392 : vector<16x16xi1>, vector<16x16xf32>
    %397 = vector.shape_cast %4 : vector<1x16xi1> to vector<1x16xi1>
    %398 = vector.broadcast %397 : vector<1x16xi1> to vector<16x16xi1>
    %399 = arith.select %398, %392, %393 : vector<16x16xi1>, vector<16x16xf32>
    %400 = arith.addf %390, %396 : vector<16x16xf32>
    %401 = arith.addf %400, %399 : vector<16x16xf32>
    %c1_i32_104 = arith.constant 1 : i32
    %402 = tpu.dynamic_rotate %391 by %c1_i32_104 dim 1 : vector<2x16xf32>, i32 -> vector<2x16xf32>
    %c15_i32_105 = arith.constant 15 : i32
    %403 = tpu.dynamic_rotate %391 by %c15_i32_105 dim 1 : vector<2x16xf32>, i32 -> vector<2x16xf32>
    %404 = vector.shape_cast %2 : vector<1x16xi1> to vector<1x16xi1>
    %405 = vector.broadcast %404 : vector<1x16xi1> to vector<2x16xi1>
    %406 = arith.select %405, %403, %402 : vector<2x16xi1>, vector<2x16xf32>
    %407 = vector.shape_cast %4 : vector<1x16xi1> to vector<1x16xi1>
    %408 = vector.broadcast %407 : vector<1x16xi1> to vector<2x16xi1>
    %409 = arith.select %408, %402, %403 : vector<2x16xi1>, vector<2x16xf32>
    %410 = arith.addf %391, %406 : vector<2x16xf32>
    %411 = arith.addf %410, %409 : vector<2x16xf32>
    %412 = vector.extract_strided_slice %411 {offsets = [0, 0], sizes = [1, 16], strides = [1, 1]} : vector<2x16xf32> to vector<1x16xf32>
    %413 = vector.extract_strided_slice %411 {offsets = [1, 0], sizes = [1, 16], strides = [1, 1]} : vector<2x16xf32> to vector<1x16xf32>
    %c1_i32_106 = arith.constant 1 : i32
    %414 = tpu.dynamic_rotate %401 by %c1_i32_106 dim 0 : vector<16x16xf32>, i32 -> vector<16x16xf32>
    %c15_i32_107 = arith.constant 15 : i32
    %415 = tpu.dynamic_rotate %401 by %c15_i32_107 dim 0 : vector<16x16xf32>, i32 -> vector<16x16xf32>
    %416 = vector.shape_cast %7 : vector<16x1xi1> to vector<16x1xi1>
    %417 = vector.broadcast %416 : vector<16x1xi1> to vector<16x16xi1>
    %418 = vector.shape_cast %412 : vector<1x16xf32> to vector<1x16xf32>
    %419 = vector.broadcast %418 : vector<1x16xf32> to vector<16x16xf32>
    %420 = arith.select %417, %419, %414 : vector<16x16xi1>, vector<16x16xf32>
    %421 = vector.shape_cast %9 : vector<16x1xi1> to vector<16x1xi1>
    %422 = vector.broadcast %421 : vector<16x1xi1> to vector<16x16xi1>
    %423 = vector.shape_cast %413 : vector<1x16xf32> to vector<1x16xf32>
    %424 = vector.broadcast %423 : vector<1x16xf32> to vector<16x16xf32>
    %425 = arith.select %422, %424, %415 : vector<16x16xi1>, vector<16x16xf32>
    %426 = arith.addf %401, %420 : vector<16x16xf32>
    %427 = arith.addf %426, %425 : vector<16x16xf32>
    %cst_108 = arith.constant 0.111111112 : f32
    %428 = vector.broadcast %cst_108 : f32 to vector<16x16xf32>
    %429 = arith.mulf %427, %428 : vector<16x16xf32>
    %430 = arith.mulf %347, %347 : vector<16x16xf32>
    %431 = arith.subf %429, %430 : vector<16x16xf32>
    %432 = arith.mulf %259, %261 : vector<16x16xf32>
    %433 = arith.mulf %270, %271 : vector<2x16xf32>
    %c1_i32_109 = arith.constant 1 : i32
    %434 = tpu.dynamic_rotate %432 by %c1_i32_109 dim 1 : vector<16x16xf32>, i32 -> vector<16x16xf32>
    %c15_i32_110 = arith.constant 15 : i32
    %435 = tpu.dynamic_rotate %432 by %c15_i32_110 dim 1 : vector<16x16xf32>, i32 -> vector<16x16xf32>
    %436 = vector.shape_cast %2 : vector<1x16xi1> to vector<1x16xi1>
    %437 = vector.broadcast %436 : vector<1x16xi1> to vector<16x16xi1>
    %438 = arith.select %437, %435, %434 : vector<16x16xi1>, vector<16x16xf32>
    %439 = vector.shape_cast %4 : vector<1x16xi1> to vector<1x16xi1>
    %440 = vector.broadcast %439 : vector<1x16xi1> to vector<16x16xi1>
    %441 = arith.select %440, %434, %435 : vector<16x16xi1>, vector<16x16xf32>
    %442 = arith.addf %432, %438 : vector<16x16xf32>
    %443 = arith.addf %442, %441 : vector<16x16xf32>
    %c1_i32_111 = arith.constant 1 : i32
    %444 = tpu.dynamic_rotate %433 by %c1_i32_111 dim 1 : vector<2x16xf32>, i32 -> vector<2x16xf32>
    %c15_i32_112 = arith.constant 15 : i32
    %445 = tpu.dynamic_rotate %433 by %c15_i32_112 dim 1 : vector<2x16xf32>, i32 -> vector<2x16xf32>
    %446 = vector.shape_cast %2 : vector<1x16xi1> to vector<1x16xi1>
    %447 = vector.broadcast %446 : vector<1x16xi1> to vector<2x16xi1>
    %448 = arith.select %447, %445, %444 : vector<2x16xi1>, vector<2x16xf32>
    %449 = vector.shape_cast %4 : vector<1x16xi1> to vector<1x16xi1>
    %450 = vector.broadcast %449 : vector<1x16xi1> to vector<2x16xi1>
    %451 = arith.select %450, %444, %445 : vector<2x16xi1>, vector<2x16xf32>
    %452 = arith.addf %433, %448 : vector<2x16xf32>
    %453 = arith.addf %452, %451 : vector<2x16xf32>
    %454 = vector.extract_strided_slice %453 {offsets = [0, 0], sizes = [1, 16], strides = [1, 1]} : vector<2x16xf32> to vector<1x16xf32>
    %455 = vector.extract_strided_slice %453 {offsets = [1, 0], sizes = [1, 16], strides = [1, 1]} : vector<2x16xf32> to vector<1x16xf32>
    %c1_i32_113 = arith.constant 1 : i32
    %456 = tpu.dynamic_rotate %443 by %c1_i32_113 dim 0 : vector<16x16xf32>, i32 -> vector<16x16xf32>
    %c15_i32_114 = arith.constant 15 : i32
    %457 = tpu.dynamic_rotate %443 by %c15_i32_114 dim 0 : vector<16x16xf32>, i32 -> vector<16x16xf32>
    %458 = vector.shape_cast %7 : vector<16x1xi1> to vector<16x1xi1>
    %459 = vector.broadcast %458 : vector<16x1xi1> to vector<16x16xi1>
    %460 = vector.shape_cast %454 : vector<1x16xf32> to vector<1x16xf32>
    %461 = vector.broadcast %460 : vector<1x16xf32> to vector<16x16xf32>
    %462 = arith.select %459, %461, %456 : vector<16x16xi1>, vector<16x16xf32>
    %463 = vector.shape_cast %9 : vector<16x1xi1> to vector<16x1xi1>
    %464 = vector.broadcast %463 : vector<16x1xi1> to vector<16x16xi1>
    %465 = vector.shape_cast %455 : vector<1x16xf32> to vector<1x16xf32>
    %466 = vector.broadcast %465 : vector<1x16xf32> to vector<16x16xf32>
    %467 = arith.select %464, %466, %457 : vector<16x16xi1>, vector<16x16xf32>
    %468 = arith.addf %443, %462 : vector<16x16xf32>
    %469 = arith.addf %468, %467 : vector<16x16xf32>
    %cst_115 = arith.constant 0.111111112 : f32
    %470 = vector.broadcast %cst_115 : f32 to vector<16x16xf32>
    %471 = arith.mulf %469, %470 : vector<16x16xf32>
    %472 = arith.mulf %309, %347 : vector<16x16xf32>
    %473 = arith.subf %471, %472 : vector<16x16xf32>
    %cst_116 = arith.constant 2.000000e+00 : f32
    %474 = vector.broadcast %cst_116 : f32 to vector<16x16xf32>
    %475 = arith.mulf %474, %309 : vector<16x16xf32>
    %476 = arith.mulf %475, %347 : vector<16x16xf32>
    %cst_117 = arith.constant 9.99999974E-5 : f32
    %477 = vector.broadcast %cst_117 : f32 to vector<16x16xf32>
    %478 = arith.addf %476, %477 : vector<16x16xf32>
    %cst_118 = arith.constant 2.000000e+00 : f32
    %479 = vector.broadcast %cst_118 : f32 to vector<16x16xf32>
    %480 = arith.mulf %479, %473 : vector<16x16xf32>
    %cst_119 = arith.constant 8.99999984E-4 : f32
    %481 = vector.broadcast %cst_119 : f32 to vector<16x16xf32>
    %482 = arith.addf %480, %481 : vector<16x16xf32>
    %483 = arith.mulf %478, %482 : vector<16x16xf32>
    %484 = arith.mulf %309, %309 : vector<16x16xf32>
    %485 = arith.mulf %347, %347 : vector<16x16xf32>
    %486 = arith.addf %484, %485 : vector<16x16xf32>
    %cst_120 = arith.constant 9.99999974E-5 : f32
    %487 = vector.broadcast %cst_120 : f32 to vector<16x16xf32>
    %488 = arith.addf %486, %487 : vector<16x16xf32>
    %489 = arith.addf %389, %431 : vector<16x16xf32>
    %cst_121 = arith.constant 8.99999984E-4 : f32
    %490 = vector.broadcast %cst_121 : f32 to vector<16x16xf32>
    %491 = arith.addf %489, %490 : vector<16x16xf32>
    %492 = arith.mulf %488, %491 : vector<16x16xf32>
    %493 = tpu.reciprocal %492 {approx = true} : vector<16x16xf32> -> vector<16x16xf32>
    %494 = arith.mulf %483, %493 : vector<16x16xf32>
    %cst_122 = arith.constant 1.000000e+00 : f32
    %495 = vector.broadcast %cst_122 : f32 to vector<16x16xf32>
    %496 = arith.subf %495, %494 : vector<16x16xf32>
    %cst_123 = arith.constant 5.000000e-01 : f32
    %497 = vector.broadcast %cst_123 : f32 to vector<16x16xf32>
    %498 = arith.mulf %496, %497 : vector<16x16xf32>
    %cst_124 = arith.constant 0.000000e+00 : f32
    %cst_125 = arith.constant 1.000000e+00 : f32
    %499 = vector.broadcast %cst_124 : f32 to vector<16x16xf32>
    %500 = arith.maximumf %499, %498 : vector<16x16xf32>
    %501 = vector.broadcast %cst_125 : f32 to vector<16x16xf32>
    %502 = arith.minimumf %501, %500 : vector<16x16xf32>
    %c1_126 = arith.constant 1 : index
    %c0_127 = arith.constant 0 : index
    %c0_128 = arith.constant 0 : index
    %503 = vector.load %arg3[%c1_126, %c0_127, %c0_128] : memref<4x16x16xf32, #tpu.memory_space<vmem>>, vector<1x16x16xf32>
    %504 = vector.shape_cast %503 : vector<1x16x16xf32> to vector<16x16xf32>
    %505 = vector.shape_cast %502 : vector<16x16xf32> to vector<1x16x16xf32>
    tpu.vector_store %arg3[%c1_126, %c0_127, %c0_128], %505 {strides = array<i32>} : memref<4x16x16xf32, #tpu.memory_space<vmem>>, vector<1x16x16xf32>,
    %c2 = arith.constant 2 : index
    %c0_129 = arith.constant 0 : index
    %c0_130 = arith.constant 0 : index
    %506 = vector.load %arg1[%c2, %c0_129, %c0_130] : memref<4x16x16xf32, #tpu.memory_space<vmem>>, vector<1x16x16xf32>
    %507 = vector.shape_cast %506 : vector<1x16x16xf32> to vector<16x16xf32>
    %c2_131 = arith.constant 2 : index
    %c0_132 = arith.constant 0 : index
    %c0_133 = arith.constant 0 : index
    %508 = vector.load %arg2[%c2_131, %c0_132, %c0_133] : memref<4x16x16xf32, #tpu.memory_space<vmem>>, vector<1x16x16xf32>
    %509 = vector.shape_cast %508 : vector<1x16x16xf32> to vector<16x16xf32>
    %c2_134 = arith.constant 2 : index
    %c1_135 = arith.constant 1 : index
    %c0_136 = arith.constant 0 : index
    %510 = vector.load %arg1[%c2_134, %c1_135, %c0_136] : memref<4x16x16xf32, #tpu.memory_space<vmem>>, vector<1x1x16xf32>
    %511 = vector.shape_cast %510 : vector<1x1x16xf32> to vector<1x16xf32>
    %c2_137 = arith.constant 2 : index
    %c14_138 = arith.constant 14 : index
    %c0_139 = arith.constant 0 : index
    %512 = vector.load %arg1[%c2_137, %c14_138, %c0_139] : memref<4x16x16xf32, #tpu.memory_space<vmem>>, vector<1x1x16xf32>
    %513 = vector.shape_cast %512 : vector<1x1x16xf32> to vector<1x16xf32>
    %c2_140 = arith.constant 2 : index
    %c1_141 = arith.constant 1 : index
    %c0_142 = arith.constant 0 : index
    %514 = vector.load %arg2[%c2_140, %c1_141, %c0_142] : memref<4x16x16xf32, #tpu.memory_space<vmem>>, vector<1x1x16xf32>
    %515 = vector.shape_cast %514 : vector<1x1x16xf32> to vector<1x16xf32>
    %c2_143 = arith.constant 2 : index
    %c14_144 = arith.constant 14 : index
    %c0_145 = arith.constant 0 : index
    %516 = vector.load %arg2[%c2_143, %c14_144, %c0_145] : memref<4x16x16xf32, #tpu.memory_space<vmem>>, vector<1x1x16xf32>
    %517 = vector.shape_cast %516 : vector<1x1x16xf32> to vector<1x16xf32>
    %518 = tpu.concatenate %511, %513 in 0 : vector<1x16xf32>, vector<1x16xf32> -> vector<2x16xf32>
    %519 = tpu.concatenate %515, %517 in 0 : vector<1x16xf32>, vector<1x16xf32> -> vector<2x16xf32>
    %c1_i32_146 = arith.constant 1 : i32
    %520 = tpu.dynamic_rotate %507 by %c1_i32_146 dim 1 : vector<16x16xf32>, i32 -> vector<16x16xf32>
    %c15_i32_147 = arith.constant 15 : i32
    %521 = tpu.dynamic_rotate %507 by %c15_i32_147 dim 1 : vector<16x16xf32>, i32 -> vector<16x16xf32>
    %522 = vector.shape_cast %2 : vector<1x16xi1> to vector<1x16xi1>
    %523 = vector.broadcast %522 : vector<1x16xi1> to vector<16x16xi1>
    %524 = arith.select %523, %521, %520 : vector<16x16xi1>, vector<16x16xf32>
    %525 = vector.shape_cast %4 : vector<1x16xi1> to vector<1x16xi1>
    %526 = vector.broadcast %525 : vector<1x16xi1> to vector<16x16xi1>
    %527 = arith.select %526, %520, %521 : vector<16x16xi1>, vector<16x16xf32>
    %528 = arith.addf %507, %524 : vector<16x16xf32>
    %529 = arith.addf %528, %527 : vector<16x16xf32>
    %c1_i32_148 = arith.constant 1 : i32
    %530 = tpu.dynamic_rotate %518 by %c1_i32_148 dim 1 : vector<2x16xf32>, i32 -> vector<2x16xf32>
    %c15_i32_149 = arith.constant 15 : i32
    %531 = tpu.dynamic_rotate %518 by %c15_i32_149 dim 1 : vector<2x16xf32>, i32 -> vector<2x16xf32>
    %532 = vector.shape_cast %2 : vector<1x16xi1> to vector<1x16xi1>
    %533 = vector.broadcast %532 : vector<1x16xi1> to vector<2x16xi1>
    %534 = arith.select %533, %531, %530 : vector<2x16xi1>, vector<2x16xf32>
    %535 = vector.shape_cast %4 : vector<1x16xi1> to vector<1x16xi1>
    %536 = vector.broadcast %535 : vector<1x16xi1> to vector<2x16xi1>
    %537 = arith.select %536, %530, %531 : vector<2x16xi1>, vector<2x16xf32>
    %538 = arith.addf %518, %534 : vector<2x16xf32>
    %539 = arith.addf %538, %537 : vector<2x16xf32>
    %540 = vector.extract_strided_slice %539 {offsets = [0, 0], sizes = [1, 16], strides = [1, 1]} : vector<2x16xf32> to vector<1x16xf32>
    %541 = vector.extract_strided_slice %539 {offsets = [1, 0], sizes = [1, 16], strides = [1, 1]} : vector<2x16xf32> to vector<1x16xf32>
    %c1_i32_150 = arith.constant 1 : i32
    %542 = tpu.dynamic_rotate %529 by %c1_i32_150 dim 0 : vector<16x16xf32>, i32 -> vector<16x16xf32>
    %c15_i32_151 = arith.constant 15 : i32
    %543 = tpu.dynamic_rotate %529 by %c15_i32_151 dim 0 : vector<16x16xf32>, i32 -> vector<16x16xf32>
    %544 = vector.shape_cast %7 : vector<16x1xi1> to vector<16x1xi1>
    %545 = vector.broadcast %544 : vector<16x1xi1> to vector<16x16xi1>
    %546 = vector.shape_cast %540 : vector<1x16xf32> to vector<1x16xf32>
    %547 = vector.broadcast %546 : vector<1x16xf32> to vector<16x16xf32>
    %548 = arith.select %545, %547, %542 : vector<16x16xi1>, vector<16x16xf32>
    %549 = vector.shape_cast %9 : vector<16x1xi1> to vector<16x1xi1>
    %550 = vector.broadcast %549 : vector<16x1xi1> to vector<16x16xi1>
    %551 = vector.shape_cast %541 : vector<1x16xf32> to vector<1x16xf32>
    %552 = vector.broadcast %551 : vector<1x16xf32> to vector<16x16xf32>
    %553 = arith.select %550, %552, %543 : vector<16x16xi1>, vector<16x16xf32>
    %554 = arith.addf %529, %548 : vector<16x16xf32>
    %555 = arith.addf %554, %553 : vector<16x16xf32>
    %cst_152 = arith.constant 0.111111112 : f32
    %556 = vector.broadcast %cst_152 : f32 to vector<16x16xf32>
    %557 = arith.mulf %555, %556 : vector<16x16xf32>
    %c1_i32_153 = arith.constant 1 : i32
    %558 = tpu.dynamic_rotate %509 by %c1_i32_153 dim 1 : vector<16x16xf32>, i32 -> vector<16x16xf32>
    %c15_i32_154 = arith.constant 15 : i32
    %559 = tpu.dynamic_rotate %509 by %c15_i32_154 dim 1 : vector<16x16xf32>, i32 -> vector<16x16xf32>
    %560 = vector.shape_cast %2 : vector<1x16xi1> to vector<1x16xi1>
    %561 = vector.broadcast %560 : vector<1x16xi1> to vector<16x16xi1>
    %562 = arith.select %561, %559, %558 : vector<16x16xi1>, vector<16x16xf32>
    %563 = vector.shape_cast %4 : vector<1x16xi1> to vector<1x16xi1>
    %564 = vector.broadcast %563 : vector<1x16xi1> to vector<16x16xi1>
    %565 = arith.select %564, %558, %559 : vector<16x16xi1>, vector<16x16xf32>
    %566 = arith.addf %509, %562 : vector<16x16xf32>
    %567 = arith.addf %566, %565 : vector<16x16xf32>
    %c1_i32_155 = arith.constant 1 : i32
    %568 = tpu.dynamic_rotate %519 by %c1_i32_155 dim 1 : vector<2x16xf32>, i32 -> vector<2x16xf32>
    %c15_i32_156 = arith.constant 15 : i32
    %569 = tpu.dynamic_rotate %519 by %c15_i32_156 dim 1 : vector<2x16xf32>, i32 -> vector<2x16xf32>
    %570 = vector.shape_cast %2 : vector<1x16xi1> to vector<1x16xi1>
    %571 = vector.broadcast %570 : vector<1x16xi1> to vector<2x16xi1>
    %572 = arith.select %571, %569, %568 : vector<2x16xi1>, vector<2x16xf32>
    %573 = vector.shape_cast %4 : vector<1x16xi1> to vector<1x16xi1>
    %574 = vector.broadcast %573 : vector<1x16xi1> to vector<2x16xi1>
    %575 = arith.select %574, %568, %569 : vector<2x16xi1>, vector<2x16xf32>
    %576 = arith.addf %519, %572 : vector<2x16xf32>
    %577 = arith.addf %576, %575 : vector<2x16xf32>
    %578 = vector.extract_strided_slice %577 {offsets = [0, 0], sizes = [1, 16], strides = [1, 1]} : vector<2x16xf32> to vector<1x16xf32>
    %579 = vector.extract_strided_slice %577 {offsets = [1, 0], sizes = [1, 16], strides = [1, 1]} : vector<2x16xf32> to vector<1x16xf32>
    %c1_i32_157 = arith.constant 1 : i32
    %580 = tpu.dynamic_rotate %567 by %c1_i32_157 dim 0 : vector<16x16xf32>, i32 -> vector<16x16xf32>
    %c15_i32_158 = arith.constant 15 : i32
    %581 = tpu.dynamic_rotate %567 by %c15_i32_158 dim 0 : vector<16x16xf32>, i32 -> vector<16x16xf32>
    %582 = vector.shape_cast %7 : vector<16x1xi1> to vector<16x1xi1>
    %583 = vector.broadcast %582 : vector<16x1xi1> to vector<16x16xi1>
    %584 = vector.shape_cast %578 : vector<1x16xf32> to vector<1x16xf32>
    %585 = vector.broadcast %584 : vector<1x16xf32> to vector<16x16xf32>
    %586 = arith.select %583, %585, %580 : vector<16x16xi1>, vector<16x16xf32>
    %587 = vector.shape_cast %9 : vector<16x1xi1> to vector<16x1xi1>
    %588 = vector.broadcast %587 : vector<16x1xi1> to vector<16x16xi1>
    %589 = vector.shape_cast %579 : vector<1x16xf32> to vector<1x16xf32>
    %590 = vector.broadcast %589 : vector<1x16xf32> to vector<16x16xf32>
    %591 = arith.select %588, %590, %581 : vector<16x16xi1>, vector<16x16xf32>
    %592 = arith.addf %567, %586 : vector<16x16xf32>
    %593 = arith.addf %592, %591 : vector<16x16xf32>
    %cst_159 = arith.constant 0.111111112 : f32
    %594 = vector.broadcast %cst_159 : f32 to vector<16x16xf32>
    %595 = arith.mulf %593, %594 : vector<16x16xf32>
    %596 = arith.mulf %507, %507 : vector<16x16xf32>
    %597 = arith.mulf %518, %518 : vector<2x16xf32>
    %c1_i32_160 = arith.constant 1 : i32
    %598 = tpu.dynamic_rotate %596 by %c1_i32_160 dim 1 : vector<16x16xf32>, i32 -> vector<16x16xf32>
    %c15_i32_161 = arith.constant 15 : i32
    %599 = tpu.dynamic_rotate %596 by %c15_i32_161 dim 1 : vector<16x16xf32>, i32 -> vector<16x16xf32>
    %600 = vector.shape_cast %2 : vector<1x16xi1> to vector<1x16xi1>
    %601 = vector.broadcast %600 : vector<1x16xi1> to vector<16x16xi1>
    %602 = arith.select %601, %599, %598 : vector<16x16xi1>, vector<16x16xf32>
    %603 = vector.shape_cast %4 : vector<1x16xi1> to vector<1x16xi1>
    %604 = vector.broadcast %603 : vector<1x16xi1> to vector<16x16xi1>
    %605 = arith.select %604, %598, %599 : vector<16x16xi1>, vector<16x16xf32>
    %606 = arith.addf %596, %602 : vector<16x16xf32>
    %607 = arith.addf %606, %605 : vector<16x16xf32>
    %c1_i32_162 = arith.constant 1 : i32
    %608 = tpu.dynamic_rotate %597 by %c1_i32_162 dim 1 : vector<2x16xf32>, i32 -> vector<2x16xf32>
    %c15_i32_163 = arith.constant 15 : i32
    %609 = tpu.dynamic_rotate %597 by %c15_i32_163 dim 1 : vector<2x16xf32>, i32 -> vector<2x16xf32>
    %610 = vector.shape_cast %2 : vector<1x16xi1> to vector<1x16xi1>
    %611 = vector.broadcast %610 : vector<1x16xi1> to vector<2x16xi1>
    %612 = arith.select %611, %609, %608 : vector<2x16xi1>, vector<2x16xf32>
    %613 = vector.shape_cast %4 : vector<1x16xi1> to vector<1x16xi1>
    %614 = vector.broadcast %613 : vector<1x16xi1> to vector<2x16xi1>
    %615 = arith.select %614, %608, %609 : vector<2x16xi1>, vector<2x16xf32>
    %616 = arith.addf %597, %612 : vector<2x16xf32>
    %617 = arith.addf %616, %615 : vector<2x16xf32>
    %618 = vector.extract_strided_slice %617 {offsets = [0, 0], sizes = [1, 16], strides = [1, 1]} : vector<2x16xf32> to vector<1x16xf32>
    %619 = vector.extract_strided_slice %617 {offsets = [1, 0], sizes = [1, 16], strides = [1, 1]} : vector<2x16xf32> to vector<1x16xf32>
    %c1_i32_164 = arith.constant 1 : i32
    %620 = tpu.dynamic_rotate %607 by %c1_i32_164 dim 0 : vector<16x16xf32>, i32 -> vector<16x16xf32>
    %c15_i32_165 = arith.constant 15 : i32
    %621 = tpu.dynamic_rotate %607 by %c15_i32_165 dim 0 : vector<16x16xf32>, i32 -> vector<16x16xf32>
    %622 = vector.shape_cast %7 : vector<16x1xi1> to vector<16x1xi1>
    %623 = vector.broadcast %622 : vector<16x1xi1> to vector<16x16xi1>
    %624 = vector.shape_cast %618 : vector<1x16xf32> to vector<1x16xf32>
    %625 = vector.broadcast %624 : vector<1x16xf32> to vector<16x16xf32>
    %626 = arith.select %623, %625, %620 : vector<16x16xi1>, vector<16x16xf32>
    %627 = vector.shape_cast %9 : vector<16x1xi1> to vector<16x1xi1>
    %628 = vector.broadcast %627 : vector<16x1xi1> to vector<16x16xi1>
    %629 = vector.shape_cast %619 : vector<1x16xf32> to vector<1x16xf32>
    %630 = vector.broadcast %629 : vector<1x16xf32> to vector<16x16xf32>
    %631 = arith.select %628, %630, %621 : vector<16x16xi1>, vector<16x16xf32>
    %632 = arith.addf %607, %626 : vector<16x16xf32>
    %633 = arith.addf %632, %631 : vector<16x16xf32>
    %cst_166 = arith.constant 0.111111112 : f32
    %634 = vector.broadcast %cst_166 : f32 to vector<16x16xf32>
    %635 = arith.mulf %633, %634 : vector<16x16xf32>
    %636 = arith.mulf %557, %557 : vector<16x16xf32>
    %637 = arith.subf %635, %636 : vector<16x16xf32>
    %638 = arith.mulf %509, %509 : vector<16x16xf32>
    %639 = arith.mulf %519, %519 : vector<2x16xf32>
    %c1_i32_167 = arith.constant 1 : i32
    %640 = tpu.dynamic_rotate %638 by %c1_i32_167 dim 1 : vector<16x16xf32>, i32 -> vector<16x16xf32>
    %c15_i32_168 = arith.constant 15 : i32
    %641 = tpu.dynamic_rotate %638 by %c15_i32_168 dim 1 : vector<16x16xf32>, i32 -> vector<16x16xf32>
    %642 = vector.shape_cast %2 : vector<1x16xi1> to vector<1x16xi1>
    %643 = vector.broadcast %642 : vector<1x16xi1> to vector<16x16xi1>
    %644 = arith.select %643, %641, %640 : vector<16x16xi1>, vector<16x16xf32>
    %645 = vector.shape_cast %4 : vector<1x16xi1> to vector<1x16xi1>
    %646 = vector.broadcast %645 : vector<1x16xi1> to vector<16x16xi1>
    %647 = arith.select %646, %640, %641 : vector<16x16xi1>, vector<16x16xf32>
    %648 = arith.addf %638, %644 : vector<16x16xf32>
    %649 = arith.addf %648, %647 : vector<16x16xf32>
    %c1_i32_169 = arith.constant 1 : i32
    %650 = tpu.dynamic_rotate %639 by %c1_i32_169 dim 1 : vector<2x16xf32>, i32 -> vector<2x16xf32>
    %c15_i32_170 = arith.constant 15 : i32
    %651 = tpu.dynamic_rotate %639 by %c15_i32_170 dim 1 : vector<2x16xf32>, i32 -> vector<2x16xf32>
    %652 = vector.shape_cast %2 : vector<1x16xi1> to vector<1x16xi1>
    %653 = vector.broadcast %652 : vector<1x16xi1> to vector<2x16xi1>
    %654 = arith.select %653, %651, %650 : vector<2x16xi1>, vector<2x16xf32>
    %655 = vector.shape_cast %4 : vector<1x16xi1> to vector<1x16xi1>
    %656 = vector.broadcast %655 : vector<1x16xi1> to vector<2x16xi1>
    %657 = arith.select %656, %650, %651 : vector<2x16xi1>, vector<2x16xf32>
    %658 = arith.addf %639, %654 : vector<2x16xf32>
    %659 = arith.addf %658, %657 : vector<2x16xf32>
    %660 = vector.extract_strided_slice %659 {offsets = [0, 0], sizes = [1, 16], strides = [1, 1]} : vector<2x16xf32> to vector<1x16xf32>
    %661 = vector.extract_strided_slice %659 {offsets = [1, 0], sizes = [1, 16], strides = [1, 1]} : vector<2x16xf32> to vector<1x16xf32>
    %c1_i32_171 = arith.constant 1 : i32
    %662 = tpu.dynamic_rotate %649 by %c1_i32_171 dim 0 : vector<16x16xf32>, i32 -> vector<16x16xf32>
    %c15_i32_172 = arith.constant 15 : i32
    %663 = tpu.dynamic_rotate %649 by %c15_i32_172 dim 0 : vector<16x16xf32>, i32 -> vector<16x16xf32>
    %664 = vector.shape_cast %7 : vector<16x1xi1> to vector<16x1xi1>
    %665 = vector.broadcast %664 : vector<16x1xi1> to vector<16x16xi1>
    %666 = vector.shape_cast %660 : vector<1x16xf32> to vector<1x16xf32>
    %667 = vector.broadcast %666 : vector<1x16xf32> to vector<16x16xf32>
    %668 = arith.select %665, %667, %662 : vector<16x16xi1>, vector<16x16xf32>
    %669 = vector.shape_cast %9 : vector<16x1xi1> to vector<16x1xi1>
    %670 = vector.broadcast %669 : vector<16x1xi1> to vector<16x16xi1>
    %671 = vector.shape_cast %661 : vector<1x16xf32> to vector<1x16xf32>
    %672 = vector.broadcast %671 : vector<1x16xf32> to vector<16x16xf32>
    %673 = arith.select %670, %672, %663 : vector<16x16xi1>, vector<16x16xf32>
    %674 = arith.addf %649, %668 : vector<16x16xf32>
    %675 = arith.addf %674, %673 : vector<16x16xf32>
    %cst_173 = arith.constant 0.111111112 : f32
    %676 = vector.broadcast %cst_173 : f32 to vector<16x16xf32>
    %677 = arith.mulf %675, %676 : vector<16x16xf32>
    %678 = arith.mulf %595, %595 : vector<16x16xf32>
    %679 = arith.subf %677, %678 : vector<16x16xf32>
    %680 = arith.mulf %507, %509 : vector<16x16xf32>
    %681 = arith.mulf %518, %519 : vector<2x16xf32>
    %c1_i32_174 = arith.constant 1 : i32
    %682 = tpu.dynamic_rotate %680 by %c1_i32_174 dim 1 : vector<16x16xf32>, i32 -> vector<16x16xf32>
    %c15_i32_175 = arith.constant 15 : i32
    %683 = tpu.dynamic_rotate %680 by %c15_i32_175 dim 1 : vector<16x16xf32>, i32 -> vector<16x16xf32>
    %684 = vector.shape_cast %2 : vector<1x16xi1> to vector<1x16xi1>
    %685 = vector.broadcast %684 : vector<1x16xi1> to vector<16x16xi1>
    %686 = arith.select %685, %683, %682 : vector<16x16xi1>, vector<16x16xf32>
    %687 = vector.shape_cast %4 : vector<1x16xi1> to vector<1x16xi1>
    %688 = vector.broadcast %687 : vector<1x16xi1> to vector<16x16xi1>
    %689 = arith.select %688, %682, %683 : vector<16x16xi1>, vector<16x16xf32>
    %690 = arith.addf %680, %686 : vector<16x16xf32>
    %691 = arith.addf %690, %689 : vector<16x16xf32>
    %c1_i32_176 = arith.constant 1 : i32
    %692 = tpu.dynamic_rotate %681 by %c1_i32_176 dim 1 : vector<2x16xf32>, i32 -> vector<2x16xf32>
    %c15_i32_177 = arith.constant 15 : i32
    %693 = tpu.dynamic_rotate %681 by %c15_i32_177 dim 1 : vector<2x16xf32>, i32 -> vector<2x16xf32>
    %694 = vector.shape_cast %2 : vector<1x16xi1> to vector<1x16xi1>
    %695 = vector.broadcast %694 : vector<1x16xi1> to vector<2x16xi1>
    %696 = arith.select %695, %693, %692 : vector<2x16xi1>, vector<2x16xf32>
    %697 = vector.shape_cast %4 : vector<1x16xi1> to vector<1x16xi1>
    %698 = vector.broadcast %697 : vector<1x16xi1> to vector<2x16xi1>
    %699 = arith.select %698, %692, %693 : vector<2x16xi1>, vector<2x16xf32>
    %700 = arith.addf %681, %696 : vector<2x16xf32>
    %701 = arith.addf %700, %699 : vector<2x16xf32>
    %702 = vector.extract_strided_slice %701 {offsets = [0, 0], sizes = [1, 16], strides = [1, 1]} : vector<2x16xf32> to vector<1x16xf32>
    %703 = vector.extract_strided_slice %701 {offsets = [1, 0], sizes = [1, 16], strides = [1, 1]} : vector<2x16xf32> to vector<1x16xf32>
    %c1_i32_178 = arith.constant 1 : i32
    %704 = tpu.dynamic_rotate %691 by %c1_i32_178 dim 0 : vector<16x16xf32>, i32 -> vector<16x16xf32>
    %c15_i32_179 = arith.constant 15 : i32
    %705 = tpu.dynamic_rotate %691 by %c15_i32_179 dim 0 : vector<16x16xf32>, i32 -> vector<16x16xf32>
    %706 = vector.shape_cast %7 : vector<16x1xi1> to vector<16x1xi1>
    %707 = vector.broadcast %706 : vector<16x1xi1> to vector<16x16xi1>
    %708 = vector.shape_cast %702 : vector<1x16xf32> to vector<1x16xf32>
    %709 = vector.broadcast %708 : vector<1x16xf32> to vector<16x16xf32>
    %710 = arith.select %707, %709, %704 : vector<16x16xi1>, vector<16x16xf32>
    %711 = vector.shape_cast %9 : vector<16x1xi1> to vector<16x1xi1>
    %712 = vector.broadcast %711 : vector<16x1xi1> to vector<16x16xi1>
    %713 = vector.shape_cast %703 : vector<1x16xf32> to vector<1x16xf32>
    %714 = vector.broadcast %713 : vector<1x16xf32> to vector<16x16xf32>
    %715 = arith.select %712, %714, %705 : vector<16x16xi1>, vector<16x16xf32>
    %716 = arith.addf %691, %710 : vector<16x16xf32>
    %717 = arith.addf %716, %715 : vector<16x16xf32>
    %cst_180 = arith.constant 0.111111112 : f32
    %718 = vector.broadcast %cst_180 : f32 to vector<16x16xf32>
    %719 = arith.mulf %717, %718 : vector<16x16xf32>
    %720 = arith.mulf %557, %595 : vector<16x16xf32>
    %721 = arith.subf %719, %720 : vector<16x16xf32>
    %cst_181 = arith.constant 2.000000e+00 : f32
    %722 = vector.broadcast %cst_181 : f32 to vector<16x16xf32>
    %723 = arith.mulf %722, %557 : vector<16x16xf32>
    %724 = arith.mulf %723, %595 : vector<16x16xf32>
    %cst_182 = arith.constant 9.99999974E-5 : f32
    %725 = vector.broadcast %cst_182 : f32 to vector<16x16xf32>
    %726 = arith.addf %724, %725 : vector<16x16xf32>
    %cst_183 = arith.constant 2.000000e+00 : f32
    %727 = vector.broadcast %cst_183 : f32 to vector<16x16xf32>
    %728 = arith.mulf %727, %721 : vector<16x16xf32>
    %cst_184 = arith.constant 8.99999984E-4 : f32
    %729 = vector.broadcast %cst_184 : f32 to vector<16x16xf32>
    %730 = arith.addf %728, %729 : vector<16x16xf32>
    %731 = arith.mulf %726, %730 : vector<16x16xf32>
    %732 = arith.mulf %557, %557 : vector<16x16xf32>
    %733 = arith.mulf %595, %595 : vector<16x16xf32>
    %734 = arith.addf %732, %733 : vector<16x16xf32>
    %cst_185 = arith.constant 9.99999974E-5 : f32
    %735 = vector.broadcast %cst_185 : f32 to vector<16x16xf32>
    %736 = arith.addf %734, %735 : vector<16x16xf32>
    %737 = arith.addf %637, %679 : vector<16x16xf32>
    %cst_186 = arith.constant 8.99999984E-4 : f32
    %738 = vector.broadcast %cst_186 : f32 to vector<16x16xf32>
    %739 = arith.addf %737, %738 : vector<16x16xf32>
    %740 = arith.mulf %736, %739 : vector<16x16xf32>
    %741 = tpu.reciprocal %740 {approx = true} : vector<16x16xf32> -> vector<16x16xf32>
    %742 = arith.mulf %731, %741 : vector<16x16xf32>
    %cst_187 = arith.constant 1.000000e+00 : f32
    %743 = vector.broadcast %cst_187 : f32 to vector<16x16xf32>
    %744 = arith.subf %743, %742 : vector<16x16xf32>
    %cst_188 = arith.constant 5.000000e-01 : f32
    %745 = vector.broadcast %cst_188 : f32 to vector<16x16xf32>
    %746 = arith.mulf %744, %745 : vector<16x16xf32>
    %cst_189 = arith.constant 0.000000e+00 : f32
    %cst_190 = arith.constant 1.000000e+00 : f32
    %747 = vector.broadcast %cst_189 : f32 to vector<16x16xf32>
    %748 = arith.maximumf %747, %746 : vector<16x16xf32>
    %749 = vector.broadcast %cst_190 : f32 to vector<16x16xf32>
    %750 = arith.minimumf %749, %748 : vector<16x16xf32>
    %c2_191 = arith.constant 2 : index
    %c0_192 = arith.constant 0 : index
    %c0_193 = arith.constant 0 : index
    %751 = vector.load %arg3[%c2_191, %c0_192, %c0_193] : memref<4x16x16xf32, #tpu.memory_space<vmem>>, vector<1x16x16xf32>
    %752 = vector.shape_cast %751 : vector<1x16x16xf32> to vector<16x16xf32>
    %753 = vector.shape_cast %750 : vector<16x16xf32> to vector<1x16x16xf32>
    tpu.vector_store %arg3[%c2_191, %c0_192, %c0_193], %753 {strides = array<i32>} : memref<4x16x16xf32, #tpu.memory_space<vmem>>, vector<1x16x16xf32>,
    %c3 = arith.constant 3 : index
    %c0_194 = arith.constant 0 : index
    %c0_195 = arith.constant 0 : index
    %754 = vector.load %arg1[%c3, %c0_194, %c0_195] : memref<4x16x16xf32, #tpu.memory_space<vmem>>, vector<1x16x16xf32>
    %755 = vector.shape_cast %754 : vector<1x16x16xf32> to vector<16x16xf32>
    %c3_196 = arith.constant 3 : index
    %c0_197 = arith.constant 0 : index
    %c0_198 = arith.constant 0 : index
    %756 = vector.load %arg2[%c3_196, %c0_197, %c0_198] : memref<4x16x16xf32, #tpu.memory_space<vmem>>, vector<1x16x16xf32>
    %757 = vector.shape_cast %756 : vector<1x16x16xf32> to vector<16x16xf32>
    %c3_199 = arith.constant 3 : index
    %c1_200 = arith.constant 1 : index
    %c0_201 = arith.constant 0 : index
    %758 = vector.load %arg1[%c3_199, %c1_200, %c0_201] : memref<4x16x16xf32, #tpu.memory_space<vmem>>, vector<1x1x16xf32>
    %759 = vector.shape_cast %758 : vector<1x1x16xf32> to vector<1x16xf32>
    %c3_202 = arith.constant 3 : index
    %c14_203 = arith.constant 14 : index
    %c0_204 = arith.constant 0 : index
    %760 = vector.load %arg1[%c3_202, %c14_203, %c0_204] : memref<4x16x16xf32, #tpu.memory_space<vmem>>, vector<1x1x16xf32>
    %761 = vector.shape_cast %760 : vector<1x1x16xf32> to vector<1x16xf32>
    %c3_205 = arith.constant 3 : index
    %c1_206 = arith.constant 1 : index
    %c0_207 = arith.constant 0 : index
    %762 = vector.load %arg2[%c3_205, %c1_206, %c0_207] : memref<4x16x16xf32, #tpu.memory_space<vmem>>, vector<1x1x16xf32>
    %763 = vector.shape_cast %762 : vector<1x1x16xf32> to vector<1x16xf32>
    %c3_208 = arith.constant 3 : index
    %c14_209 = arith.constant 14 : index
    %c0_210 = arith.constant 0 : index
    %764 = vector.load %arg2[%c3_208, %c14_209, %c0_210] : memref<4x16x16xf32, #tpu.memory_space<vmem>>, vector<1x1x16xf32>
    %765 = vector.shape_cast %764 : vector<1x1x16xf32> to vector<1x16xf32>
    %766 = tpu.concatenate %759, %761 in 0 : vector<1x16xf32>, vector<1x16xf32> -> vector<2x16xf32>
    %767 = tpu.concatenate %763, %765 in 0 : vector<1x16xf32>, vector<1x16xf32> -> vector<2x16xf32>
    %c1_i32_211 = arith.constant 1 : i32
    %768 = tpu.dynamic_rotate %755 by %c1_i32_211 dim 1 : vector<16x16xf32>, i32 -> vector<16x16xf32>
    %c15_i32_212 = arith.constant 15 : i32
    %769 = tpu.dynamic_rotate %755 by %c15_i32_212 dim 1 : vector<16x16xf32>, i32 -> vector<16x16xf32>
    %770 = vector.shape_cast %2 : vector<1x16xi1> to vector<1x16xi1>
    %771 = vector.broadcast %770 : vector<1x16xi1> to vector<16x16xi1>
    %772 = arith.select %771, %769, %768 : vector<16x16xi1>, vector<16x16xf32>
    %773 = vector.shape_cast %4 : vector<1x16xi1> to vector<1x16xi1>
    %774 = vector.broadcast %773 : vector<1x16xi1> to vector<16x16xi1>
    %775 = arith.select %774, %768, %769 : vector<16x16xi1>, vector<16x16xf32>
    %776 = arith.addf %755, %772 : vector<16x16xf32>
    %777 = arith.addf %776, %775 : vector<16x16xf32>
    %c1_i32_213 = arith.constant 1 : i32
    %778 = tpu.dynamic_rotate %766 by %c1_i32_213 dim 1 : vector<2x16xf32>, i32 -> vector<2x16xf32>
    %c15_i32_214 = arith.constant 15 : i32
    %779 = tpu.dynamic_rotate %766 by %c15_i32_214 dim 1 : vector<2x16xf32>, i32 -> vector<2x16xf32>
    %780 = vector.shape_cast %2 : vector<1x16xi1> to vector<1x16xi1>
    %781 = vector.broadcast %780 : vector<1x16xi1> to vector<2x16xi1>
    %782 = arith.select %781, %779, %778 : vector<2x16xi1>, vector<2x16xf32>
    %783 = vector.shape_cast %4 : vector<1x16xi1> to vector<1x16xi1>
    %784 = vector.broadcast %783 : vector<1x16xi1> to vector<2x16xi1>
    %785 = arith.select %784, %778, %779 : vector<2x16xi1>, vector<2x16xf32>
    %786 = arith.addf %766, %782 : vector<2x16xf32>
    %787 = arith.addf %786, %785 : vector<2x16xf32>
    %788 = vector.extract_strided_slice %787 {offsets = [0, 0], sizes = [1, 16], strides = [1, 1]} : vector<2x16xf32> to vector<1x16xf32>
    %789 = vector.extract_strided_slice %787 {offsets = [1, 0], sizes = [1, 16], strides = [1, 1]} : vector<2x16xf32> to vector<1x16xf32>
    %c1_i32_215 = arith.constant 1 : i32
    %790 = tpu.dynamic_rotate %777 by %c1_i32_215 dim 0 : vector<16x16xf32>, i32 -> vector<16x16xf32>
    %c15_i32_216 = arith.constant 15 : i32
    %791 = tpu.dynamic_rotate %777 by %c15_i32_216 dim 0 : vector<16x16xf32>, i32 -> vector<16x16xf32>
    %792 = vector.shape_cast %7 : vector<16x1xi1> to vector<16x1xi1>
    %793 = vector.broadcast %792 : vector<16x1xi1> to vector<16x16xi1>
    %794 = vector.shape_cast %788 : vector<1x16xf32> to vector<1x16xf32>
    %795 = vector.broadcast %794 : vector<1x16xf32> to vector<16x16xf32>
    %796 = arith.select %793, %795, %790 : vector<16x16xi1>, vector<16x16xf32>
    %797 = vector.shape_cast %9 : vector<16x1xi1> to vector<16x1xi1>
    %798 = vector.broadcast %797 : vector<16x1xi1> to vector<16x16xi1>
    %799 = vector.shape_cast %789 : vector<1x16xf32> to vector<1x16xf32>
    %800 = vector.broadcast %799 : vector<1x16xf32> to vector<16x16xf32>
    %801 = arith.select %798, %800, %791 : vector<16x16xi1>, vector<16x16xf32>
    %802 = arith.addf %777, %796 : vector<16x16xf32>
    %803 = arith.addf %802, %801 : vector<16x16xf32>
    %cst_217 = arith.constant 0.111111112 : f32
    %804 = vector.broadcast %cst_217 : f32 to vector<16x16xf32>
    %805 = arith.mulf %803, %804 : vector<16x16xf32>
    %c1_i32_218 = arith.constant 1 : i32
    %806 = tpu.dynamic_rotate %757 by %c1_i32_218 dim 1 : vector<16x16xf32>, i32 -> vector<16x16xf32>
    %c15_i32_219 = arith.constant 15 : i32
    %807 = tpu.dynamic_rotate %757 by %c15_i32_219 dim 1 : vector<16x16xf32>, i32 -> vector<16x16xf32>
    %808 = vector.shape_cast %2 : vector<1x16xi1> to vector<1x16xi1>
    %809 = vector.broadcast %808 : vector<1x16xi1> to vector<16x16xi1>
    %810 = arith.select %809, %807, %806 : vector<16x16xi1>, vector<16x16xf32>
    %811 = vector.shape_cast %4 : vector<1x16xi1> to vector<1x16xi1>
    %812 = vector.broadcast %811 : vector<1x16xi1> to vector<16x16xi1>
    %813 = arith.select %812, %806, %807 : vector<16x16xi1>, vector<16x16xf32>
    %814 = arith.addf %757, %810 : vector<16x16xf32>
    %815 = arith.addf %814, %813 : vector<16x16xf32>
    %c1_i32_220 = arith.constant 1 : i32
    %816 = tpu.dynamic_rotate %767 by %c1_i32_220 dim 1 : vector<2x16xf32>, i32 -> vector<2x16xf32>
    %c15_i32_221 = arith.constant 15 : i32
    %817 = tpu.dynamic_rotate %767 by %c15_i32_221 dim 1 : vector<2x16xf32>, i32 -> vector<2x16xf32>
    %818 = vector.shape_cast %2 : vector<1x16xi1> to vector<1x16xi1>
    %819 = vector.broadcast %818 : vector<1x16xi1> to vector<2x16xi1>
    %820 = arith.select %819, %817, %816 : vector<2x16xi1>, vector<2x16xf32>
    %821 = vector.shape_cast %4 : vector<1x16xi1> to vector<1x16xi1>
    %822 = vector.broadcast %821 : vector<1x16xi1> to vector<2x16xi1>
    %823 = arith.select %822, %816, %817 : vector<2x16xi1>, vector<2x16xf32>
    %824 = arith.addf %767, %820 : vector<2x16xf32>
    %825 = arith.addf %824, %823 : vector<2x16xf32>
    %826 = vector.extract_strided_slice %825 {offsets = [0, 0], sizes = [1, 16], strides = [1, 1]} : vector<2x16xf32> to vector<1x16xf32>
    %827 = vector.extract_strided_slice %825 {offsets = [1, 0], sizes = [1, 16], strides = [1, 1]} : vector<2x16xf32> to vector<1x16xf32>
    %c1_i32_222 = arith.constant 1 : i32
    %828 = tpu.dynamic_rotate %815 by %c1_i32_222 dim 0 : vector<16x16xf32>, i32 -> vector<16x16xf32>
    %c15_i32_223 = arith.constant 15 : i32
    %829 = tpu.dynamic_rotate %815 by %c15_i32_223 dim 0 : vector<16x16xf32>, i32 -> vector<16x16xf32>
    %830 = vector.shape_cast %7 : vector<16x1xi1> to vector<16x1xi1>
    %831 = vector.broadcast %830 : vector<16x1xi1> to vector<16x16xi1>
    %832 = vector.shape_cast %826 : vector<1x16xf32> to vector<1x16xf32>
    %833 = vector.broadcast %832 : vector<1x16xf32> to vector<16x16xf32>
    %834 = arith.select %831, %833, %828 : vector<16x16xi1>, vector<16x16xf32>
    %835 = vector.shape_cast %9 : vector<16x1xi1> to vector<16x1xi1>
    %836 = vector.broadcast %835 : vector<16x1xi1> to vector<16x16xi1>
    %837 = vector.shape_cast %827 : vector<1x16xf32> to vector<1x16xf32>
    %838 = vector.broadcast %837 : vector<1x16xf32> to vector<16x16xf32>
    %839 = arith.select %836, %838, %829 : vector<16x16xi1>, vector<16x16xf32>
    %840 = arith.addf %815, %834 : vector<16x16xf32>
    %841 = arith.addf %840, %839 : vector<16x16xf32>
    %cst_224 = arith.constant 0.111111112 : f32
    %842 = vector.broadcast %cst_224 : f32 to vector<16x16xf32>
    %843 = arith.mulf %841, %842 : vector<16x16xf32>
    %844 = arith.mulf %755, %755 : vector<16x16xf32>
    %845 = arith.mulf %766, %766 : vector<2x16xf32>
    %c1_i32_225 = arith.constant 1 : i32
    %846 = tpu.dynamic_rotate %844 by %c1_i32_225 dim 1 : vector<16x16xf32>, i32 -> vector<16x16xf32>
    %c15_i32_226 = arith.constant 15 : i32
    %847 = tpu.dynamic_rotate %844 by %c15_i32_226 dim 1 : vector<16x16xf32>, i32 -> vector<16x16xf32>
    %848 = vector.shape_cast %2 : vector<1x16xi1> to vector<1x16xi1>
    %849 = vector.broadcast %848 : vector<1x16xi1> to vector<16x16xi1>
    %850 = arith.select %849, %847, %846 : vector<16x16xi1>, vector<16x16xf32>
    %851 = vector.shape_cast %4 : vector<1x16xi1> to vector<1x16xi1>
    %852 = vector.broadcast %851 : vector<1x16xi1> to vector<16x16xi1>
    %853 = arith.select %852, %846, %847 : vector<16x16xi1>, vector<16x16xf32>
    %854 = arith.addf %844, %850 : vector<16x16xf32>
    %855 = arith.addf %854, %853 : vector<16x16xf32>
    %c1_i32_227 = arith.constant 1 : i32
    %856 = tpu.dynamic_rotate %845 by %c1_i32_227 dim 1 : vector<2x16xf32>, i32 -> vector<2x16xf32>
    %c15_i32_228 = arith.constant 15 : i32
    %857 = tpu.dynamic_rotate %845 by %c15_i32_228 dim 1 : vector<2x16xf32>, i32 -> vector<2x16xf32>
    %858 = vector.shape_cast %2 : vector<1x16xi1> to vector<1x16xi1>
    %859 = vector.broadcast %858 : vector<1x16xi1> to vector<2x16xi1>
    %860 = arith.select %859, %857, %856 : vector<2x16xi1>, vector<2x16xf32>
    %861 = vector.shape_cast %4 : vector<1x16xi1> to vector<1x16xi1>
    %862 = vector.broadcast %861 : vector<1x16xi1> to vector<2x16xi1>
    %863 = arith.select %862, %856, %857 : vector<2x16xi1>, vector<2x16xf32>
    %864 = arith.addf %845, %860 : vector<2x16xf32>
    %865 = arith.addf %864, %863 : vector<2x16xf32>
    %866 = vector.extract_strided_slice %865 {offsets = [0, 0], sizes = [1, 16], strides = [1, 1]} : vector<2x16xf32> to vector<1x16xf32>
    %867 = vector.extract_strided_slice %865 {offsets = [1, 0], sizes = [1, 16], strides = [1, 1]} : vector<2x16xf32> to vector<1x16xf32>
    %c1_i32_229 = arith.constant 1 : i32
    %868 = tpu.dynamic_rotate %855 by %c1_i32_229 dim 0 : vector<16x16xf32>, i32 -> vector<16x16xf32>
    %c15_i32_230 = arith.constant 15 : i32
    %869 = tpu.dynamic_rotate %855 by %c15_i32_230 dim 0 : vector<16x16xf32>, i32 -> vector<16x16xf32>
    %870 = vector.shape_cast %7 : vector<16x1xi1> to vector<16x1xi1>
    %871 = vector.broadcast %870 : vector<16x1xi1> to vector<16x16xi1>
    %872 = vector.shape_cast %866 : vector<1x16xf32> to vector<1x16xf32>
    %873 = vector.broadcast %872 : vector<1x16xf32> to vector<16x16xf32>
    %874 = arith.select %871, %873, %868 : vector<16x16xi1>, vector<16x16xf32>
    %875 = vector.shape_cast %9 : vector<16x1xi1> to vector<16x1xi1>
    %876 = vector.broadcast %875 : vector<16x1xi1> to vector<16x16xi1>
    %877 = vector.shape_cast %867 : vector<1x16xf32> to vector<1x16xf32>
    %878 = vector.broadcast %877 : vector<1x16xf32> to vector<16x16xf32>
    %879 = arith.select %876, %878, %869 : vector<16x16xi1>, vector<16x16xf32>
    %880 = arith.addf %855, %874 : vector<16x16xf32>
    %881 = arith.addf %880, %879 : vector<16x16xf32>
    %cst_231 = arith.constant 0.111111112 : f32
    %882 = vector.broadcast %cst_231 : f32 to vector<16x16xf32>
    %883 = arith.mulf %881, %882 : vector<16x16xf32>
    %884 = arith.mulf %805, %805 : vector<16x16xf32>
    %885 = arith.subf %883, %884 : vector<16x16xf32>
    %886 = arith.mulf %757, %757 : vector<16x16xf32>
    %887 = arith.mulf %767, %767 : vector<2x16xf32>
    %c1_i32_232 = arith.constant 1 : i32
    %888 = tpu.dynamic_rotate %886 by %c1_i32_232 dim 1 : vector<16x16xf32>, i32 -> vector<16x16xf32>
    %c15_i32_233 = arith.constant 15 : i32
    %889 = tpu.dynamic_rotate %886 by %c15_i32_233 dim 1 : vector<16x16xf32>, i32 -> vector<16x16xf32>
    %890 = vector.shape_cast %2 : vector<1x16xi1> to vector<1x16xi1>
    %891 = vector.broadcast %890 : vector<1x16xi1> to vector<16x16xi1>
    %892 = arith.select %891, %889, %888 : vector<16x16xi1>, vector<16x16xf32>
    %893 = vector.shape_cast %4 : vector<1x16xi1> to vector<1x16xi1>
    %894 = vector.broadcast %893 : vector<1x16xi1> to vector<16x16xi1>
    %895 = arith.select %894, %888, %889 : vector<16x16xi1>, vector<16x16xf32>
    %896 = arith.addf %886, %892 : vector<16x16xf32>
    %897 = arith.addf %896, %895 : vector<16x16xf32>
    %c1_i32_234 = arith.constant 1 : i32
    %898 = tpu.dynamic_rotate %887 by %c1_i32_234 dim 1 : vector<2x16xf32>, i32 -> vector<2x16xf32>
    %c15_i32_235 = arith.constant 15 : i32
    %899 = tpu.dynamic_rotate %887 by %c15_i32_235 dim 1 : vector<2x16xf32>, i32 -> vector<2x16xf32>
    %900 = vector.shape_cast %2 : vector<1x16xi1> to vector<1x16xi1>
    %901 = vector.broadcast %900 : vector<1x16xi1> to vector<2x16xi1>
    %902 = arith.select %901, %899, %898 : vector<2x16xi1>, vector<2x16xf32>
    %903 = vector.shape_cast %4 : vector<1x16xi1> to vector<1x16xi1>
    %904 = vector.broadcast %903 : vector<1x16xi1> to vector<2x16xi1>
    %905 = arith.select %904, %898, %899 : vector<2x16xi1>, vector<2x16xf32>
    %906 = arith.addf %887, %902 : vector<2x16xf32>
    %907 = arith.addf %906, %905 : vector<2x16xf32>
    %908 = vector.extract_strided_slice %907 {offsets = [0, 0], sizes = [1, 16], strides = [1, 1]} : vector<2x16xf32> to vector<1x16xf32>
    %909 = vector.extract_strided_slice %907 {offsets = [1, 0], sizes = [1, 16], strides = [1, 1]} : vector<2x16xf32> to vector<1x16xf32>
    %c1_i32_236 = arith.constant 1 : i32
    %910 = tpu.dynamic_rotate %897 by %c1_i32_236 dim 0 : vector<16x16xf32>, i32 -> vector<16x16xf32>
    %c15_i32_237 = arith.constant 15 : i32
    %911 = tpu.dynamic_rotate %897 by %c15_i32_237 dim 0 : vector<16x16xf32>, i32 -> vector<16x16xf32>
    %912 = vector.shape_cast %7 : vector<16x1xi1> to vector<16x1xi1>
    %913 = vector.broadcast %912 : vector<16x1xi1> to vector<16x16xi1>
    %914 = vector.shape_cast %908 : vector<1x16xf32> to vector<1x16xf32>
    %915 = vector.broadcast %914 : vector<1x16xf32> to vector<16x16xf32>
    %916 = arith.select %913, %915, %910 : vector<16x16xi1>, vector<16x16xf32>
    %917 = vector.shape_cast %9 : vector<16x1xi1> to vector<16x1xi1>
    %918 = vector.broadcast %917 : vector<16x1xi1> to vector<16x16xi1>
    %919 = vector.shape_cast %909 : vector<1x16xf32> to vector<1x16xf32>
    %920 = vector.broadcast %919 : vector<1x16xf32> to vector<16x16xf32>
    %921 = arith.select %918, %920, %911 : vector<16x16xi1>, vector<16x16xf32>
    %922 = arith.addf %897, %916 : vector<16x16xf32>
    %923 = arith.addf %922, %921 : vector<16x16xf32>
    %cst_238 = arith.constant 0.111111112 : f32
    %924 = vector.broadcast %cst_238 : f32 to vector<16x16xf32>
    %925 = arith.mulf %923, %924 : vector<16x16xf32>
    %926 = arith.mulf %843, %843 : vector<16x16xf32>
    %927 = arith.subf %925, %926 : vector<16x16xf32>
    %928 = arith.mulf %755, %757 : vector<16x16xf32>
    %929 = arith.mulf %766, %767 : vector<2x16xf32>
    %c1_i32_239 = arith.constant 1 : i32
    %930 = tpu.dynamic_rotate %928 by %c1_i32_239 dim 1 : vector<16x16xf32>, i32 -> vector<16x16xf32>
    %c15_i32_240 = arith.constant 15 : i32
    %931 = tpu.dynamic_rotate %928 by %c15_i32_240 dim 1 : vector<16x16xf32>, i32 -> vector<16x16xf32>
    %932 = vector.shape_cast %2 : vector<1x16xi1> to vector<1x16xi1>
    %933 = vector.broadcast %932 : vector<1x16xi1> to vector<16x16xi1>
    %934 = arith.select %933, %931, %930 : vector<16x16xi1>, vector<16x16xf32>
    %935 = vector.shape_cast %4 : vector<1x16xi1> to vector<1x16xi1>
    %936 = vector.broadcast %935 : vector<1x16xi1> to vector<16x16xi1>
    %937 = arith.select %936, %930, %931 : vector<16x16xi1>, vector<16x16xf32>
    %938 = arith.addf %928, %934 : vector<16x16xf32>
    %939 = arith.addf %938, %937 : vector<16x16xf32>
    %c1_i32_241 = arith.constant 1 : i32
    %940 = tpu.dynamic_rotate %929 by %c1_i32_241 dim 1 : vector<2x16xf32>, i32 -> vector<2x16xf32>
    %c15_i32_242 = arith.constant 15 : i32
    %941 = tpu.dynamic_rotate %929 by %c15_i32_242 dim 1 : vector<2x16xf32>, i32 -> vector<2x16xf32>
    %942 = vector.shape_cast %2 : vector<1x16xi1> to vector<1x16xi1>
    %943 = vector.broadcast %942 : vector<1x16xi1> to vector<2x16xi1>
    %944 = arith.select %943, %941, %940 : vector<2x16xi1>, vector<2x16xf32>
    %945 = vector.shape_cast %4 : vector<1x16xi1> to vector<1x16xi1>
    %946 = vector.broadcast %945 : vector<1x16xi1> to vector<2x16xi1>
    %947 = arith.select %946, %940, %941 : vector<2x16xi1>, vector<2x16xf32>
    %948 = arith.addf %929, %944 : vector<2x16xf32>
    %949 = arith.addf %948, %947 : vector<2x16xf32>
    %950 = vector.extract_strided_slice %949 {offsets = [0, 0], sizes = [1, 16], strides = [1, 1]} : vector<2x16xf32> to vector<1x16xf32>
    %951 = vector.extract_strided_slice %949 {offsets = [1, 0], sizes = [1, 16], strides = [1, 1]} : vector<2x16xf32> to vector<1x16xf32>
    %c1_i32_243 = arith.constant 1 : i32
    %952 = tpu.dynamic_rotate %939 by %c1_i32_243 dim 0 : vector<16x16xf32>, i32 -> vector<16x16xf32>
    %c15_i32_244 = arith.constant 15 : i32
    %953 = tpu.dynamic_rotate %939 by %c15_i32_244 dim 0 : vector<16x16xf32>, i32 -> vector<16x16xf32>
    %954 = vector.shape_cast %7 : vector<16x1xi1> to vector<16x1xi1>
    %955 = vector.broadcast %954 : vector<16x1xi1> to vector<16x16xi1>
    %956 = vector.shape_cast %950 : vector<1x16xf32> to vector<1x16xf32>
    %957 = vector.broadcast %956 : vector<1x16xf32> to vector<16x16xf32>
    %958 = arith.select %955, %957, %952 : vector<16x16xi1>, vector<16x16xf32>
    %959 = vector.shape_cast %9 : vector<16x1xi1> to vector<16x1xi1>
    %960 = vector.broadcast %959 : vector<16x1xi1> to vector<16x16xi1>
    %961 = vector.shape_cast %951 : vector<1x16xf32> to vector<1x16xf32>
    %962 = vector.broadcast %961 : vector<1x16xf32> to vector<16x16xf32>
    %963 = arith.select %960, %962, %953 : vector<16x16xi1>, vector<16x16xf32>
    %964 = arith.addf %939, %958 : vector<16x16xf32>
    %965 = arith.addf %964, %963 : vector<16x16xf32>
    %cst_245 = arith.constant 0.111111112 : f32
    %966 = vector.broadcast %cst_245 : f32 to vector<16x16xf32>
    %967 = arith.mulf %965, %966 : vector<16x16xf32>
    %968 = arith.mulf %805, %843 : vector<16x16xf32>
    %969 = arith.subf %967, %968 : vector<16x16xf32>
    %cst_246 = arith.constant 2.000000e+00 : f32
    %970 = vector.broadcast %cst_246 : f32 to vector<16x16xf32>
    %971 = arith.mulf %970, %805 : vector<16x16xf32>
    %972 = arith.mulf %971, %843 : vector<16x16xf32>
    %cst_247 = arith.constant 9.99999974E-5 : f32
    %973 = vector.broadcast %cst_247 : f32 to vector<16x16xf32>
    %974 = arith.addf %972, %973 : vector<16x16xf32>
    %cst_248 = arith.constant 2.000000e+00 : f32
    %975 = vector.broadcast %cst_248 : f32 to vector<16x16xf32>
    %976 = arith.mulf %975, %969 : vector<16x16xf32>
    %cst_249 = arith.constant 8.99999984E-4 : f32
    %977 = vector.broadcast %cst_249 : f32 to vector<16x16xf32>
    %978 = arith.addf %976, %977 : vector<16x16xf32>
    %979 = arith.mulf %974, %978 : vector<16x16xf32>
    %980 = arith.mulf %805, %805 : vector<16x16xf32>
    %981 = arith.mulf %843, %843 : vector<16x16xf32>
    %982 = arith.addf %980, %981 : vector<16x16xf32>
    %cst_250 = arith.constant 9.99999974E-5 : f32
    %983 = vector.broadcast %cst_250 : f32 to vector<16x16xf32>
    %984 = arith.addf %982, %983 : vector<16x16xf32>
    %985 = arith.addf %885, %927 : vector<16x16xf32>
    %cst_251 = arith.constant 8.99999984E-4 : f32
    %986 = vector.broadcast %cst_251 : f32 to vector<16x16xf32>
    %987 = arith.addf %985, %986 : vector<16x16xf32>
    %988 = arith.mulf %984, %987 : vector<16x16xf32>
    %989 = tpu.reciprocal %988 {approx = true} : vector<16x16xf32> -> vector<16x16xf32>
    %990 = arith.mulf %979, %989 : vector<16x16xf32>
    %cst_252 = arith.constant 1.000000e+00 : f32
    %991 = vector.broadcast %cst_252 : f32 to vector<16x16xf32>
    %992 = arith.subf %991, %990 : vector<16x16xf32>
    %cst_253 = arith.constant 5.000000e-01 : f32
    %993 = vector.broadcast %cst_253 : f32 to vector<16x16xf32>
    %994 = arith.mulf %992, %993 : vector<16x16xf32>
    %cst_254 = arith.constant 0.000000e+00 : f32
    %cst_255 = arith.constant 1.000000e+00 : f32
    %995 = vector.broadcast %cst_254 : f32 to vector<16x16xf32>
    %996 = arith.maximumf %995, %994 : vector<16x16xf32>
    %997 = vector.broadcast %cst_255 : f32 to vector<16x16xf32>
    %998 = arith.minimumf %997, %996 : vector<16x16xf32>
    %c3_256 = arith.constant 3 : index
    %c0_257 = arith.constant 0 : index
    %c0_258 = arith.constant 0 : index
    %999 = vector.load %arg3[%c3_256, %c0_257, %c0_258] : memref<4x16x16xf32, #tpu.memory_space<vmem>>, vector<1x16x16xf32>
    %1000 = vector.shape_cast %999 : vector<1x16x16xf32> to vector<16x16xf32>
    %1001 = vector.shape_cast %998 : vector<16x16xf32> to vector<1x16x16xf32>
    tpu.vector_store %arg3[%c3_256, %c0_257, %c0_258], %1001 {strides = array<i32>} : memref<4x16x16xf32, #tpu.memory_space<vmem>>, vector<1x16x16xf32>,
    return
  }
  func.func @transform_0(%arg0: i32) -> (i32, i32, i32) {
    %c0_i32 = arith.constant 0 : i32
    %c0_i32_0 = arith.constant 0 : i32
    %c0_i32_1 = arith.constant 0 : i32
    return %arg0, %c0_i32, %c0_i32_0 : i32, i32, i32
  }
  func.func @transform_1(%arg0: i32) -> (i32, i32, i32) {
    %c0_i32 = arith.constant 0 : i32
    %c0_i32_0 = arith.constant 0 : i32
    %c0_i32_1 = arith.constant 0 : i32
    return %arg0, %c0_i32, %c0_i32_0 : i32, i32, i32
  }
  func.func @transform_2(%arg0: i32) -> (i32, i32, i32) {
    %c0_i32 = arith.constant 0 : i32
    %c0_i32_0 = arith.constant 0 : i32
    %c0_i32_1 = arith.constant 0 : i32
    return %arg0, %c0_i32, %c0_i32_0 : i32, i32, i32
  }
}

</mosaic_0001>

<llo_original>
// kernel: tpu_custom_call.1
$region0: #{tpu_custom_call.1}
  #allocation0 [shape = 'u32[]', space=smem, size = 0x4, offset = 0x4, fixed_abs, tag = 'smem constant byte address 0x4 - core index']
  #allocation1 [shape = 'u32[72,128]{1,0:T(1,128)}', space=vmem, size = 0x9000, scoped, tag = 'internal scratch']
  %s0 = inlined_call_operand.hbm [shape: f32[8,16,16], index: 0, kind: input, shape index: {}]
  %s1 = inlined_call_operand.hbm [shape: f32[8,16,16], index: 1, kind: input, shape index: {}]
  %s2 = inlined_call_operand.hbm [shape: f32[8,16,16], index: 2, kind: output, shape index: {}]
  %s3 = sld [smem:[#allocation0]]
  $region49: #{tpu_custom_call.1} parent=0
    _
  %s5 = ssub.s32 1, %s3
  %s6 = scalar_select 0, %s5, %s3
  $region1: #{tpu_custom_call.1} parent=0
    #allocation2 [shape = 'u8[65536]{0}', space=vmem, size = 0x10000, scoped, tag = 'input window, operand 0']
    #allocation3 [shape = 's32[2]{0}', space=sflag, size = 0x8, scoped, tag = 'scoped memory for tpu_custom_call.1']
    #allocation4 [shape = 's32[2]{0}', space=sflag, size = 0x8, scoped, tag = 'scoped memory for tpu_custom_call.1']
    #allocation5 [shape = 'u8[65536]{0}', space=vmem, size = 0x10000, scoped, tag = 'input window, operand 1']
    #allocation6 [shape = 's32[2]{0}', space=sflag, size = 0x8, scoped, tag = 'scoped memory for tpu_custom_call.1']
    #allocation7 [shape = 'u8[65536]{0}', space=vmem, size = 0x10000, scoped, tag = 'output window, operand 0']
    %7 = vsyncpa [#allocation3], 0
    %s8 = scalar_lea.sflag [#allocation3], 1
    %9 = vsyncpa %s8, 0
    %10 = vsyncpa [#allocation6], 0
    %s11 = scalar_lea.sflag [#allocation6], 1
    %12 = vsyncpa %s11, 0
    %13 = vsyncpa [#allocation4], 0
    %s14 = scalar_lea.sflag [#allocation4], 1
    %15 = vsyncpa %s14, 0
    loop: start=0, step=1, limit=4
    $region2: #{tpu_custom_call.1} parent=1 // loop_pre_header
      _
    $region3: #{tpu_custom_call.1} parent=1 // loop_header
      %s17 = sphi 0, %s21
      %p18 = scmp.ge.s32.totalorder %s17, 4
      %s27 = sphi 0, %s29
      %s30 = sphi 0, %s27
      %s31 = sphi 0, %s30
      %s47 = sphi 0, %s31
      %s53 = sphi 0, %s55
      %s56 = sphi 0, %s53
      %s57 = sphi 0, %s56
      %s73 = sphi 0, %s57
      %s79 = sphi 0, %s81
      %s82 = sphi 0, %s79
      %s83 = sphi 0, %s82
      %s99 = sphi 0, %s83
    $region4: #{tpu_custom_call.1} parent=1 // loop_header_branch
      %20 = sbr.rel (%p18) target = $region8
    $region5: #{tpu_custom_call.1} parent=1 // loop_body
      %s22 = ssub.s32 %s17, 1
      %s23 = ssub.s32 %s17, 2
      %s24 = sadd.s32 %s17, 1
      %s25 = ssub.s32 %s17, %s24
      %p26 = scmp.eq.s32.totalorder %s25, 0
      %s28 = sadd.s32 %s27, 1
      %s29 = scalar_select %p26, %s27, %s28
      %p32 = pneg %p26
      %p33 = scmp.eq.s32.totalorder %s17, 1
      %p34 = por %p32, %p33
      %p35 = scmp.ne.s32.totalorder %s27, %s30
      %p36 = scmp.eq.s32.totalorder %s17, 0
      %p37 = por %p35, %p36
      %p38 = scmp.ne.s32.totalorder %s27, %s30
      %p39 = scmp.eq.s32.totalorder %s22, 1
      %p40 = por %p38, %p39
      %p41 = scmp.ne.s32.totalorder %s30, %s31
      %p42 = scmp.eq.s32.totalorder %s22, 0
      %p43 = por %p41, %p42
      %p44 = scmp.ne.s32.totalorder %s30, %s31
      %p45 = scmp.eq.s32.totalorder %s23, 1
      %p46 = por %p44, %p45
      %p48 = scmp.ne.s32.totalorder %s31, %s47
      %p49 = scmp.eq.s32.totalorder %s23, 0
      %p50 = por %p48, %p49
      %s51 = ssub.s32 %s17, %s24
      %p52 = scmp.eq.s32.totalorder %s51, 0
      %s54 = sadd.s32 %s53, 1
      %s55 = scalar_select %p52, %s53, %s54
      %p58 = pneg %p52
      %p59 = scmp.eq.s32.totalorder %s17, 1
      %p60 = por %p58, %p59
      %p61 = scmp.ne.s32.totalorder %s53, %s56
      %p62 = scmp.eq.s32.totalorder %s17, 0
      %p63 = por %p61, %p62
      %p64 = scmp.ne.s32.totalorder %s53, %s56
      %p65 = scmp.eq.s32.totalorder %s22, 1
      %p66 = por %p64, %p65
      %p67 = scmp.ne.s32.totalorder %s56, %s57
      %p68 = scmp.eq.s32.totalorder %s22, 0
      %p69 = por %p67, %p68
      %p70 = scmp.ne.s32.totalorder %s56, %s57
      %p71 = scmp.eq.s32.totalorder %s23, 1
      %p72 = por %p70, %p71
      %p74 = scmp.ne.s32.totalorder %s57, %s73
      %p75 = scmp.eq.s32.totalorder %s23, 0
      %p76 = por %p74, %p75
      %s77 = ssub.s32 %s17, %s24
      %p78 = scmp.eq.s32.totalorder %s77, 0
      %s80 = sadd.s32 %s79, 1
      %s81 = scalar_select %p78, %s79, %s80
      %p84 = pneg %p78
      %p85 = scmp.eq.s32.totalorder %s17, 1
      %p86 = por %p84, %p85
      %p87 = scmp.ne.s32.totalorder %s79, %s82
      %p88 = scmp.eq.s32.totalorder %s17, 0
      %p89 = por %p87, %p88
      %p90 = scmp.ne.s32.totalorder %s79, %s82
      %p91 = scmp.eq.s32.totalorder %s22, 1
      %p92 = por %p90, %p91
      %p93 = scmp.ne.s32.totalorder %s82, %s83
      %p94 = scmp.eq.s32.totalorder %s22, 0
      %p95 = por %p93, %p94
      %p96 = scmp.ne.s32.totalorder %s82, %s83
      %p97 = scmp.eq.s32.totalorder %s23, 1
      %p98 = por %p96, %p97
      %p100 = scmp.ne.s32.totalorder %s83, %s99
      %p101 = scmp.eq.s32.totalorder %s23, 0
      %p102 = por %p100, %p101
      %p103 = scmp.le.s32.totalorder 1, %s17
      %p104 = scmp.lt.s32.totalorder %s17, 3
      %p105 = pnand %p103, %p104
      %p106 = pneg %p105
      // Predicated region
      $region9: #{tpu_custom_call.1} parent=5 // pred_check
        _
      $region10: #{tpu_custom_call.1} parent=5 // pred_check_branch
        %108 = sbr.rel (%p105) target = $region12
      $region11: #{tpu_custom_call.1} parent=5 // pred_region
        %s109 = ssub.s32 %s17, 1
      $region12: #{tpu_custom_call.1} parent=5 // pred_fallthru
        _
      %p110 = scmp.lt.s32.totalorder %s17, 2
      // Predicated region
      $region13: #{tpu_custom_call.1} parent=5 // pred_check
        %p111 = pneg %p110
      $region14: #{tpu_custom_call.1} parent=5 // pred_check_branch
        %113 = sbr.rel (%p111) target = $region16
      $region15: #{tpu_custom_call.1} parent=5 // pred_region
        // Predicated region
        $region17: #{tpu_custom_call.1} parent=15 // pred_check
          %p114 = pneg %p37
        $region18: #{tpu_custom_call.1} parent=15 // pred_check_branch
          %116 = sbr.rel (%p114) target = $region20
        $region19: #{tpu_custom_call.1} parent=15 // pred_region
          %s117 = sand.u32 %s27, 1
          %s118 = scalar_lea.sflag [#allocation3], %s117
          %s119 = sand.u32 %s27, 1
          %s120 = smul.addr %s119, 64
          %s121 = scalar_lea.vmem [#allocation2], %s120
          %s122 = smul.u32 4, %s17
          %124 = vsyncadd %s118, 0
          %s125 = smul.addr %s122, 2
          %s126 = smul.addr %s125, 8
          %s127 = scalar_lea.hbm %s0, %s126
          %s128 = sshll.u32 %s127, 4
          %s129 = int_to_ptr.hbm [resolvable:$true] %s128
          %s130 = sshll.u32 %s121, 4
          %s131 = int_to_ptr.vmem [resolvable:$true] %s130
          %136 = dma.hbm_to_vmem [thread:$0]  %s129, 1024, %s131, %s118, 128, 128, 8
        $region20: #{tpu_custom_call.1} parent=15 // pred_fallthru
          _
        // Predicated region
        $region21: #{tpu_custom_call.1} parent=15 // pred_check
          %p137 = pneg %p63
        $region22: #{tpu_custom_call.1} parent=15 // pred_check_branch
          %139 = sbr.rel (%p137) target = $region24
        $region23: #{tpu_custom_call.1} parent=15 // pred_region
          %s140 = sand.u32 %s53, 1
          %s141 = scalar_lea.sflag [#allocation6], %s140
          %s142 = sand.u32 %s53, 1
          %s143 = smul.addr %s142, 64
          %s144 = scalar_lea.vmem [#allocation5], %s143
          %s145 = smul.u32 4, %s17
          %147 = vsyncadd %s141, 0
          %s148 = smul.addr %s145, 2
          %s149 = smul.addr %s148, 8
          %s150 = scalar_lea.hbm %s1, %s149
          %s151 = sshll.u32 %s150, 4
          %s152 = int_to_ptr.hbm [resolvable:$true] %s151
          %s153 = sshll.u32 %s144, 4
          %s154 = int_to_ptr.vmem [resolvable:$true] %s153
          %159 = dma.hbm_to_vmem [thread:$0]  %s152, 1024, %s154, %s141, 128, 128, 8
        $region24: #{tpu_custom_call.1} parent=15 // pred_fallthru
          _
      $region16: #{tpu_custom_call.1} parent=5 // pred_fallthru
        _
      %p160 = scmp.le.s32.totalorder 1, %s17
      %p161 = scmp.lt.s32.totalorder %s17, 3
      %p162 = pnand %p160, %p161
      %p163 = pneg %p162
      // Predicated region
      $region25: #{tpu_custom_call.1} parent=5 // pred_check
        _
      $region26: #{tpu_custom_call.1} parent=5 // pred_check_branch
        %165 = sbr.rel (%p162) target = $region28
      $region27: #{tpu_custom_call.1} parent=5 // pred_region
        %s166 = ssub.s32 %s17, 1
        %s167 = sand.u32 %s30, 1
        %s168 = scalar_lea.sflag [#allocation3], %s167
        %s169 = sand.u32 %s30, 1
        %s170 = smul.addr %s169, 64
        %s171 = scalar_lea.vmem [#allocation2], %s170
        // Predicated region
        $region29: #{tpu_custom_call.1} parent=27 // pred_check
          %p172 = pneg %p43
        $region30: #{tpu_custom_call.1} parent=27 // pred_check_branch
          %174 = sbr.rel (%p172) target = $region32
        $region31: #{tpu_custom_call.1} parent=27 // pred_region
          %176 = dma.done %s168, 1024
        $region32: #{tpu_custom_call.1} parent=27 // pred_fallthru
          _
        %s177 = sand.u32 %s56, 1
        %s178 = scalar_lea.sflag [#allocation6], %s177
        %s179 = sand.u32 %s56, 1
        %s180 = smul.addr %s179, 64
        %s181 = scalar_lea.vmem [#allocation5], %s180
        // Predicated region
        $region33: #{tpu_custom_call.1} parent=27 // pred_check
          %p182 = pneg %p69
        $region34: #{tpu_custom_call.1} parent=27 // pred_check_branch
          %184 = sbr.rel (%p182) target = $region36
        $region35: #{tpu_custom_call.1} parent=27 // pred_region
          %186 = dma.done %s178, 1024
        $region36: #{tpu_custom_call.1} parent=27 // pred_fallthru
          _
        %s187 = sand.u32 %s30, 1
        %s188 = scalar_lea.sflag [#allocation3], %s187
        %s189 = sand.u32 %s30, 1
        %s190 = smul.addr %s189, 64
        %s191 = scalar_lea.vmem [#allocation2], %s190
        %p192 = pneg %p43
        %p193 = pneg %p40
        %s194 = sand.u32 %s56, 1
        %s195 = scalar_lea.sflag [#allocation6], %s194
        %s196 = sand.u32 %s56, 1
        %s197 = smul.addr %s196, 64
        %s198 = scalar_lea.vmem [#allocation5], %s197
        %p199 = pneg %p69
        %p200 = pneg %p66
        %p201 = pneg %p95
        %p202 = pneg %p92
        %s203 = sand.u32 %s82, 1
        %s204 = scalar_lea.sflag [#allocation4], %s203
        %s205 = sand.u32 %s82, 1
        %s206 = smul.addr %s205, 64
        %s207 = scalar_lea.vmem [#allocation7], %s206
        %s208 = smul.u32 4, %s22
        %s209 = smul.u32 4, %s22
        %s210 = smul.u32 4, %s22
        %v211 = vlaneseq
        %v212 = vand.u32 %v211, 127
        %vm213 = vcmp.eq.s32.totalorder %v212, 0
        %vm214 = vcmp.eq.s32.totalorder %v212, 15
        %v215 = vlaneseq
        %v216 = vshrl.u32 %v215, 7
        %v217 = vadd.s32 %v216, 8
        %vm218 = vcmp.eq.s32.totalorder %v216, 0
        %vm219 = vcmp.eq.s32.totalorder %v217, 0
        %vm220 = vcmp.eq.s32.totalorder %v216, 15
        %vm221 = vcmp.eq.s32.totalorder %v217, 15
        %v222 = vld [vmem:[%s171] sm:$0xff]
        %v223 = vld [vmem:[%s171 + $0x8] sm:$0xff]
        %v224 = vld [vmem:[%s181] sm:$0xff]
        %v225 = vld [vmem:[%s181 + $0x8] sm:$0xff]
        %v226 = vld [vmem:[%s171 + $0x1] sm:$0x1]
        %v227 = vld [vmem:[%s171 + $0xe] sm:$0x1]
        %v228 = vld [vmem:[%s181 + $0x1] sm:$0x1]
        %v229 = vld [vmem:[%s181 + $0xe] sm:$0x1]
        %v231 = vrot.slane %v227, 7
        %vm233 = vcmask 1040384
        %v234 = vsel %vm233, %v226, %v231
        %v236 = vrot.slane %v229, 7
        %v238 = vsel %vm233, %v228, %v236
        %vm239 = vcmask 1047680
        %240 = vrot.lane.b32.xlu0 %v222, 16
        %v241 = vpop.permute.xlu0 %240
        %v242 = vsel %vm239, %v241, %v222
        %243 = vrot.lane.b32.xlu0 %v223, 16
        %v244 = vpop.permute.xlu0 %243
        %v245 = vsel %vm239, %v244, %v223
        %246 = vrot.lane.b32.xlu0 %v242, 16
        %v247 = vpop.permute.xlu0 %246
        %248 = vrot.lane.b32.xlu0 %v245, 16
        %v249 = vpop.permute.xlu0 %248
        %v250 = vsel %vm239, %v247, %v222
        %v251 = vsel %vm239, %v249, %v223
        %v252 = vsel %vm213, 1, 0
        %vm253 = vcmp.eq.s32.totalorder %v252, 1
        %256 = vrot.lane.b32.xlu0 %v250, 127
        %v257 = vpop.permute.xlu0 %256
        %258 = vrot.lane.b32.xlu0 %v251, 127
        %v259 = vpop.permute.xlu0 %258
        %262 = vrot.lane.b32.xlu0 %v250, 113
        %v263 = vpop.permute.xlu0 %262
        %264 = vrot.lane.b32.xlu0 %v251, 113
        %v265 = vpop.permute.xlu0 %264
        %v268 = vsel %vm253, %v257, %v263
        %v269 = vsel %vm253, %v259, %v265
        %v270 = vsel %vm214, 1, 0
        %vm271 = vcmp.eq.s32.totalorder %v270, 1
        %v272 = vsel %vm271, %v263, %v257
        %v273 = vsel %vm271, %v265, %v259
        %v274 = vadd.f32 %v222, %v268
        %v275 = vadd.f32 %v223, %v269
        %v276 = vadd.f32 %v274, %v272
        %v277 = vadd.f32 %v275, %v273
        %278 = vrot.lane.b32.xlu0 %v234, 16
        %v279 = vpop.permute.xlu0 %278
        %v280 = vsel %vm239, %v279, %v234
        %281 = vrot.lane.b32.xlu0 %v280, 16
        %v282 = vpop.permute.xlu0 %281
        %v283 = vsel %vm239, %v282, %v234
        %285 = vrot.lane.b32.xlu0 %v283, 127
        %v286 = vpop.permute.xlu0 %285
        %288 = vrot.lane.b32.xlu0 %v283, 113
        %v289 = vpop.permute.xlu0 %288
        %v291 = vsel %vm253, %v286, %v289
        %v292 = vsel %vm271, %v289, %v286
        %v293 = vadd.f32 %v234, %v291
        %v294 = vadd.f32 %v293, %v292
        %v295 = vrot.slane %v276, 7
        %v296 = vrot.slane %v277, 7
        %vm297 = vcmp.lt.s32.totalorder %v216, 1
        %v298 = vsel %vm297, %v295, %v296
        %v299 = vsel %vm297, %v296, %v295
        %v300 = vrot.slane %v276, 1
        %v301 = vrot.slane %v277, 1
        %vm302 = vcmp.lt.s32.totalorder %v216, 7
        %v303 = vsel %vm302, %v300, %v301
        %v304 = vsel %vm302, %v301, %v300
        %v305 = vsel %vm218, 1, 0
        %v306 = vsel %vm219, 1, 0
        %vm307 = vcmp.eq.s32.totalorder %v305, 1
        %vm308 = vcmp.eq.s32.totalorder %v306, 1
        %v309 = vperm.slane %v294, 0
        %v310 = vsel %vm307, %v309, %v299
        %v311 = vsel %vm308, %v309, %v298
        %v312 = vsel %vm220, 1, 0
        %v313 = vsel %vm221, 1, 0
        %vm314 = vcmp.eq.s32.totalorder %v312, 1
        %vm315 = vcmp.eq.s32.totalorder %v313, 1
        %v316 = vperm.slane %v294, 1
        %v317 = vsel %vm314, %v316, %v303
        %v318 = vsel %vm315, %v316, %v304
        %v319 = vadd.f32 %v276, %v310
        %v320 = vadd.f32 %v277, %v311
        %v321 = vadd.f32 %v319, %v317
        %v322 = vadd.f32 %v320, %v318
        %v323 = vmul.f32 %v321, 0.11111111
        %v324 = vmul.f32 %v322, 0.11111111
        %325 = vrot.lane.b32.xlu0 %v224, 16
        %v326 = vpop.permute.xlu0 %325
        %v327 = vsel %vm239, %v326, %v224
        %328 = vrot.lane.b32.xlu0 %v225, 16
        %v329 = vpop.permute.xlu0 %328
        %v330 = vsel %vm239, %v329, %v225
        %331 = vrot.lane.b32.xlu0 %v327, 16
        %v332 = vpop.permute.xlu0 %331
        %333 = vrot.lane.b32.xlu0 %v330, 16
        %v334 = vpop.permute.xlu0 %333
        %v335 = vsel %vm239, %v332, %v224
        %v336 = vsel %vm239, %v334, %v225
        %339 = vrot.lane.b32.xlu0 %v335, 127
        %v340 = vpop.permute.xlu0 %339
        %341 = vrot.lane.b32.xlu0 %v336, 127
        %v342 = vpop.permute.xlu0 %341
        %345 = vrot.lane.b32.xlu0 %v335, 113
        %v346 = vpop.permute.xlu0 %345
        %347 = vrot.lane.b32.xlu0 %v336, 113
        %v348 = vpop.permute.xlu0 %347
        %v351 = vsel %vm253, %v340, %v346
        %v352 = vsel %vm253, %v342, %v348
        %v353 = vsel %vm271, %v346, %v340
        %v354 = vsel %vm271, %v348, %v342
        %v355 = vadd.f32 %v224, %v351
        %v356 = vadd.f32 %v225, %v352
        %v357 = vadd.f32 %v355, %v353
        %v358 = vadd.f32 %v356, %v354
        %359 = vrot.lane.b32.xlu0 %v238, 16
        %v360 = vpop.permute.xlu0 %359
        %v361 = vsel %vm239, %v360, %v238
        %362 = vrot.lane.b32.xlu0 %v361, 16
        %v363 = vpop.permute.xlu0 %362
        %v364 = vsel %vm239, %v363, %v238
        %366 = vrot.lane.b32.xlu0 %v364, 127
        %v367 = vpop.permute.xlu0 %366
        %369 = vrot.lane.b32.xlu0 %v364, 113
        %v370 = vpop.permute.xlu0 %369
        %v372 = vsel %vm253, %v367, %v370
        %v373 = vsel %vm271, %v370, %v367
        %v374 = vadd.f32 %v238, %v372
        %v375 = vadd.f32 %v374, %v373
        %v376 = vrot.slane %v357, 7
        %v377 = vrot.slane %v358, 7
        %v378 = vsel %vm297, %v376, %v377
        %v379 = vsel %vm297, %v377, %v376
        %v380 = vrot.slane %v357, 1
        %v381 = vrot.slane %v358, 1
        %v382 = vsel %vm302, %v380, %v381
        %v383 = vsel %vm302, %v381, %v380
        %v384 = vperm.slane %v375, 0
        %v385 = vsel %vm307, %v384, %v379
        %v386 = vsel %vm308, %v384, %v378
        %v387 = vperm.slane %v375, 1
        %v388 = vsel %vm314, %v387, %v382
        %v389 = vsel %vm315, %v387, %v383
        %v390 = vadd.f32 %v357, %v385
        %v391 = vadd.f32 %v358, %v386
        %v392 = vadd.f32 %v390, %v388
        %v393 = vadd.f32 %v391, %v389
        %v394 = vmul.f32 %v392, 0.11111111
        %v395 = vmul.f32 %v393, 0.11111111
        %v396 = vmul.f32 %v222, %v222
        %v397 = vmul.f32 %v223, %v223
        %v398 = vmul.f32 %v234, %v234
        %399 = vrot.lane.b32.xlu0 %v396, 16
        %v400 = vpop.permute.xlu0 %399
        %v401 = vsel %vm239, %v400, %v396
        %402 = vrot.lane.b32.xlu0 %v397, 16
        %v403 = vpop.permute.xlu0 %402
        %v404 = vsel %vm239, %v403, %v397
        %405 = vrot.lane.b32.xlu0 %v401, 16
        %v406 = vpop.permute.xlu0 %405
        %407 = vrot.lane.b32.xlu0 %v404, 16
        %v408 = vpop.permute.xlu0 %407
        %v409 = vsel %vm239, %v406, %v396
        %v410 = vsel %vm239, %v408, %v397
        %413 = vrot.lane.b32.xlu0 %v409, 127
        %v414 = vpop.permute.xlu0 %413
        %415 = vrot.lane.b32.xlu0 %v410, 127
        %v416 = vpop.permute.xlu0 %415
        %419 = vrot.lane.b32.xlu0 %v409, 113
        %v420 = vpop.permute.xlu0 %419
        %421 = vrot.lane.b32.xlu0 %v410, 113
        %v422 = vpop.permute.xlu0 %421
        %v425 = vsel %vm253, %v414, %v420
        %v426 = vsel %vm253, %v416, %v422
        %v427 = vsel %vm271, %v420, %v414
        %v428 = vsel %vm271, %v422, %v416
        %v429 = vadd.f32 %v396, %v425
        %v430 = vadd.f32 %v397, %v426
        %v431 = vadd.f32 %v429, %v427
        %v432 = vadd.f32 %v430, %v428
        %433 = vrot.lane.b32.xlu0 %v398, 16
        %v434 = vpop.permute.xlu0 %433
        %v435 = vsel %vm239, %v434, %v398
        %436 = vrot.lane.b32.xlu0 %v435, 16
        %v437 = vpop.permute.xlu0 %436
        %v438 = vsel %vm239, %v437, %v398
        %440 = vrot.lane.b32.xlu0 %v438, 127
        %v441 = vpop.permute.xlu0 %440
        %443 = vrot.lane.b32.xlu0 %v438, 113
        %v444 = vpop.permute.xlu0 %443
        %v446 = vsel %vm253, %v441, %v444
        %v447 = vsel %vm271, %v444, %v441
        %v448 = vadd.f32 %v398, %v446
        %v449 = vadd.f32 %v448, %v447
        %v450 = vrot.slane %v431, 7
        %v451 = vrot.slane %v432, 7
        %v452 = vsel %vm297, %v450, %v451
        %v453 = vsel %vm297, %v451, %v450
        %v454 = vrot.slane %v431, 1
        %v455 = vrot.slane %v432, 1
        %v456 = vsel %vm302, %v454, %v455
        %v457 = vsel %vm302, %v455, %v454
        %v458 = vperm.slane %v449, 0
        %v459 = vsel %vm307, %v458, %v453
        %v460 = vsel %vm308, %v458, %v452
        %v461 = vperm.slane %v449, 1
        %v462 = vsel %vm314, %v461, %v456
        %v463 = vsel %vm315, %v461, %v457
        %v464 = vadd.f32 %v431, %v459
        %v465 = vadd.f32 %v432, %v460
        %v466 = vadd.f32 %v464, %v462
        %v467 = vadd.f32 %v465, %v463
        %v468 = vmul.f32 %v466, 0.11111111
        %v469 = vmul.f32 %v467, 0.11111111
        %v470 = vmul.f32 %v323, %v323
        %v471 = vmul.f32 %v324, %v324
        %v472 = vsub.f32 %v468, %v470
        %v473 = vsub.f32 %v469, %v471
        %v474 = vmul.f32 %v224, %v224
        %v475 = vmul.f32 %v225, %v225
        %v476 = vmul.f32 %v238, %v238
        %477 = vrot.lane.b32.xlu0 %v474, 16
        %v478 = vpop.permute.xlu0 %477
        %v479 = vsel %vm239, %v478, %v474
        %480 = vrot.lane.b32.xlu0 %v475, 16
        %v481 = vpop.permute.xlu0 %480
        %v482 = vsel %vm239, %v481, %v475
        %483 = vrot.lane.b32.xlu0 %v479, 16
        %v484 = vpop.permute.xlu0 %483
        %485 = vrot.lane.b32.xlu0 %v482, 16
        %v486 = vpop.permute.xlu0 %485
        %v487 = vsel %vm239, %v484, %v474
        %v488 = vsel %vm239, %v486, %v475
        %491 = vrot.lane.b32.xlu0 %v487, 127
        %v492 = vpop.permute.xlu0 %491
        %493 = vrot.lane.b32.xlu0 %v488, 127
        %v494 = vpop.permute.xlu0 %493
        %497 = vrot.lane.b32.xlu0 %v487, 113
        %v498 = vpop.permute.xlu0 %497
        %499 = vrot.lane.b32.xlu0 %v488, 113
        %v500 = vpop.permute.xlu0 %499
        %v503 = vsel %vm253, %v492, %v498
        %v504 = vsel %vm253, %v494, %v500
        %v505 = vsel %vm271, %v498, %v492
        %v506 = vsel %vm271, %v500, %v494
        %v507 = vadd.f32 %v474, %v503
        %v508 = vadd.f32 %v475, %v504
        %v509 = vadd.f32 %v507, %v505
        %v510 = vadd.f32 %v508, %v506
        %511 = vrot.lane.b32.xlu0 %v476, 16
        %v512 = vpop.permute.xlu0 %511
        %v513 = vsel %vm239, %v512, %v476
        %514 = vrot.lane.b32.xlu0 %v513, 16
        %v515 = vpop.permute.xlu0 %514
        %v516 = vsel %vm239, %v515, %v476
        %518 = vrot.lane.b32.xlu0 %v516, 127
        %v519 = vpop.permute.xlu0 %518
        %521 = vrot.lane.b32.xlu0 %v516, 113
        %v522 = vpop.permute.xlu0 %521
        %v524 = vsel %vm253, %v519, %v522
        %v525 = vsel %vm271, %v522, %v519
        %v526 = vadd.f32 %v476, %v524
        %v527 = vadd.f32 %v526, %v525
        %v528 = vrot.slane %v509, 7
        %v529 = vrot.slane %v510, 7
        %v530 = vsel %vm297, %v528, %v529
        %v531 = vsel %vm297, %v529, %v528
        %v532 = vrot.slane %v509, 1
        %v533 = vrot.slane %v510, 1
        %v534 = vsel %vm302, %v532, %v533
        %v535 = vsel %vm302, %v533, %v532
        %v536 = vperm.slane %v527, 0
        %v537 = vsel %vm307, %v536, %v531
        %v538 = vsel %vm308, %v536, %v530
        %v539 = vperm.slane %v527, 1
        %v540 = vsel %vm314, %v539, %v534
        %v541 = vsel %vm315, %v539, %v535
        %v542 = vadd.f32 %v509, %v537
        %v543 = vadd.f32 %v510, %v538
        %v544 = vadd.f32 %v542, %v540
        %v545 = vadd.f32 %v543, %v541
        %v546 = vmul.f32 %v544, 0.11111111
        %v547 = vmul.f32 %v545, 0.11111111
        %v548 = vmul.f32 %v394, %v394
        %v549 = vmul.f32 %v395, %v395
        %v550 = vsub.f32 %v546, %v548
        %v551 = vsub.f32 %v547, %v549
        %v552 = vmul.f32 %v222, %v224
        %v553 = vmul.f32 %v223, %v225
        %v554 = vmul.f32 %v234, %v238
        %555 = vrot.lane.b32.xlu0 %v552, 16
        %v556 = vpop.permute.xlu0 %555
        %v557 = vsel %vm239, %v556, %v552
        %558 = vrot.lane.b32.xlu0 %v553, 16
        %v559 = vpop.permute.xlu0 %558
        %v560 = vsel %vm239, %v559, %v553
        %561 = vrot.lane.b32.xlu0 %v557, 16
        %v562 = vpop.permute.xlu0 %561
        %563 = vrot.lane.b32.xlu0 %v560, 16
        %v564 = vpop.permute.xlu0 %563
        %v565 = vsel %vm239, %v562, %v552
        %v566 = vsel %vm239, %v564, %v553
        %569 = vrot.lane.b32.xlu0 %v565, 127
        %v570 = vpop.permute.xlu0 %569
        %571 = vrot.lane.b32.xlu0 %v566, 127
        %v572 = vpop.permute.xlu0 %571
        %575 = vrot.lane.b32.xlu0 %v565, 113
        %v576 = vpop.permute.xlu0 %575
        %577 = vrot.lane.b32.xlu0 %v566, 113
        %v578 = vpop.permute.xlu0 %577
        %v581 = vsel %vm253, %v570, %v576
        %v582 = vsel %vm253, %v572, %v578
        %v583 = vsel %vm271, %v576, %v570
        %v584 = vsel %vm271, %v578, %v572
        %v585 = vadd.f32 %v552, %v581
        %v586 = vadd.f32 %v553, %v582
        %v587 = vadd.f32 %v585, %v583
        %v588 = vadd.f32 %v586, %v584
        %589 = vrot.lane.b32.xlu0 %v554, 16
        %v590 = vpop.permute.xlu0 %589
        %v591 = vsel %vm239, %v590, %v554
        %592 = vrot.lane.b32.xlu0 %v591, 16
        %v593 = vpop.permute.xlu0 %592
        %v594 = vsel %vm239, %v593, %v554
        %596 = vrot.lane.b32.xlu0 %v594, 127
        %v597 = vpop.permute.xlu0 %596
        %599 = vrot.lane.b32.xlu0 %v594, 113
        %v600 = vpop.permute.xlu0 %599
        %v602 = vsel %vm253, %v597, %v600
        %v603 = vsel %vm271, %v600, %v597
        %v604 = vadd.f32 %v554, %v602
        %v605 = vadd.f32 %v604, %v603
        %v606 = vrot.slane %v587, 7
        %v607 = vrot.slane %v588, 7
        %v608 = vsel %vm297, %v606, %v607
        %v609 = vsel %vm297, %v607, %v606
        %v610 = vrot.slane %v587, 1
        %v611 = vrot.slane %v588, 1
        %v612 = vsel %vm302, %v610, %v611
        %v613 = vsel %vm302, %v611, %v610
        %v614 = vperm.slane %v605, 0
        %v615 = vsel %vm307, %v614, %v609
        %v616 = vsel %vm308, %v614, %v608
        %v617 = vperm.slane %v605, 1
        %v618 = vsel %vm314, %v617, %v612
        %v619 = vsel %vm315, %v617, %v613
        %v620 = vadd.f32 %v587, %v615
        %v621 = vadd.f32 %v588, %v616
        %v622 = vadd.f32 %v620, %v618
        %v623 = vadd.f32 %v621, %v619
        %v624 = vmul.f32 %v622, 0.11111111
        %v625 = vmul.f32 %v623, 0.11111111
        %v626 = vmul.f32 %v323, %v394
        %v627 = vmul.f32 %v324, %v395
        %v628 = vsub.f32 %v624, %v626
        %v629 = vsub.f32 %v625, %v627
        %v630 = vmul.f32 %v323, 2.0
        %v631 = vmul.f32 %v324, 2.0
        %v632 = vmul.f32 %v630, %v394
        %v633 = vmul.f32 %v631, %v395
        %v634 = vadd.f32 %v632, 0.0001
        %v635 = vadd.f32 %v633, 0.0001
        %v636 = vmul.f32 %v628, 2.0
        %v637 = vmul.f32 %v629, 2.0
        %v638 = vadd.f32 %v636, 0.0009
        %v639 = vadd.f32 %v637, 0.0009
        %v640 = vmul.f32 %v634, %v638
        %v641 = vmul.f32 %v635, %v639
        %v642 = vadd.f32 %v470, %v548
        %v643 = vadd.f32 %v471, %v549
        %v644 = vadd.f32 %v642, 0.0001
        %v645 = vadd.f32 %v643, 0.0001
        %v646 = vadd.f32 %v472, %v550
        %v647 = vadd.f32 %v473, %v551
        %v648 = vadd.f32 %v646, 0.0009
        %v649 = vadd.f32 %v647, 0.0009
        %v650 = vmul.f32 %v644, %v648
        %v651 = vmul.f32 %v645, %v649
        %v652 = vrcp.pop %v650
        %v653 = vrcp.pop %v651
        %v654 = vmul.f32 %v640, %v652
        %v655 = vmul.f32 %v641, %v653
        %v656 = vsub.f32 1.0, %v654
        %v657 = vsub.f32 1.0, %v655
        %v658 = vmul.f32 %v656, 0.5
        %v659 = vmul.f32 %v657, 0.5
        %v660 = vmax.f32 %v658, 0.0
        %v661 = vmax.f32 %v659, 0.0
        %v662 = vmin.f32 %v660, 1.0
        %v663 = vmin.f32 %v661, 1.0
        %vm664 = vcmask 130048
        %665 = vst.msk [vmem:[%s207] sm:$0xff] %vm664, %v662
        %666 = vst.msk [vmem:[%s207 + $0x8] sm:$0xff] %vm664, %v663
        %s667 = scalar_lea.vmem %s171, 16 [#allocation2]
        %v668 = vld [vmem:[%s667] sm:$0xff]
        %v669 = vld [vmem:[%s667 + $0x8] sm:$0xff]
        %s670 = scalar_lea.vmem %s181, 16 [#allocation5]
        %v671 = vld [vmem:[%s670] sm:$0xff]
        %v672 = vld [vmem:[%s670 + $0x8] sm:$0xff]
        %v673 = vld [vmem:[%s667 + $0x1] sm:$0x1]
        %v674 = vld [vmem:[%s667 + $0xe] sm:$0x1]
        %v675 = vld [vmem:[%s670 + $0x1] sm:$0x1]
        %v676 = vld [vmem:[%s670 + $0xe] sm:$0x1]
        %v678 = vrot.slane %v674, 7
        %v680 = vsel %vm233, %v673, %v678
        %v682 = vrot.slane %v676, 7
        %v684 = vsel %vm233, %v675, %v682
        %685 = vrot.lane.b32.xlu0 %v668, 16
        %v686 = vpop.permute.xlu0 %685
        %v687 = vsel %vm239, %v686, %v668
        %688 = vrot.lane.b32.xlu0 %v669, 16
        %v689 = vpop.permute.xlu0 %688
        %v690 = vsel %vm239, %v689, %v669
        %691 = vrot.lane.b32.xlu0 %v687, 16
        %v692 = vpop.permute.xlu0 %691
        %693 = vrot.lane.b32.xlu0 %v690, 16
        %v694 = vpop.permute.xlu0 %693
        %v695 = vsel %vm239, %v692, %v668
        %v696 = vsel %vm239, %v694, %v669
        %699 = vrot.lane.b32.xlu0 %v695, 127
        %v700 = vpop.permute.xlu0 %699
        %701 = vrot.lane.b32.xlu0 %v696, 127
        %v702 = vpop.permute.xlu0 %701
        %705 = vrot.lane.b32.xlu0 %v695, 113
        %v706 = vpop.permute.xlu0 %705
        %707 = vrot.lane.b32.xlu0 %v696, 113
        %v708 = vpop.permute.xlu0 %707
        %v711 = vsel %vm253, %v700, %v706
        %v712 = vsel %vm253, %v702, %v708
        %v713 = vsel %vm271, %v706, %v700
        %v714 = vsel %vm271, %v708, %v702
        %v715 = vadd.f32 %v668, %v711
        %v716 = vadd.f32 %v669, %v712
        %v717 = vadd.f32 %v715, %v713
        %v718 = vadd.f32 %v716, %v714
        %719 = vrot.lane.b32.xlu0 %v680, 16
        %v720 = vpop.permute.xlu0 %719
        %v721 = vsel %vm239, %v720, %v680
        %722 = vrot.lane.b32.xlu0 %v721, 16
        %v723 = vpop.permute.xlu0 %722
        %v724 = vsel %vm239, %v723, %v680
        %726 = vrot.lane.b32.xlu0 %v724, 127
        %v727 = vpop.permute.xlu0 %726
        %729 = vrot.lane.b32.xlu0 %v724, 113
        %v730 = vpop.permute.xlu0 %729
        %v732 = vsel %vm253, %v727, %v730
        %v733 = vsel %vm271, %v730, %v727
        %v734 = vadd.f32 %v680, %v732
        %v735 = vadd.f32 %v734, %v733
        %v736 = vrot.slane %v717, 7
        %v737 = vrot.slane %v718, 7
        %v738 = vsel %vm297, %v736, %v737
        %v739 = vsel %vm297, %v737, %v736
        %v740 = vrot.slane %v717, 1
        %v741 = vrot.slane %v718, 1
        %v742 = vsel %vm302, %v740, %v741
        %v743 = vsel %vm302, %v741, %v740
        %v744 = vperm.slane %v735, 0
        %v745 = vsel %vm307, %v744, %v739
        %v746 = vsel %vm308, %v744, %v738
        %v747 = vperm.slane %v735, 1
        %v748 = vsel %vm314, %v747, %v742
        %v749 = vsel %vm315, %v747, %v743
        %v750 = vadd.f32 %v717, %v745
        %v751 = vadd.f32 %v718, %v746
        %v752 = vadd.f32 %v750, %v748
        %v753 = vadd.f32 %v751, %v749
        %v754 = vmul.f32 %v752, 0.11111111
        %v755 = vmul.f32 %v753, 0.11111111
        %756 = vrot.lane.b32.xlu0 %v671, 16
        %v757 = vpop.permute.xlu0 %756
        %v758 = vsel %vm239, %v757, %v671
        %759 = vrot.lane.b32.xlu0 %v672, 16
        %v760 = vpop.permute.xlu0 %759
        %v761 = vsel %vm239, %v760, %v672
        %762 = vrot.lane.b32.xlu0 %v758, 16
        %v763 = vpop.permute.xlu0 %762
        %764 = vrot.lane.b32.xlu0 %v761, 16
        %v765 = vpop.permute.xlu0 %764
        %v766 = vsel %vm239, %v763, %v671
        %v767 = vsel %vm239, %v765, %v672
        %770 = vrot.lane.b32.xlu0 %v766, 127
        %v771 = vpop.permute.xlu0 %770
        %772 = vrot.lane.b32.xlu0 %v767, 127
        %v773 = vpop.permute.xlu0 %772
        %776 = vrot.lane.b32.xlu0 %v766, 113
        %v777 = vpop.permute.xlu0 %776
        %778 = vrot.lane.b32.xlu0 %v767, 113
        %v779 = vpop.permute.xlu0 %778
        %v782 = vsel %vm253, %v771, %v777
        %v783 = vsel %vm253, %v773, %v779
        %v784 = vsel %vm271, %v777, %v771
        %v785 = vsel %vm271, %v779, %v773
        %v786 = vadd.f32 %v671, %v782
        %v787 = vadd.f32 %v672, %v783
        %v788 = vadd.f32 %v786, %v784
        %v789 = vadd.f32 %v787, %v785
        %790 = vrot.lane.b32.xlu0 %v684, 16
        %v791 = vpop.permute.xlu0 %790
        %v792 = vsel %vm239, %v791, %v684
        %793 = vrot.lane.b32.xlu0 %v792, 16
        %v794 = vpop.permute.xlu0 %793
        %v795 = vsel %vm239, %v794, %v684
        %797 = vrot.lane.b32.xlu0 %v795, 127
        %v798 = vpop.permute.xlu0 %797
        %800 = vrot.lane.b32.xlu0 %v795, 113
        %v801 = vpop.permute.xlu0 %800
        %v803 = vsel %vm253, %v798, %v801
        %v804 = vsel %vm271, %v801, %v798
        %v805 = vadd.f32 %v684, %v803
        %v806 = vadd.f32 %v805, %v804
        %v807 = vrot.slane %v788, 7
        %v808 = vrot.slane %v789, 7
        %v809 = vsel %vm297, %v807, %v808
        %v810 = vsel %vm297, %v808, %v807
        %v811 = vrot.slane %v788, 1
        %v812 = vrot.slane %v789, 1
        %v813 = vsel %vm302, %v811, %v812
        %v814 = vsel %vm302, %v812, %v811
        %v815 = vperm.slane %v806, 0
        %v816 = vsel %vm307, %v815, %v810
        %v817 = vsel %vm308, %v815, %v809
        %v818 = vperm.slane %v806, 1
        %v819 = vsel %vm314, %v818, %v813
        %v820 = vsel %vm315, %v818, %v814
        %v821 = vadd.f32 %v788, %v816
        %v822 = vadd.f32 %v789, %v817
        %v823 = vadd.f32 %v821, %v819
        %v824 = vadd.f32 %v822, %v820
        %v825 = vmul.f32 %v823, 0.11111111
        %v826 = vmul.f32 %v824, 0.11111111
        %v827 = vmul.f32 %v668, %v668
        %v828 = vmul.f32 %v669, %v669
        %v829 = vmul.f32 %v680, %v680
        %830 = vrot.lane.b32.xlu0 %v827, 16
        %v831 = vpop.permute.xlu0 %830
        %v832 = vsel %vm239, %v831, %v827
        %833 = vrot.lane.b32.xlu0 %v828, 16
        %v834 = vpop.permute.xlu0 %833
        %v835 = vsel %vm239, %v834, %v828
        %836 = vrot.lane.b32.xlu0 %v832, 16
        %v837 = vpop.permute.xlu0 %836
        %838 = vrot.lane.b32.xlu0 %v835, 16
        %v839 = vpop.permute.xlu0 %838
        %v840 = vsel %vm239, %v837, %v827
        %v841 = vsel %vm239, %v839, %v828
        %844 = vrot.lane.b32.xlu0 %v840, 127
        %v845 = vpop.permute.xlu0 %844
        %846 = vrot.lane.b32.xlu0 %v841, 127
        %v847 = vpop.permute.xlu0 %846
        %850 = vrot.lane.b32.xlu0 %v840, 113
        %v851 = vpop.permute.xlu0 %850
        %852 = vrot.lane.b32.xlu0 %v841, 113
        %v853 = vpop.permute.xlu0 %852
        %v856 = vsel %vm253, %v845, %v851
        %v857 = vsel %vm253, %v847, %v853
        %v858 = vsel %vm271, %v851, %v845
        %v859 = vsel %vm271, %v853, %v847
        %v860 = vadd.f32 %v827, %v856
        %v861 = vadd.f32 %v828, %v857
        %v862 = vadd.f32 %v860, %v858
        %v863 = vadd.f32 %v861, %v859
        %864 = vrot.lane.b32.xlu0 %v829, 16
        %v865 = vpop.permute.xlu0 %864
        %v866 = vsel %vm239, %v865, %v829
        %867 = vrot.lane.b32.xlu0 %v866, 16
        %v868 = vpop.permute.xlu0 %867
        %v869 = vsel %vm239, %v868, %v829
        %871 = vrot.lane.b32.xlu0 %v869, 127
        %v872 = vpop.permute.xlu0 %871
        %874 = vrot.lane.b32.xlu0 %v869, 113
        %v875 = vpop.permute.xlu0 %874
        %v877 = vsel %vm253, %v872, %v875
        %v878 = vsel %vm271, %v875, %v872
        %v879 = vadd.f32 %v829, %v877
        %v880 = vadd.f32 %v879, %v878
        %v881 = vrot.slane %v862, 7
        %v882 = vrot.slane %v863, 7
        %v883 = vsel %vm297, %v881, %v882
        %v884 = vsel %vm297, %v882, %v881
        %v885 = vrot.slane %v862, 1
        %v886 = vrot.slane %v863, 1
        %v887 = vsel %vm302, %v885, %v886
        %v888 = vsel %vm302, %v886, %v885
        %v889 = vperm.slane %v880, 0
        %v890 = vsel %vm307, %v889, %v884
        %v891 = vsel %vm308, %v889, %v883
        %v892 = vperm.slane %v880, 1
        %v893 = vsel %vm314, %v892, %v887
        %v894 = vsel %vm315, %v892, %v888
        %v895 = vadd.f32 %v862, %v890
        %v896 = vadd.f32 %v863, %v891
        %v897 = vadd.f32 %v895, %v893
        %v898 = vadd.f32 %v896, %v894
        %v899 = vmul.f32 %v897, 0.11111111
        %v900 = vmul.f32 %v898, 0.11111111
        %v901 = vmul.f32 %v754, %v754
        %v902 = vmul.f32 %v755, %v755
        %v903 = vsub.f32 %v899, %v901
        %v904 = vsub.f32 %v900, %v902
        %v905 = vmul.f32 %v671, %v671
        %v906 = vmul.f32 %v672, %v672
        %v907 = vmul.f32 %v684, %v684
        %908 = vrot.lane.b32.xlu0 %v905, 16
        %v909 = vpop.permute.xlu0 %908
        %v910 = vsel %vm239, %v909, %v905
        %911 = vrot.lane.b32.xlu0 %v906, 16
        %v912 = vpop.permute.xlu0 %911
        %v913 = vsel %vm239, %v912, %v906
        %914 = vrot.lane.b32.xlu0 %v910, 16
        %v915 = vpop.permute.xlu0 %914
        %916 = vrot.lane.b32.xlu0 %v913, 16
        %v917 = vpop.permute.xlu0 %916
        %v918 = vsel %vm239, %v915, %v905
        %v919 = vsel %vm239, %v917, %v906
        %922 = vrot.lane.b32.xlu0 %v918, 127
        %v923 = vpop.permute.xlu0 %922
        %924 = vrot.lane.b32.xlu0 %v919, 127
        %v925 = vpop.permute.xlu0 %924
        %928 = vrot.lane.b32.xlu0 %v918, 113
        %v929 = vpop.permute.xlu0 %928
        %930 = vrot.lane.b32.xlu0 %v919, 113
        %v931 = vpop.permute.xlu0 %930
        %v934 = vsel %vm253, %v923, %v929
        %v935 = vsel %vm253, %v925, %v931
        %v936 = vsel %vm271, %v929, %v923
        %v937 = vsel %vm271, %v931, %v925
        %v938 = vadd.f32 %v905, %v934
        %v939 = vadd.f32 %v906, %v935
        %v940 = vadd.f32 %v938, %v936
        %v941 = vadd.f32 %v939, %v937
        %942 = vrot.lane.b32.xlu0 %v907, 16
        %v943 = vpop.permute.xlu0 %942
        %v944 = vsel %vm239, %v943, %v907
        %945 = vrot.lane.b32.xlu0 %v944, 16
        %v946 = vpop.permute.xlu0 %945
        %v947 = vsel %vm239, %v946, %v907
        %949 = vrot.lane.b32.xlu0 %v947, 127
        %v950 = vpop.permute.xlu0 %949
        %952 = vrot.lane.b32.xlu0 %v947, 113
        %v953 = vpop.permute.xlu0 %952
        %v955 = vsel %vm253, %v950, %v953
        %v956 = vsel %vm271, %v953, %v950
        %v957 = vadd.f32 %v907, %v955
        %v958 = vadd.f32 %v957, %v956
        %v959 = vrot.slane %v940, 7
        %v960 = vrot.slane %v941, 7
        %v961 = vsel %vm297, %v959, %v960
        %v962 = vsel %vm297, %v960, %v959
        %v963 = vrot.slane %v940, 1
        %v964 = vrot.slane %v941, 1
        %v965 = vsel %vm302, %v963, %v964
        %v966 = vsel %vm302, %v964, %v963
        %v967 = vperm.slane %v958, 0
        %v968 = vsel %vm307, %v967, %v962
        %v969 = vsel %vm308, %v967, %v961
        %v970 = vperm.slane %v958, 1
        %v971 = vsel %vm314, %v970, %v965
        %v972 = vsel %vm315, %v970, %v966
        %v973 = vadd.f32 %v940, %v968
        %v974 = vadd.f32 %v941, %v969
        %v975 = vadd.f32 %v973, %v971
        %v976 = vadd.f32 %v974, %v972
        %v977 = vmul.f32 %v975, 0.11111111
        %v978 = vmul.f32 %v976, 0.11111111
        %v979 = vmul.f32 %v825, %v825
        %v980 = vmul.f32 %v826, %v826
        %v981 = vsub.f32 %v977, %v979
        %v982 = vsub.f32 %v978, %v980
        %v983 = vmul.f32 %v668, %v671
        %v984 = vmul.f32 %v669, %v672
        %v985 = vmul.f32 %v680, %v684
        %986 = vrot.lane.b32.xlu0 %v983, 16
        %v987 = vpop.permute.xlu0 %986
        %v988 = vsel %vm239, %v987, %v983
        %989 = vrot.lane.b32.xlu0 %v984, 16
        %v990 = vpop.permute.xlu0 %989
        %v991 = vsel %vm239, %v990, %v984
        %992 = vrot.lane.b32.xlu0 %v988, 16
        %v993 = vpop.permute.xlu0 %992
        %994 = vrot.lane.b32.xlu0 %v991, 16
        %v995 = vpop.permute.xlu0 %994
        %v996 = vsel %vm239, %v993, %v983
        %v997 = vsel %vm239, %v995, %v984
        %1000 = vrot.lane.b32.xlu0 %v996, 127
        %v1001 = vpop.permute.xlu0 %1000
        %1002 = vrot.lane.b32.xlu0 %v997, 127
        %v1003 = vpop.permute.xlu0 %1002
        %1006 = vrot.lane.b32.xlu0 %v996, 113
        %v1007 = vpop.permute.xlu0 %1006
        %1008 = vrot.lane.b32.xlu0 %v997, 113
        %v1009 = vpop.permute.xlu0 %1008
        %v1012 = vsel %vm253, %v1001, %v1007
        %v1013 = vsel %vm253, %v1003, %v1009
        %v1014 = vsel %vm271, %v1007, %v1001
        %v1015 = vsel %vm271, %v1009, %v1003
        %v1016 = vadd.f32 %v983, %v1012
        %v1017 = vadd.f32 %v984, %v1013
        %v1018 = vadd.f32 %v1016, %v1014
        %v1019 = vadd.f32 %v1017, %v1015
        %1020 = vrot.lane.b32.xlu0 %v985, 16
        %v1021 = vpop.permute.xlu0 %1020
        %v1022 = vsel %vm239, %v1021, %v985
        %1023 = vrot.lane.b32.xlu0 %v1022, 16
        %v1024 = vpop.permute.xlu0 %1023
        %v1025 = vsel %vm239, %v1024, %v985
        %1027 = vrot.lane.b32.xlu0 %v1025, 127
        %v1028 = vpop.permute.xlu0 %1027
        %1030 = vrot.lane.b32.xlu0 %v1025, 113
        %v1031 = vpop.permute.xlu0 %1030
        %v1033 = vsel %vm253, %v1028, %v1031
        %v1034 = vsel %vm271, %v1031, %v1028
        %v1035 = vadd.f32 %v985, %v1033
        %v1036 = vadd.f32 %v1035, %v1034
        %v1037 = vrot.slane %v1018, 7
        %v1038 = vrot.slane %v1019, 7
        %v1039 = vsel %vm297, %v1037, %v1038
        %v1040 = vsel %vm297, %v1038, %v1037
        %v1041 = vrot.slane %v1018, 1
        %v1042 = vrot.slane %v1019, 1
        %v1043 = vsel %vm302, %v1041, %v1042
        %v1044 = vsel %vm302, %v1042, %v1041
        %v1045 = vperm.slane %v1036, 0
        %v1046 = vsel %vm307, %v1045, %v1040
        %v1047 = vsel %vm308, %v1045, %v1039
        %v1048 = vperm.slane %v1036, 1
        %v1049 = vsel %vm314, %v1048, %v1043
        %v1050 = vsel %vm315, %v1048, %v1044
        %v1051 = vadd.f32 %v1018, %v1046
        %v1052 = vadd.f32 %v1019, %v1047
        %v1053 = vadd.f32 %v1051, %v1049
        %v1054 = vadd.f32 %v1052, %v1050
        %v1055 = vmul.f32 %v1053, 0.11111111
        %v1056 = vmul.f32 %v1054, 0.11111111
        %v1057 = vmul.f32 %v754, %v825
        %v1058 = vmul.f32 %v755, %v826
        %v1059 = vsub.f32 %v1055, %v1057
        %v1060 = vsub.f32 %v1056, %v1058
        %v1061 = vmul.f32 %v754, 2.0
        %v1062 = vmul.f32 %v755, 2.0
        %v1063 = vmul.f32 %v1061, %v825
        %v1064 = vmul.f32 %v1062, %v826
        %v1065 = vadd.f32 %v1063, 0.0001
        %v1066 = vadd.f32 %v1064, 0.0001
        %v1067 = vmul.f32 %v1059, 2.0
        %v1068 = vmul.f32 %v1060, 2.0
        %v1069 = vadd.f32 %v1067, 0.0009
        %v1070 = vadd.f32 %v1068, 0.0009
        %v1071 = vmul.f32 %v1065, %v1069
        %v1072 = vmul.f32 %v1066, %v1070
        %v1073 = vadd.f32 %v901, %v979
        %v1074 = vadd.f32 %v902, %v980
        %v1075 = vadd.f32 %v1073, 0.0001
        %v1076 = vadd.f32 %v1074, 0.0001
        %v1077 = vadd.f32 %v903, %v981
        %v1078 = vadd.f32 %v904, %v982
        %v1079 = vadd.f32 %v1077, 0.0009
        %v1080 = vadd.f32 %v1078, 0.0009
        %v1081 = vmul.f32 %v1075, %v1079
        %v1082 = vmul.f32 %v1076, %v1080
        %v1083 = vrcp.pop %v1081
        %v1084 = vrcp.pop %v1082
        %v1085 = vmul.f32 %v1071, %v1083
        %v1086 = vmul.f32 %v1072, %v1084
        %v1087 = vsub.f32 1.0, %v1085
        %v1088 = vsub.f32 1.0, %v1086
        %v1089 = vmul.f32 %v1087, 0.5
        %v1090 = vmul.f32 %v1088, 0.5
        %v1091 = vmax.f32 %v1089, 0.0
        %v1092 = vmax.f32 %v1090, 0.0
        %v1093 = vmin.f32 %v1091, 1.0
        %v1094 = vmin.f32 %v1092, 1.0
        %s1095 = scalar_lea.vmem %s207, 16 [#allocation7]
        %1096 = vst.msk [vmem:[%s1095] sm:$0xff] %vm664, %v1093
        %1097 = vst.msk [vmem:[%s1095 + $0x8] sm:$0xff] %vm664, %v1094
        %s1098 = scalar_lea.vmem %s171, 32 [#allocation2]
        %v1099 = vld [vmem:[%s1098] sm:$0xff]
        %v1100 = vld [vmem:[%s1098 + $0x8] sm:$0xff]
        %s1101 = scalar_lea.vmem %s181, 32 [#allocation5]
        %v1102 = vld [vmem:[%s1101] sm:$0xff]
        %v1103 = vld [vmem:[%s1101 + $0x8] sm:$0xff]
        %v1104 = vld [vmem:[%s1098 + $0x1] sm:$0x1]
        %v1105 = vld [vmem:[%s1098 + $0xe] sm:$0x1]
        %v1106 = vld [vmem:[%s1101 + $0x1] sm:$0x1]
        %v1107 = vld [vmem:[%s1101 + $0xe] sm:$0x1]
        %v1109 = vrot.slane %v1105, 7
        %v1111 = vsel %vm233, %v1104, %v1109
        %v1113 = vrot.slane %v1107, 7
        %v1115 = vsel %vm233, %v1106, %v1113
        %1116 = vrot.lane.b32.xlu0 %v1099, 16
        %v1117 = vpop.permute.xlu0 %1116
        %v1118 = vsel %vm239, %v1117, %v1099
        %1119 = vrot.lane.b32.xlu0 %v1100, 16
        %v1120 = vpop.permute.xlu0 %1119
        %v1121 = vsel %vm239, %v1120, %v1100
        %1122 = vrot.lane.b32.xlu0 %v1118, 16
        %v1123 = vpop.permute.xlu0 %1122
        %1124 = vrot.lane.b32.xlu0 %v1121, 16
        %v1125 = vpop.permute.xlu0 %1124
        %v1126 = vsel %vm239, %v1123, %v1099
        %v1127 = vsel %vm239, %v1125, %v1100
        %1130 = vrot.lane.b32.xlu0 %v1126, 127
        %v1131 = vpop.permute.xlu0 %1130
        %1132 = vrot.lane.b32.xlu0 %v1127, 127
        %v1133 = vpop.permute.xlu0 %1132
        %1136 = vrot.lane.b32.xlu0 %v1126, 113
        %v1137 = vpop.permute.xlu0 %1136
        %1138 = vrot.lane.b32.xlu0 %v1127, 113
        %v1139 = vpop.permute.xlu0 %1138
        %v1142 = vsel %vm253, %v1131, %v1137
        %v1143 = vsel %vm253, %v1133, %v1139
        %v1144 = vsel %vm271, %v1137, %v1131
        %v1145 = vsel %vm271, %v1139, %v1133
        %v1146 = vadd.f32 %v1099, %v1142
        %v1147 = vadd.f32 %v1100, %v1143
        %v1148 = vadd.f32 %v1146, %v1144
        %v1149 = vadd.f32 %v1147, %v1145
        %1150 = vrot.lane.b32.xlu0 %v1111, 16
        %v1151 = vpop.permute.xlu0 %1150
        %v1152 = vsel %vm239, %v1151, %v1111
        %1153 = vrot.lane.b32.xlu0 %v1152, 16
        %v1154 = vpop.permute.xlu0 %1153
        %v1155 = vsel %vm239, %v1154, %v1111
        %1157 = vrot.lane.b32.xlu0 %v1155, 127
        %v1158 = vpop.permute.xlu0 %1157
        %1160 = vrot.lane.b32.xlu0 %v1155, 113
        %v1161 = vpop.permute.xlu0 %1160
        %v1163 = vsel %vm253, %v1158, %v1161
        %v1164 = vsel %vm271, %v1161, %v1158
        %v1165 = vadd.f32 %v1111, %v1163
        %v1166 = vadd.f32 %v1165, %v1164
        %v1167 = vrot.slane %v1148, 7
        %v1168 = vrot.slane %v1149, 7
        %v1169 = vsel %vm297, %v1167, %v1168
        %v1170 = vsel %vm297, %v1168, %v1167
        %v1171 = vrot.slane %v1148, 1
        %v1172 = vrot.slane %v1149, 1
        %v1173 = vsel %vm302, %v1171, %v1172
        %v1174 = vsel %vm302, %v1172, %v1171
        %v1175 = vperm.slane %v1166, 0
        %v1176 = vsel %vm307, %v1175, %v1170
        %v1177 = vsel %vm308, %v1175, %v1169
        %v1178 = vperm.slane %v1166, 1
        %v1179 = vsel %vm314, %v1178, %v1173
        %v1180 = vsel %vm315, %v1178, %v1174
        %v1181 = vadd.f32 %v1148, %v1176
        %v1182 = vadd.f32 %v1149, %v1177
        %v1183 = vadd.f32 %v1181, %v1179
        %v1184 = vadd.f32 %v1182, %v1180
        %v1185 = vmul.f32 %v1183, 0.11111111
        %v1186 = vmul.f32 %v1184, 0.11111111
        %1187 = vrot.lane.b32.xlu0 %v1102, 16
        %v1188 = vpop.permute.xlu0 %1187
        %v1189 = vsel %vm239, %v1188, %v1102
        %1190 = vrot.lane.b32.xlu0 %v1103, 16
        %v1191 = vpop.permute.xlu0 %1190
        %v1192 = vsel %vm239, %v1191, %v1103
        %1193 = vrot.lane.b32.xlu0 %v1189, 16
        %v1194 = vpop.permute.xlu0 %1193
        %1195 = vrot.lane.b32.xlu0 %v1192, 16
        %v1196 = vpop.permute.xlu0 %1195
        %v1197 = vsel %vm239, %v1194, %v1102
        %v1198 = vsel %vm239, %v1196, %v1103
        %1201 = vrot.lane.b32.xlu0 %v1197, 127
        %v1202 = vpop.permute.xlu0 %1201
        %1203 = vrot.lane.b32.xlu0 %v1198, 127
        %v1204 = vpop.permute.xlu0 %1203
        %1207 = vrot.lane.b32.xlu0 %v1197, 113
        %v1208 = vpop.permute.xlu0 %1207
        %1209 = vrot.lane.b32.xlu0 %v1198, 113
        %v1210 = vpop.permute.xlu0 %1209
        %v1213 = vsel %vm253, %v1202, %v1208
        %v1214 = vsel %vm253, %v1204, %v1210
        %v1215 = vsel %vm271, %v1208, %v1202
        %v1216 = vsel %vm271, %v1210, %v1204
        %v1217 = vadd.f32 %v1102, %v1213
        %v1218 = vadd.f32 %v1103, %v1214
        %v1219 = vadd.f32 %v1217, %v1215
        %v1220 = vadd.f32 %v1218, %v1216
        %1221 = vrot.lane.b32.xlu0 %v1115, 16
        %v1222 = vpop.permute.xlu0 %1221
        %v1223 = vsel %vm239, %v1222, %v1115
        %1224 = vrot.lane.b32.xlu0 %v1223, 16
        %v1225 = vpop.permute.xlu0 %1224
        %v1226 = vsel %vm239, %v1225, %v1115
        %1228 = vrot.lane.b32.xlu0 %v1226, 127
        %v1229 = vpop.permute.xlu0 %1228
        %1231 = vrot.lane.b32.xlu0 %v1226, 113
        %v1232 = vpop.permute.xlu0 %1231
        %v1234 = vsel %vm253, %v1229, %v1232
        %v1235 = vsel %vm271, %v1232, %v1229
        %v1236 = vadd.f32 %v1115, %v1234
        %v1237 = vadd.f32 %v1236, %v1235
        %v1238 = vrot.slane %v1219, 7
        %v1239 = vrot.slane %v1220, 7
        %v1240 = vsel %vm297, %v1238, %v1239
        %v1241 = vsel %vm297, %v1239, %v1238
        %v1242 = vrot.slane %v1219, 1
        %v1243 = vrot.slane %v1220, 1
        %v1244 = vsel %vm302, %v1242, %v1243
        %v1245 = vsel %vm302, %v1243, %v1242
        %v1246 = vperm.slane %v1237, 0
        %v1247 = vsel %vm307, %v1246, %v1241
        %v1248 = vsel %vm308, %v1246, %v1240
        %v1249 = vperm.slane %v1237, 1
        %v1250 = vsel %vm314, %v1249, %v1244
        %v1251 = vsel %vm315, %v1249, %v1245
        %v1252 = vadd.f32 %v1219, %v1247
        %v1253 = vadd.f32 %v1220, %v1248
        %v1254 = vadd.f32 %v1252, %v1250
        %v1255 = vadd.f32 %v1253, %v1251
        %v1256 = vmul.f32 %v1254, 0.11111111
        %v1257 = vmul.f32 %v1255, 0.11111111
        %v1258 = vmul.f32 %v1099, %v1099
        %v1259 = vmul.f32 %v1100, %v1100
        %v1260 = vmul.f32 %v1111, %v1111
        %1261 = vrot.lane.b32.xlu0 %v1258, 16
        %v1262 = vpop.permute.xlu0 %1261
        %v1263 = vsel %vm239, %v1262, %v1258
        %1264 = vrot.lane.b32.xlu0 %v1259, 16
        %v1265 = vpop.permute.xlu0 %1264
        %v1266 = vsel %vm239, %v1265, %v1259
        %1267 = vrot.lane.b32.xlu0 %v1263, 16
        %v1268 = vpop.permute.xlu0 %1267
        %1269 = vrot.lane.b32.xlu0 %v1266, 16
        %v1270 = vpop.permute.xlu0 %1269
        %v1271 = vsel %vm239, %v1268, %v1258
        %v1272 = vsel %vm239, %v1270, %v1259
        %1275 = vrot.lane.b32.xlu0 %v1271, 127
        %v1276 = vpop.permute.xlu0 %1275
        %1277 = vrot.lane.b32.xlu0 %v1272, 127
        %v1278 = vpop.permute.xlu0 %1277
        %1281 = vrot.lane.b32.xlu0 %v1271, 113
        %v1282 = vpop.permute.xlu0 %1281
        %1283 = vrot.lane.b32.xlu0 %v1272, 113
        %v1284 = vpop.permute.xlu0 %1283
        %v1287 = vsel %vm253, %v1276, %v1282
        %v1288 = vsel %vm253, %v1278, %v1284
        %v1289 = vsel %vm271, %v1282, %v1276
        %v1290 = vsel %vm271, %v1284, %v1278
        %v1291 = vadd.f32 %v1258, %v1287
        %v1292 = vadd.f32 %v1259, %v1288
        %v1293 = vadd.f32 %v1291, %v1289
        %v1294 = vadd.f32 %v1292, %v1290
        %1295 = vrot.lane.b32.xlu0 %v1260, 16
        %v1296 = vpop.permute.xlu0 %1295
        %v1297 = vsel %vm239, %v1296, %v1260
        %1298 = vrot.lane.b32.xlu0 %v1297, 16
        %v1299 = vpop.permute.xlu0 %1298
        %v1300 = vsel %vm239, %v1299, %v1260
        %1302 = vrot.lane.b32.xlu0 %v1300, 127
        %v1303 = vpop.permute.xlu0 %1302
        %1305 = vrot.lane.b32.xlu0 %v1300, 113
        %v1306 = vpop.permute.xlu0 %1305
        %v1308 = vsel %vm253, %v1303, %v1306
        %v1309 = vsel %vm271, %v1306, %v1303
        %v1310 = vadd.f32 %v1260, %v1308
        %v1311 = vadd.f32 %v1310, %v1309
        %v1312 = vrot.slane %v1293, 7
        %v1313 = vrot.slane %v1294, 7
        %v1314 = vsel %vm297, %v1312, %v1313
        %v1315 = vsel %vm297, %v1313, %v1312
        %v1316 = vrot.slane %v1293, 1
        %v1317 = vrot.slane %v1294, 1
        %v1318 = vsel %vm302, %v1316, %v1317
        %v1319 = vsel %vm302, %v1317, %v1316
        %v1320 = vperm.slane %v1311, 0
        %v1321 = vsel %vm307, %v1320, %v1315
        %v1322 = vsel %vm308, %v1320, %v1314
        %v1323 = vperm.slane %v1311, 1
        %v1324 = vsel %vm314, %v1323, %v1318
        %v1325 = vsel %vm315, %v1323, %v1319
        %v1326 = vadd.f32 %v1293, %v1321
        %v1327 = vadd.f32 %v1294, %v1322
        %v1328 = vadd.f32 %v1326, %v1324
        %v1329 = vadd.f32 %v1327, %v1325
        %v1330 = vmul.f32 %v1328, 0.11111111
        %v1331 = vmul.f32 %v1329, 0.11111111
        %v1332 = vmul.f32 %v1185, %v1185
        %v1333 = vmul.f32 %v1186, %v1186
        %v1334 = vsub.f32 %v1330, %v1332
        %v1335 = vsub.f32 %v1331, %v1333
        %v1336 = vmul.f32 %v1102, %v1102
        %v1337 = vmul.f32 %v1103, %v1103
        %v1338 = vmul.f32 %v1115, %v1115
        %1339 = vrot.lane.b32.xlu0 %v1336, 16
        %v1340 = vpop.permute.xlu0 %1339
        %v1341 = vsel %vm239, %v1340, %v1336
        %1342 = vrot.lane.b32.xlu0 %v1337, 16
        %v1343 = vpop.permute.xlu0 %1342
        %v1344 = vsel %vm239, %v1343, %v1337
        %1345 = vrot.lane.b32.xlu0 %v1341, 16
        %v1346 = vpop.permute.xlu0 %1345
        %1347 = vrot.lane.b32.xlu0 %v1344, 16
        %v1348 = vpop.permute.xlu0 %1347
        %v1349 = vsel %vm239, %v1346, %v1336
        %v1350 = vsel %vm239, %v1348, %v1337
        %1353 = vrot.lane.b32.xlu0 %v1349, 127
        %v1354 = vpop.permute.xlu0 %1353
        %1355 = vrot.lane.b32.xlu0 %v1350, 127
        %v1356 = vpop.permute.xlu0 %1355
        %1359 = vrot.lane.b32.xlu0 %v1349, 113
        %v1360 = vpop.permute.xlu0 %1359
        %1361 = vrot.lane.b32.xlu0 %v1350, 113
        %v1362 = vpop.permute.xlu0 %1361
        %v1365 = vsel %vm253, %v1354, %v1360
        %v1366 = vsel %vm253, %v1356, %v1362
        %v1367 = vsel %vm271, %v1360, %v1354
        %v1368 = vsel %vm271, %v1362, %v1356
        %v1369 = vadd.f32 %v1336, %v1365
        %v1370 = vadd.f32 %v1337, %v1366
        %v1371 = vadd.f32 %v1369, %v1367
        %v1372 = vadd.f32 %v1370, %v1368
        %1373 = vrot.lane.b32.xlu0 %v1338, 16
        %v1374 = vpop.permute.xlu0 %1373
        %v1375 = vsel %vm239, %v1374, %v1338
        %1376 = vrot.lane.b32.xlu0 %v1375, 16
        %v1377 = vpop.permute.xlu0 %1376
        %v1378 = vsel %vm239, %v1377, %v1338
        %1380 = vrot.lane.b32.xlu0 %v1378, 127
        %v1381 = vpop.permute.xlu0 %1380
        %1383 = vrot.lane.b32.xlu0 %v1378, 113
        %v1384 = vpop.permute.xlu0 %1383
        %v1386 = vsel %vm253, %v1381, %v1384
        %v1387 = vsel %vm271, %v1384, %v1381
        %v1388 = vadd.f32 %v1338, %v1386
        %v1389 = vadd.f32 %v1388, %v1387
        %v1390 = vrot.slane %v1371, 7
        %v1391 = vrot.slane %v1372, 7
        %v1392 = vsel %vm297, %v1390, %v1391
        %v1393 = vsel %vm297, %v1391, %v1390
        %v1394 = vrot.slane %v1371, 1
        %v1395 = vrot.slane %v1372, 1
        %v1396 = vsel %vm302, %v1394, %v1395
        %v1397 = vsel %vm302, %v1395, %v1394
        %v1398 = vperm.slane %v1389, 0
        %v1399 = vsel %vm307, %v1398, %v1393
        %v1400 = vsel %vm308, %v1398, %v1392
        %v1401 = vperm.slane %v1389, 1
        %v1402 = vsel %vm314, %v1401, %v1396
        %v1403 = vsel %vm315, %v1401, %v1397
        %v1404 = vadd.f32 %v1371, %v1399
        %v1405 = vadd.f32 %v1372, %v1400
        %v1406 = vadd.f32 %v1404, %v1402
        %v1407 = vadd.f32 %v1405, %v1403
        %v1408 = vmul.f32 %v1406, 0.11111111
        %v1409 = vmul.f32 %v1407, 0.11111111
        %v1410 = vmul.f32 %v1256, %v1256
        %v1411 = vmul.f32 %v1257, %v1257
        %v1412 = vsub.f32 %v1408, %v1410
        %v1413 = vsub.f32 %v1409, %v1411
        %v1414 = vmul.f32 %v1099, %v1102
        %v1415 = vmul.f32 %v1100, %v1103
        %v1416 = vmul.f32 %v1111, %v1115
        %1417 = vrot.lane.b32.xlu0 %v1414, 16
        %v1418 = vpop.permute.xlu0 %1417
        %v1419 = vsel %vm239, %v1418, %v1414
        %1420 = vrot.lane.b32.xlu0 %v1415, 16
        %v1421 = vpop.permute.xlu0 %1420
        %v1422 = vsel %vm239, %v1421, %v1415
        %1423 = vrot.lane.b32.xlu0 %v1419, 16
        %v1424 = vpop.permute.xlu0 %1423
        %1425 = vrot.lane.b32.xlu0 %v1422, 16
        %v1426 = vpop.permute.xlu0 %1425
        %v1427 = vsel %vm239, %v1424, %v1414
        %v1428 = vsel %vm239, %v1426, %v1415
        %1431 = vrot.lane.b32.xlu0 %v1427, 127
        %v1432 = vpop.permute.xlu0 %1431
        %1433 = vrot.lane.b32.xlu0 %v1428, 127
        %v1434 = vpop.permute.xlu0 %1433
        %1437 = vrot.lane.b32.xlu0 %v1427, 113
        %v1438 = vpop.permute.xlu0 %1437
        %1439 = vrot.lane.b32.xlu0 %v1428, 113
        %v1440 = vpop.permute.xlu0 %1439
        %v1443 = vsel %vm253, %v1432, %v1438
        %v1444 = vsel %vm253, %v1434, %v1440
        %v1445 = vsel %vm271, %v1438, %v1432
        %v1446 = vsel %vm271, %v1440, %v1434
        %v1447 = vadd.f32 %v1414, %v1443
        %v1448 = vadd.f32 %v1415, %v1444
        %v1449 = vadd.f32 %v1447, %v1445
        %v1450 = vadd.f32 %v1448, %v1446
        %1451 = vrot.lane.b32.xlu0 %v1416, 16
        %v1452 = vpop.permute.xlu0 %1451
        %v1453 = vsel %vm239, %v1452, %v1416
        %1454 = vrot.lane.b32.xlu0 %v1453, 16
        %v1455 = vpop.permute.xlu0 %1454
        %v1456 = vsel %vm239, %v1455, %v1416
        %1458 = vrot.lane.b32.xlu0 %v1456, 127
        %v1459 = vpop.permute.xlu0 %1458
        %1461 = vrot.lane.b32.xlu0 %v1456, 113
        %v1462 = vpop.permute.xlu0 %1461
        %v1464 = vsel %vm253, %v1459, %v1462
        %v1465 = vsel %vm271, %v1462, %v1459
        %v1466 = vadd.f32 %v1416, %v1464
        %v1467 = vadd.f32 %v1466, %v1465
        %v1468 = vrot.slane %v1449, 7
        %v1469 = vrot.slane %v1450, 7
        %v1470 = vsel %vm297, %v1468, %v1469
        %v1471 = vsel %vm297, %v1469, %v1468
        %v1472 = vrot.slane %v1449, 1
        %v1473 = vrot.slane %v1450, 1
        %v1474 = vsel %vm302, %v1472, %v1473
        %v1475 = vsel %vm302, %v1473, %v1472
        %v1476 = vperm.slane %v1467, 0
        %v1477 = vsel %vm307, %v1476, %v1471
        %v1478 = vsel %vm308, %v1476, %v1470
        %v1479 = vperm.slane %v1467, 1
        %v1480 = vsel %vm314, %v1479, %v1474
        %v1481 = vsel %vm315, %v1479, %v1475
        %v1482 = vadd.f32 %v1449, %v1477
        %v1483 = vadd.f32 %v1450, %v1478
        %v1484 = vadd.f32 %v1482, %v1480
        %v1485 = vadd.f32 %v1483, %v1481
        %v1486 = vmul.f32 %v1484, 0.11111111
        %v1487 = vmul.f32 %v1485, 0.11111111
        %v1488 = vmul.f32 %v1185, %v1256
        %v1489 = vmul.f32 %v1186, %v1257
        %v1490 = vsub.f32 %v1486, %v1488
        %v1491 = vsub.f32 %v1487, %v1489
        %v1492 = vmul.f32 %v1185, 2.0
        %v1493 = vmul.f32 %v1186, 2.0
        %v1494 = vmul.f32 %v1492, %v1256
        %v1495 = vmul.f32 %v1493, %v1257
        %v1496 = vadd.f32 %v1494, 0.0001
        %v1497 = vadd.f32 %v1495, 0.0001
        %v1498 = vmul.f32 %v1490, 2.0
        %v1499 = vmul.f32 %v1491, 2.0
        %v1500 = vadd.f32 %v1498, 0.0009
        %v1501 = vadd.f32 %v1499, 0.0009
        %v1502 = vmul.f32 %v1496, %v1500
        %v1503 = vmul.f32 %v1497, %v1501
        %v1504 = vadd.f32 %v1332, %v1410
        %v1505 = vadd.f32 %v1333, %v1411
        %v1506 = vadd.f32 %v1504, 0.0001
        %v1507 = vadd.f32 %v1505, 0.0001
        %v1508 = vadd.f32 %v1334, %v1412
        %v1509 = vadd.f32 %v1335, %v1413
        %v1510 = vadd.f32 %v1508, 0.0009
        %v1511 = vadd.f32 %v1509, 0.0009
        %v1512 = vmul.f32 %v1506, %v1510
        %v1513 = vmul.f32 %v1507, %v1511
        %v1514 = vrcp.pop %v1512
        %v1515 = vrcp.pop %v1513
        %v1516 = vmul.f32 %v1502, %v1514
        %v1517 = vmul.f32 %v1503, %v1515
        %v1518 = vsub.f32 1.0, %v1516
        %v1519 = vsub.f32 1.0, %v1517
        %v1520 = vmul.f32 %v1518, 0.5
        %v1521 = vmul.f32 %v1519, 0.5
        %v1522 = vmax.f32 %v1520, 0.0
        %v1523 = vmax.f32 %v1521, 0.0
        %v1524 = vmin.f32 %v1522, 1.0
        %v1525 = vmin.f32 %v1523, 1.0
        %s1526 = scalar_lea.vmem %s207, 32 [#allocation7]
        %1527 = vst.msk [vmem:[%s1526] sm:$0xff] %vm664, %v1524
        %1528 = vst.msk [vmem:[%s1526 + $0x8] sm:$0xff] %vm664, %v1525
        %s1529 = scalar_lea.vmem %s171, 48 [#allocation2]
        %v1530 = vld [vmem:[%s1529] sm:$0xff]
        %v1531 = vld [vmem:[%s1529 + $0x8] sm:$0xff]
        %s1532 = scalar_lea.vmem %s181, 48 [#allocation5]
        %v1533 = vld [vmem:[%s1532] sm:$0xff]
        %v1534 = vld [vmem:[%s1532 + $0x8] sm:$0xff]
        %v1535 = vld [vmem:[%s1529 + $0x1] sm:$0x1]
        %v1536 = vld [vmem:[%s1529 + $0xe] sm:$0x1]
        %v1537 = vld [vmem:[%s1532 + $0x1] sm:$0x1]
        %v1538 = vld [vmem:[%s1532 + $0xe] sm:$0x1]
        %v1540 = vrot.slane %v1536, 7
        %v1542 = vsel %vm233, %v1535, %v1540
        %v1544 = vrot.slane %v1538, 7
        %v1546 = vsel %vm233, %v1537, %v1544
        %1547 = vrot.lane.b32.xlu0 %v1530, 16
        %v1548 = vpop.permute.xlu0 %1547
        %v1549 = vsel %vm239, %v1548, %v1530
        %1550 = vrot.lane.b32.xlu0 %v1531, 16
        %v1551 = vpop.permute.xlu0 %1550
        %v1552 = vsel %vm239, %v1551, %v1531
        %1553 = vrot.lane.b32.xlu0 %v1549, 16
        %v1554 = vpop.permute.xlu0 %1553
        %1555 = vrot.lane.b32.xlu0 %v1552, 16
        %v1556 = vpop.permute.xlu0 %1555
        %v1557 = vsel %vm239, %v1554, %v1530
        %v1558 = vsel %vm239, %v1556, %v1531
        %1561 = vrot.lane.b32.xlu0 %v1557, 127
        %v1562 = vpop.permute.xlu0 %1561
        %1563 = vrot.lane.b32.xlu0 %v1558, 127
        %v1564 = vpop.permute.xlu0 %1563
        %1567 = vrot.lane.b32.xlu0 %v1557, 113
        %v1568 = vpop.permute.xlu0 %1567
        %1569 = vrot.lane.b32.xlu0 %v1558, 113
        %v1570 = vpop.permute.xlu0 %1569
        %v1573 = vsel %vm253, %v1562, %v1568
        %v1574 = vsel %vm253, %v1564, %v1570
        %v1575 = vsel %vm271, %v1568, %v1562
        %v1576 = vsel %vm271, %v1570, %v1564
        %v1577 = vadd.f32 %v1530, %v1573
        %v1578 = vadd.f32 %v1531, %v1574
        %v1579 = vadd.f32 %v1577, %v1575
        %v1580 = vadd.f32 %v1578, %v1576
        %1581 = vrot.lane.b32.xlu0 %v1542, 16
        %v1582 = vpop.permute.xlu0 %1581
        %v1583 = vsel %vm239, %v1582, %v1542
        %1584 = vrot.lane.b32.xlu0 %v1583, 16
        %v1585 = vpop.permute.xlu0 %1584
        %v1586 = vsel %vm239, %v1585, %v1542
        %1588 = vrot.lane.b32.xlu0 %v1586, 127
        %v1589 = vpop.permute.xlu0 %1588
        %1591 = vrot.lane.b32.xlu0 %v1586, 113
        %v1592 = vpop.permute.xlu0 %1591
        %v1594 = vsel %vm253, %v1589, %v1592
        %v1595 = vsel %vm271, %v1592, %v1589
        %v1596 = vadd.f32 %v1542, %v1594
        %v1597 = vadd.f32 %v1596, %v1595
        %v1598 = vrot.slane %v1579, 7
        %v1599 = vrot.slane %v1580, 7
        %v1600 = vsel %vm297, %v1598, %v1599
        %v1601 = vsel %vm297, %v1599, %v1598
        %v1602 = vrot.slane %v1579, 1
        %v1603 = vrot.slane %v1580, 1
        %v1604 = vsel %vm302, %v1602, %v1603
        %v1605 = vsel %vm302, %v1603, %v1602
        %v1606 = vperm.slane %v1597, 0
        %v1607 = vsel %vm307, %v1606, %v1601
        %v1608 = vsel %vm308, %v1606, %v1600
        %v1609 = vperm.slane %v1597, 1
        %v1610 = vsel %vm314, %v1609, %v1604
        %v1611 = vsel %vm315, %v1609, %v1605
        %v1612 = vadd.f32 %v1579, %v1607
        %v1613 = vadd.f32 %v1580, %v1608
        %v1614 = vadd.f32 %v1612, %v1610
        %v1615 = vadd.f32 %v1613, %v1611
        %v1616 = vmul.f32 %v1614, 0.11111111
        %v1617 = vmul.f32 %v1615, 0.11111111
        %1618 = vrot.lane.b32.xlu0 %v1533, 16
        %v1619 = vpop.permute.xlu0 %1618
        %v1620 = vsel %vm239, %v1619, %v1533
        %1621 = vrot.lane.b32.xlu0 %v1534, 16
        %v1622 = vpop.permute.xlu0 %1621
        %v1623 = vsel %vm239, %v1622, %v1534
        %1624 = vrot.lane.b32.xlu0 %v1620, 16
        %v1625 = vpop.permute.xlu0 %1624
        %1626 = vrot.lane.b32.xlu0 %v1623, 16
        %v1627 = vpop.permute.xlu0 %1626
        %v1628 = vsel %vm239, %v1625, %v1533
        %v1629 = vsel %vm239, %v1627, %v1534
        %1632 = vrot.lane.b32.xlu0 %v1628, 127
        %v1633 = vpop.permute.xlu0 %1632
        %1634 = vrot.lane.b32.xlu0 %v1629, 127
        %v1635 = vpop.permute.xlu0 %1634
        %1638 = vrot.lane.b32.xlu0 %v1628, 113
        %v1639 = vpop.permute.xlu0 %1638
        %1640 = vrot.lane.b32.xlu0 %v1629, 113
        %v1641 = vpop.permute.xlu0 %1640
        %v1644 = vsel %vm253, %v1633, %v1639
        %v1645 = vsel %vm253, %v1635, %v1641
        %v1646 = vsel %vm271, %v1639, %v1633
        %v1647 = vsel %vm271, %v1641, %v1635
        %v1648 = vadd.f32 %v1533, %v1644
        %v1649 = vadd.f32 %v1534, %v1645
        %v1650 = vadd.f32 %v1648, %v1646
        %v1651 = vadd.f32 %v1649, %v1647
        %1652 = vrot.lane.b32.xlu0 %v1546, 16
        %v1653 = vpop.permute.xlu0 %1652
        %v1654 = vsel %vm239, %v1653, %v1546
        %1655 = vrot.lane.b32.xlu0 %v1654, 16
        %v1656 = vpop.permute.xlu0 %1655
        %v1657 = vsel %vm239, %v1656, %v1546
        %1659 = vrot.lane.b32.xlu0 %v1657, 127
        %v1660 = vpop.permute.xlu0 %1659
        %1662 = vrot.lane.b32.xlu0 %v1657, 113
        %v1663 = vpop.permute.xlu0 %1662
        %v1665 = vsel %vm253, %v1660, %v1663
        %v1666 = vsel %vm271, %v1663, %v1660
        %v1667 = vadd.f32 %v1546, %v1665
        %v1668 = vadd.f32 %v1667, %v1666
        %v1669 = vrot.slane %v1650, 7
        %v1670 = vrot.slane %v1651, 7
        %v1671 = vsel %vm297, %v1669, %v1670
        %v1672 = vsel %vm297, %v1670, %v1669
        %v1673 = vrot.slane %v1650, 1
        %v1674 = vrot.slane %v1651, 1
        %v1675 = vsel %vm302, %v1673, %v1674
        %v1676 = vsel %vm302, %v1674, %v1673
        %v1677 = vperm.slane %v1668, 0
        %v1678 = vsel %vm307, %v1677, %v1672
        %v1679 = vsel %vm308, %v1677, %v1671
        %v1680 = vperm.slane %v1668, 1
        %v1681 = vsel %vm314, %v1680, %v1675
        %v1682 = vsel %vm315, %v1680, %v1676
        %v1683 = vadd.f32 %v1650, %v1678
        %v1684 = vadd.f32 %v1651, %v1679
        %v1685 = vadd.f32 %v1683, %v1681
        %v1686 = vadd.f32 %v1684, %v1682
        %v1687 = vmul.f32 %v1685, 0.11111111
        %v1688 = vmul.f32 %v1686, 0.11111111
        %v1689 = vmul.f32 %v1530, %v1530
        %v1690 = vmul.f32 %v1531, %v1531
        %v1691 = vmul.f32 %v1542, %v1542
        %1692 = vrot.lane.b32.xlu0 %v1689, 16
        %v1693 = vpop.permute.xlu0 %1692
        %v1694 = vsel %vm239, %v1693, %v1689
        %1695 = vrot.lane.b32.xlu0 %v1690, 16
        %v1696 = vpop.permute.xlu0 %1695
        %v1697 = vsel %vm239, %v1696, %v1690
        %1698 = vrot.lane.b32.xlu0 %v1694, 16
        %v1699 = vpop.permute.xlu0 %1698
        %1700 = vrot.lane.b32.xlu0 %v1697, 16
        %v1701 = vpop.permute.xlu0 %1700
        %v1702 = vsel %vm239, %v1699, %v1689
        %v1703 = vsel %vm239, %v1701, %v1690
        %1706 = vrot.lane.b32.xlu0 %v1702, 127
        %v1707 = vpop.permute.xlu0 %1706
        %1708 = vrot.lane.b32.xlu0 %v1703, 127
        %v1709 = vpop.permute.xlu0 %1708
        %1712 = vrot.lane.b32.xlu0 %v1702, 113
        %v1713 = vpop.permute.xlu0 %1712
        %1714 = vrot.lane.b32.xlu0 %v1703, 113
        %v1715 = vpop.permute.xlu0 %1714
        %v1718 = vsel %vm253, %v1707, %v1713
        %v1719 = vsel %vm253, %v1709, %v1715
        %v1720 = vsel %vm271, %v1713, %v1707
        %v1721 = vsel %vm271, %v1715, %v1709
        %v1722 = vadd.f32 %v1689, %v1718
        %v1723 = vadd.f32 %v1690, %v1719
        %v1724 = vadd.f32 %v1722, %v1720
        %v1725 = vadd.f32 %v1723, %v1721
        %1726 = vrot.lane.b32.xlu0 %v1691, 16
        %v1727 = vpop.permute.xlu0 %1726
        %v1728 = vsel %vm239, %v1727, %v1691
        %1729 = vrot.lane.b32.xlu0 %v1728, 16
        %v1730 = vpop.permute.xlu0 %1729
        %v1731 = vsel %vm239, %v1730, %v1691
        %1733 = vrot.lane.b32.xlu0 %v1731, 127
        %v1734 = vpop.permute.xlu0 %1733
        %1736 = vrot.lane.b32.xlu0 %v1731, 113
        %v1737 = vpop.permute.xlu0 %1736
        %v1739 = vsel %vm253, %v1734, %v1737
        %v1740 = vsel %vm271, %v1737, %v1734
        %v1741 = vadd.f32 %v1691, %v1739
        %v1742 = vadd.f32 %v1741, %v1740
        %v1743 = vrot.slane %v1724, 7
        %v1744 = vrot.slane %v1725, 7
        %v1745 = vsel %vm297, %v1743, %v1744
        %v1746 = vsel %vm297, %v1744, %v1743
        %v1747 = vrot.slane %v1724, 1
        %v1748 = vrot.slane %v1725, 1
        %v1749 = vsel %vm302, %v1747, %v1748
        %v1750 = vsel %vm302, %v1748, %v1747
        %v1751 = vperm.slane %v1742, 0
        %v1752 = vsel %vm307, %v1751, %v1746
        %v1753 = vsel %vm308, %v1751, %v1745
        %v1754 = vperm.slane %v1742, 1
        %v1755 = vsel %vm314, %v1754, %v1749
        %v1756 = vsel %vm315, %v1754, %v1750
        %v1757 = vadd.f32 %v1724, %v1752
        %v1758 = vadd.f32 %v1725, %v1753
        %v1759 = vadd.f32 %v1757, %v1755
        %v1760 = vadd.f32 %v1758, %v1756
        %v1761 = vmul.f32 %v1759, 0.11111111
        %v1762 = vmul.f32 %v1760, 0.11111111
        %v1763 = vmul.f32 %v1616, %v1616
        %v1764 = vmul.f32 %v1617, %v1617
        %v1765 = vsub.f32 %v1761, %v1763
        %v1766 = vsub.f32 %v1762, %v1764
        %v1767 = vmul.f32 %v1533, %v1533
        %v1768 = vmul.f32 %v1534, %v1534
        %v1769 = vmul.f32 %v1546, %v1546
        %1770 = vrot.lane.b32.xlu0 %v1767, 16
        %v1771 = vpop.permute.xlu0 %1770
        %v1772 = vsel %vm239, %v1771, %v1767
        %1773 = vrot.lane.b32.xlu0 %v1768, 16
        %v1774 = vpop.permute.xlu0 %1773
        %v1775 = vsel %vm239, %v1774, %v1768
        %1776 = vrot.lane.b32.xlu0 %v1772, 16
        %v1777 = vpop.permute.xlu0 %1776
        %1778 = vrot.lane.b32.xlu0 %v1775, 16
        %v1779 = vpop.permute.xlu0 %1778
        %v1780 = vsel %vm239, %v1777, %v1767
        %v1781 = vsel %vm239, %v1779, %v1768
        %1784 = vrot.lane.b32.xlu0 %v1780, 127
        %v1785 = vpop.permute.xlu0 %1784
        %1786 = vrot.lane.b32.xlu0 %v1781, 127
        %v1787 = vpop.permute.xlu0 %1786
        %1790 = vrot.lane.b32.xlu0 %v1780, 113
        %v1791 = vpop.permute.xlu0 %1790
        %1792 = vrot.lane.b32.xlu0 %v1781, 113
        %v1793 = vpop.permute.xlu0 %1792
        %v1796 = vsel %vm253, %v1785, %v1791
        %v1797 = vsel %vm253, %v1787, %v1793
        %v1798 = vsel %vm271, %v1791, %v1785
        %v1799 = vsel %vm271, %v1793, %v1787
        %v1800 = vadd.f32 %v1767, %v1796
        %v1801 = vadd.f32 %v1768, %v1797
        %v1802 = vadd.f32 %v1800, %v1798
        %v1803 = vadd.f32 %v1801, %v1799
        %1804 = vrot.lane.b32.xlu0 %v1769, 16
        %v1805 = vpop.permute.xlu0 %1804
        %v1806 = vsel %vm239, %v1805, %v1769
        %1807 = vrot.lane.b32.xlu0 %v1806, 16
        %v1808 = vpop.permute.xlu0 %1807
        %v1809 = vsel %vm239, %v1808, %v1769
        %1811 = vrot.lane.b32.xlu0 %v1809, 127
        %v1812 = vpop.permute.xlu0 %1811
        %1814 = vrot.lane.b32.xlu0 %v1809, 113
        %v1815 = vpop.permute.xlu0 %1814
        %v1817 = vsel %vm253, %v1812, %v1815
        %v1818 = vsel %vm271, %v1815, %v1812
        %v1819 = vadd.f32 %v1769, %v1817
        %v1820 = vadd.f32 %v1819, %v1818
        %v1821 = vrot.slane %v1802, 7
        %v1822 = vrot.slane %v1803, 7
        %v1823 = vsel %vm297, %v1821, %v1822
        %v1824 = vsel %vm297, %v1822, %v1821
        %v1825 = vrot.slane %v1802, 1
        %v1826 = vrot.slane %v1803, 1
        %v1827 = vsel %vm302, %v1825, %v1826
        %v1828 = vsel %vm302, %v1826, %v1825
        %v1829 = vperm.slane %v1820, 0
        %v1830 = vsel %vm307, %v1829, %v1824
        %v1831 = vsel %vm308, %v1829, %v1823
        %v1832 = vperm.slane %v1820, 1
        %v1833 = vsel %vm314, %v1832, %v1827
        %v1834 = vsel %vm315, %v1832, %v1828
        %v1835 = vadd.f32 %v1802, %v1830
        %v1836 = vadd.f32 %v1803, %v1831
        %v1837 = vadd.f32 %v1835, %v1833
        %v1838 = vadd.f32 %v1836, %v1834
        %v1839 = vmul.f32 %v1837, 0.11111111
        %v1840 = vmul.f32 %v1838, 0.11111111
        %v1841 = vmul.f32 %v1687, %v1687
        %v1842 = vmul.f32 %v1688, %v1688
        %v1843 = vsub.f32 %v1839, %v1841
        %v1844 = vsub.f32 %v1840, %v1842
        %v1845 = vmul.f32 %v1530, %v1533
        %v1846 = vmul.f32 %v1531, %v1534
        %v1847 = vmul.f32 %v1542, %v1546
        %1848 = vrot.lane.b32.xlu0 %v1845, 16
        %v1849 = vpop.permute.xlu0 %1848
        %v1850 = vsel %vm239, %v1849, %v1845
        %1851 = vrot.lane.b32.xlu0 %v1846, 16
        %v1852 = vpop.permute.xlu0 %1851
        %v1853 = vsel %vm239, %v1852, %v1846
        %1854 = vrot.lane.b32.xlu0 %v1850, 16
        %v1855 = vpop.permute.xlu0 %1854
        %1856 = vrot.lane.b32.xlu0 %v1853, 16
        %v1857 = vpop.permute.xlu0 %1856
        %v1858 = vsel %vm239, %v1855, %v1845
        %v1859 = vsel %vm239, %v1857, %v1846
        %1862 = vrot.lane.b32.xlu0 %v1858, 127
        %v1863 = vpop.permute.xlu0 %1862
        %1864 = vrot.lane.b32.xlu0 %v1859, 127
        %v1865 = vpop.permute.xlu0 %1864
        %1868 = vrot.lane.b32.xlu0 %v1858, 113
        %v1869 = vpop.permute.xlu0 %1868
        %1870 = vrot.lane.b32.xlu0 %v1859, 113
        %v1871 = vpop.permute.xlu0 %1870
        %v1874 = vsel %vm253, %v1863, %v1869
        %v1875 = vsel %vm253, %v1865, %v1871
        %v1876 = vsel %vm271, %v1869, %v1863
        %v1877 = vsel %vm271, %v1871, %v1865
        %v1878 = vadd.f32 %v1845, %v1874
        %v1879 = vadd.f32 %v1846, %v1875
        %v1880 = vadd.f32 %v1878, %v1876
        %v1881 = vadd.f32 %v1879, %v1877
        %1882 = vrot.lane.b32.xlu0 %v1847, 16
        %v1883 = vpop.permute.xlu0 %1882
        %v1884 = vsel %vm239, %v1883, %v1847
        %1885 = vrot.lane.b32.xlu0 %v1884, 16
        %v1886 = vpop.permute.xlu0 %1885
        %v1887 = vsel %vm239, %v1886, %v1847
        %1889 = vrot.lane.b32.xlu0 %v1887, 127
        %v1890 = vpop.permute.xlu0 %1889
        %1892 = vrot.lane.b32.xlu0 %v1887, 113
        %v1893 = vpop.permute.xlu0 %1892
        %v1895 = vsel %vm253, %v1890, %v1893
        %v1896 = vsel %vm271, %v1893, %v1890
        %v1897 = vadd.f32 %v1847, %v1895
        %v1898 = vadd.f32 %v1897, %v1896
        %v1899 = vrot.slane %v1880, 7
        %v1900 = vrot.slane %v1881, 7
        %v1901 = vsel %vm297, %v1899, %v1900
        %v1902 = vsel %vm297, %v1900, %v1899
        %v1903 = vrot.slane %v1880, 1
        %v1904 = vrot.slane %v1881, 1
        %v1905 = vsel %vm302, %v1903, %v1904
        %v1906 = vsel %vm302, %v1904, %v1903
        %v1907 = vperm.slane %v1898, 0
        %v1908 = vsel %vm307, %v1907, %v1902
        %v1909 = vsel %vm308, %v1907, %v1901
        %v1910 = vperm.slane %v1898, 1
        %v1911 = vsel %vm314, %v1910, %v1905
        %v1912 = vsel %vm315, %v1910, %v1906
        %v1913 = vadd.f32 %v1880, %v1908
        %v1914 = vadd.f32 %v1881, %v1909
        %v1915 = vadd.f32 %v1913, %v1911
        %v1916 = vadd.f32 %v1914, %v1912
        %v1917 = vmul.f32 %v1915, 0.11111111
        %v1918 = vmul.f32 %v1916, 0.11111111
        %v1919 = vmul.f32 %v1616, %v1687
        %v1920 = vmul.f32 %v1617, %v1688
        %v1921 = vsub.f32 %v1917, %v1919
        %v1922 = vsub.f32 %v1918, %v1920
        %v1923 = vmul.f32 %v1616, 2.0
        %v1924 = vmul.f32 %v1617, 2.0
        %v1925 = vmul.f32 %v1923, %v1687
        %v1926 = vmul.f32 %v1924, %v1688
        %v1927 = vadd.f32 %v1925, 0.0001
        %v1928 = vadd.f32 %v1926, 0.0001
        %v1929 = vmul.f32 %v1921, 2.0
        %v1930 = vmul.f32 %v1922, 2.0
        %v1931 = vadd.f32 %v1929, 0.0009
        %v1932 = vadd.f32 %v1930, 0.0009
        %v1933 = vmul.f32 %v1927, %v1931
        %v1934 = vmul.f32 %v1928, %v1932
        %v1935 = vadd.f32 %v1763, %v1841
        %v1936 = vadd.f32 %v1764, %v1842
        %v1937 = vadd.f32 %v1935, 0.0001
        %v1938 = vadd.f32 %v1936, 0.0001
        %v1939 = vadd.f32 %v1765, %v1843
        %v1940 = vadd.f32 %v1766, %v1844
        %v1941 = vadd.f32 %v1939, 0.0009
        %v1942 = vadd.f32 %v1940, 0.0009
        %v1943 = vmul.f32 %v1937, %v1941
        %v1944 = vmul.f32 %v1938, %v1942
        %v1945 = vrcp.pop %v1943
        %v1946 = vrcp.pop %v1944
        %v1947 = vmul.f32 %v1933, %v1945
        %v1948 = vmul.f32 %v1934, %v1946
        %v1949 = vsub.f32 1.0, %v1947
        %v1950 = vsub.f32 1.0, %v1948
        %v1951 = vmul.f32 %v1949, 0.5
        %v1952 = vmul.f32 %v1950, 0.5
        %v1953 = vmax.f32 %v1951, 0.0
        %v1954 = vmax.f32 %v1952, 0.0
        %v1955 = vmin.f32 %v1953, 1.0
        %v1956 = vmin.f32 %v1954, 1.0
        %s1957 = scalar_lea.vmem %s207, 48 [#allocation7]
        %1958 = vst.msk [vmem:[%s1957] sm:$0xff] %vm664, %v1955
        %1959 = vst.msk [vmem:[%s1957 + $0x8] sm:$0xff] %vm664, %v1956
        %s1960 = sand.u32 %s82, 1
        %s1961 = scalar_lea.sflag [#allocation4], %s1960
        %s1962 = sand.u32 %s82, 1
        %s1963 = smul.addr %s1962, 64
        %s1964 = scalar_lea.vmem [#allocation7], %s1963
        // Predicated region
        $region37: #{tpu_custom_call.1} parent=27 // pred_check
          %p1965 = pneg %p92
        $region38: #{tpu_custom_call.1} parent=27 // pred_check_branch
          %1967 = sbr.rel (%p1965) target = $region40
        $region39: #{tpu_custom_call.1} parent=27 // pred_region
          %s1968 = smul.u32 4, %s22
          %1970 = vsyncadd %s1961, 0
          %s1971 = smul.addr %s1968, 2
          %s1972 = smul.addr %s1971, 8
          %s1973 = scalar_lea.hbm %s2, %s1972
          %s1974 = sshll.u32 %s1964, 4
          %s1975 = int_to_ptr.vmem [resolvable:$true] %s1974
          %s1976 = sshll.u32 %s1973, 4
          %s1977 = int_to_ptr.hbm [resolvable:$true] %s1976
          %1982 = dma.vmem_to_hbm [thread:$0]  %s1975, 1024, %s1977, %s1961, 128, 128, 8
        $region40: #{tpu_custom_call.1} parent=27 // pred_fallthru
          _
      $region28: #{tpu_custom_call.1} parent=5 // pred_fallthru
        _
      %p1983 = scmp.le.s32.totalorder 2, %s17
      // Predicated region
      $region41: #{tpu_custom_call.1} parent=5 // pred_check
        %p1984 = pneg %p1983
      $region42: #{tpu_custom_call.1} parent=5 // pred_check_branch
        %1986 = sbr.rel (%p1984) target = $region44
      $region43: #{tpu_custom_call.1} parent=5 // pred_region
        %s1987 = ssub.s32 %s17, 2
        // Predicated region
        $region45: #{tpu_custom_call.1} parent=43 // pred_check
          %p1988 = pneg %p98
        $region46: #{tpu_custom_call.1} parent=43 // pred_check_branch
          %1990 = sbr.rel (%p1988) target = $region48
        $region47: #{tpu_custom_call.1} parent=43 // pred_region
          %s1991 = sand.u32 %s83, 1
          %s1992 = scalar_lea.sflag [#allocation4], %s1991
          %s1993 = sand.u32 %s83, 1
          %s1994 = smul.addr %s1993, 64
          %s1995 = scalar_lea.vmem [#allocation7], %s1994
          %1997 = dma.done %s1992, 1024
        $region48: #{tpu_custom_call.1} parent=43 // pred_fallthru
          _
      $region44: #{tpu_custom_call.1} parent=5 // pred_fallthru
        _
    $region6: #{tpu_custom_call.1} parent=1 // loop_footer
      %s21 = sadd.s32 1, %s17
    $region7: #{tpu_custom_call.1} parent=1 // loop_footer_branch
      %16 = sbr.rel target = $region3
    $region8: #{tpu_custom_call.1} parent=1 // loop_exit
      _
    %1998 = vsyncpa [#allocation3], 1
    %s1999 = scalar_lea.sflag [#allocation3], 1
    %2000 = vsyncpa %s1999, 1
    %2001 = vsyncpa [#allocation6], 1
    %s2002 = scalar_lea.sflag [#allocation6], 1
    %2003 = vsyncpa %s2002, 1
    %2004 = vsyncpa [#allocation4], 1
    %s2005 = scalar_lea.sflag [#allocation4], 1
    %2006 = vsyncpa %s2005, 1

</llo_original>
